<compile_context>
chip_gen: v7x
topology: tpu7x:2x2x1
jax: 0.10.0
libtpu: 0.0.40
codegen_flags: <defaults>
</compile_context>

<pallas_src>
import math
import jax
import jax.numpy as jnp
from jax.experimental import pallas as pl
from jax.experimental.pallas import tpu as pltpu

# ----------------------------- model config ---------------------------------
VOCAB = 64        # synthetic vocab
SEQ = 8           # stand-in for max_length=2048
HIDDEN = 128      # hidden size (lane aligned)
FFN = 256         # SwiGLU intermediate size
MBS = 4           # reward_batch_size in the original module
CHUNK = 2 * MBS   # samples per grid step (sublane-aligned, larger matmul M)
OUT_LANES = 128   # lane-dense reward output (reward replicated across lanes)


# ------------------------------ Pallas kernel --------------------------------
def reward_kernel(ids_ref, mask_ref,
                  emb_ref, wqkv_ref, wo_ref, wgu_ref, w2_ref,
                  g1_ref, g2_ref, gf_ref, vhead_ref,
                  out_ref):
    B, S = ids_ref.shape
    H = emb_ref.shape[1]
    F = w2_ref.shape[0]
    M = B * S

    def rmsnorm(h, g):                       # h: [M, H] f32, g: [1, H] f32
        var = jnp.mean(h * h, axis=-1, keepdims=True)
        return h * jax.lax.rsqrt(var + 1e-6) * g

    # ---- embedding gather as a one-hot matmul (MXU, no HBM activations) ----
    ids = ids_ref[...]                                              # [B, S] i32
    v_iota = jax.lax.broadcasted_iota(jnp.int32, (B, S, VOCAB), 2)
    onehot = (ids[:, :, None] == v_iota).astype(jnp.bfloat16)       # [B, S, V]
    x = jnp.dot(onehot.reshape(M, VOCAB), emb_ref[...],
                preferred_element_type=jnp.float32)                 # [M, H] f32

    # ---- pre-norm attention: fused QKV projection on flattened [M, H] ----
    h1 = rmsnorm(x, g1_ref[...]).astype(jnp.bfloat16)
    qkv = jnp.dot(h1, wqkv_ref[...],
                  preferred_element_type=jnp.float32)               # [M, 3H]
    q = qkv[:, :H].reshape(B, S, H).astype(jnp.bfloat16)
    k = qkv[:, H:2 * H].reshape(B, S, H).astype(jnp.bfloat16)
    v = qkv[:, 2 * H:].reshape(B, S, H).astype(jnp.bfloat16)

    scale = 1.0 / math.sqrt(H)
    scores = jnp.einsum('bqd,bkd->bqk', q, k,
                        preferred_element_type=jnp.float32) * scale  # [B,S,S]
    # TODO(synk): at the real max_length=2048 this monolithic [B,S,S] score
    # tensor must be flash-tiled (online softmax over KV blocks) to fit VMEM.
    qi = jax.lax.broadcasted_iota(jnp.int32, (S, S), 0)
    ki = jax.lax.broadcasted_iota(jnp.int32, (S, S), 1)
    causal = (qi >= ki)[None, :, :]                                  # [1,S,S]
    key_valid = mask_ref[...][:, None, :] > 0.0                      # [B,1,S]
    scores = jnp.where(jnp.logical_and(causal, key_valid), scores, -1e30)
    scores = scores - jnp.max(scores, axis=-1, keepdims=True)
    p = jnp.exp(scores)
    p = p * pl.reciprocal(jnp.sum(p, axis=-1, keepdims=True), approx=True)

    attn = jnp.einsum('bqk,bkd->bqd', p.astype(jnp.bfloat16), v,
                      preferred_element_type=jnp.float32)            # [B,S,H]
    attn_out = jnp.dot(attn.reshape(M, H).astype(jnp.bfloat16), wo_ref[...],
                       preferred_element_type=jnp.float32)           # [M, H]
    h = x + attn_out

    # ---- SwiGLU MLP with fused gate/up projection ----
    h2 = rmsnorm(h, g2_ref[...]).astype(jnp.bfloat16)
    gu = jnp.dot(h2, wgu_ref[...],
                 preferred_element_type=jnp.float32)                 # [M, 2F]
    gate, up = gu[:, :F], gu[:, F:]
    silu = gate * jax.nn.sigmoid(gate)          # EUP logistic + VPU multiply
    mlp = jnp.dot((silu * up).astype(jnp.bfloat16), w2_ref[...],
                  preferred_element_type=jnp.float32)                # [M, H]
    h = h + mlp

    # ---- select last non-pad token BEFORE final norm / value head ----
    lengths = jnp.sum(mask_ref[...], axis=-1,
                      keepdims=True).astype(jnp.int32)               # [B, 1]
    last_idx = jnp.maximum(lengths - 1, 0)                           # [B, 1]
    # (fully-padded rows from ragged-batch padding select token 0; their
    #  finite rewards are sliced off by the wrapper)
    col = jax.lax.broadcasted_iota(jnp.int32, (B, M), 1)
    row = jax.lax.broadcasted_iota(jnp.int32, (B, M), 0)
    sel = (col == row * S + last_idx).astype(jnp.float32)            # [B, M]
    h_last = jnp.dot(sel, h, preferred_element_type=jnp.float32)     # [B, H]

    hf = rmsnorm(h_last, gf_ref[...]).astype(jnp.bfloat16)
    # value head is pre-tiled to [H, 128] -> lane-dense [B, 128] store
    out_ref[...] = jnp.dot(hf, vhead_ref[...],
                           preferred_element_type=jnp.float32)


# ------------------------------ JAX wrapper ----------------------------------
def _starling_call(ids_pad, mask_pad, weights):
    n_pad = ids_pad.shape[0]
    n_chunks = n_pad // CHUNK
    in_specs = ([pl.BlockSpec((CHUNK, SEQ), lambda i: (i, 0)),   # token ids
                 pl.BlockSpec((CHUNK, SEQ), lambda i: (i, 0))]   # attn mask
                # weights: same block for every grid step -> stay VMEM-resident
                + [pl.BlockSpec(w.shape, lambda i: (0, 0)) for w in weights])
    return pl.pallas_call(
        reward_kernel,
        out_shape=jax.ShapeDtypeStruct((n_pad, OUT_LANES), jnp.float32),
        grid=(n_chunks,),
        in_specs=in_specs,
        out_specs=pl.BlockSpec((CHUNK, OUT_LANES), lambda i: (i, 0)),
        compiler_params=pltpu.CompilerParams(
            dimension_semantics=("parallel",)),
    )(ids_pad, mask_pad, *weights)


reward_batch = jax.jit(_starling_call)


def init_params(key):
    ks = jax.random.split(key, 9)
    s = 0.05
    bf16 = jnp.bfloat16
    wq = jax.random.normal(ks[1], (HIDDEN, HIDDEN)) * s
    wk = jax.random.normal(ks[2], (HIDDEN, HIDDEN)) * s
    wv = jax.random.normal(ks[3], (HIDDEN, HIDDEN)) * s
    w1 = jax.random.normal(ks[5], (HIDDEN, FFN)) * s
    w3 = jax.random.normal(ks[6], (HIDDEN, FFN)) * s
    vhead = jax.random.normal(ks[8], (HIDDEN, 1)) * s
    return {
        'embedding': (jax.random.normal(ks[0], (VOCAB, HIDDEN)) * s).astype(bf16),
        'wqkv': jnp.concatenate([wq, wk, wv], axis=1).astype(bf16),   # [H, 3H]
        'wo': (jax.random.normal(ks[4], (HIDDEN, HIDDEN)) * s).astype(bf16),
        'wgu': jnp.concatenate([w1, w3], axis=1).astype(bf16),        # [H, 2F]
        'w2': (jax.random.normal(ks[7], (FFN, HIDDEN)) * s).astype(bf16),
        'g1': jnp.ones((1, HIDDEN), jnp.float32),
        'g2': jnp.ones((1, HIDDEN), jnp.float32),
        'gf': jnp.ones((1, HIDDEN), jnp.float32),
        'vhead': jnp.tile(vhead, (1, OUT_LANES)).astype(bf16),        # [H, 128]
    }


def wrapped_starling_forward(input_ids, attention_mask, params):
    """Mirrors WrappedStarling.forward: per-sample rewards, hstacked.

    input_ids:      [N, SEQ] int32 (already-"tokenized" samples)
    attention_mask: [N, SEQ] float32
    returns:        [N] float32 rewards
    """
    # TODO(synk): the HF tokenizer (string -> ids, truncation/padding) has no
    # Pallas equivalent; inputs arrive pre-tokenized.
    weights = (params['embedding'], params['wqkv'], params['wo'],
               params['wgu'], params['w2'],
               params['g1'], params['g2'], params['gf'], params['vhead'])
    n = input_ids.shape[0]
    n_pad = CHUNK * math.ceil(n / CHUNK)
    if n_pad != n:                    # pad ragged tail, slice results back
        pad = n_pad - n
        input_ids = jnp.concatenate(
            [input_ids, jnp.zeros((pad, SEQ), input_ids.dtype)], axis=0)
        attention_mask = jnp.concatenate(
            [attention_mask, jnp.zeros((pad, SEQ), attention_mask.dtype)],
            axis=0)
    out = reward_batch(input_ids, attention_mask, weights)   # [n_pad, 128]
    return out[:n, 0]     # equivalent of torch.hstack of per-sample scalars


# --------------------------------- main --------------------------------------
if __name__ == "__main__":
    key = jax.random.PRNGKey(0)
    pkey, dkey = jax.random.split(key)
    params = init_params(pkey)

    n_samples = 13  # not a multiple of CHUNK/MBS to exercise padding + grid
    ids_key, len_key = jax.random.split(dkey)
    input_ids = jax.random.randint(ids_key, (n_samples, SEQ), 0, VOCAB,
                                   dtype=jnp.int32)
    lengths = jax.random.randint(len_key, (n_samples,), 3, SEQ + 1)
    pos = jnp.arange(SEQ)[None, :]
    attention_mask = (pos < lengths[:, None]).astype(jnp.float32)

    rewards = wrapped_starling_forward(input_ids, attention_mask, params)
    rewards = jax.block_until_ready(rewards)
    assert rewards.shape == (n_samples,)
    assert bool(jnp.all(jnp.isfinite(rewards)))
    print("KERNEL_OK")
</pallas_src>

<mosaic_0001>
module attributes {stable_mosaic.version = 11 : i64} {
  func.func @reward_kernel(%arg0: i32, %arg1: memref<8x8xi32, #tpu.memory_space<vmem>>, %arg2: memref<8x8xf32, #tpu.memory_space<vmem>>, %arg3: memref<64x128xbf16, #tpu.memory_space<vmem>>, %arg4: memref<128x384xbf16, #tpu.memory_space<vmem>>, %arg5: memref<128x128xbf16, #tpu.memory_space<vmem>>, %arg6: memref<128x512xbf16, #tpu.memory_space<vmem>>, %arg7: memref<256x128xbf16, #tpu.memory_space<vmem>>, %arg8: memref<1x128xf32, #tpu.memory_space<vmem>>, %arg9: memref<1x128xf32, #tpu.memory_space<vmem>>, %arg10: memref<1x128xf32, #tpu.memory_space<vmem>>, %arg11: memref<128x128xbf16, #tpu.memory_space<vmem>>, %arg12: memref<8x128xf32, #tpu.memory_space<vmem>>) attributes {dimension_semantics = [#tpu.dimension_semantics<parallel>], iteration_bounds = array<i64: 2>, scalar_prefetch = 0 : i64, scratch_operands = 0 : i64, tpu.core_type = #tpu.core_type<tc>, window_params = [{transform_indices = @transform_0, window_bounds = array<i64: 8, 8>}, {transform_indices = @transform_1, window_bounds = array<i64: 8, 8>}, {pipeline_mode = #tpu.pipeline_mode<synchronous>, transform_indices = @transform_2, window_bounds = array<i64: 64, 128>}, {pipeline_mode = #tpu.pipeline_mode<synchronous>, transform_indices = @transform_3, window_bounds = array<i64: 128, 384>}, {pipeline_mode = #tpu.pipeline_mode<synchronous>, transform_indices = @transform_4, window_bounds = array<i64: 128, 128>}, {pipeline_mode = #tpu.pipeline_mode<synchronous>, transform_indices = @transform_5, window_bounds = array<i64: 128, 512>}, {pipeline_mode = #tpu.pipeline_mode<synchronous>, transform_indices = @transform_6, window_bounds = array<i64: 256, 128>}, {pipeline_mode = #tpu.pipeline_mode<synchronous>, transform_indices = @transform_7, window_bounds = array<i64: 1, 128>}, {pipeline_mode = #tpu.pipeline_mode<synchronous>, transform_indices = @transform_8, window_bounds = array<i64: 1, 128>}, {pipeline_mode = #tpu.pipeline_mode<synchronous>, transform_indices = @transform_9, window_bounds = array<i64: 1, 128>}, {pipeline_mode = #tpu.pipeline_mode<synchronous>, transform_indices = @transform_10, window_bounds = array<i64: 128, 128>}, {transform_indices = @transform_11, window_bounds = array<i64: 8, 128>}]} {
    %c0 = arith.constant 0 : index
    %c0_0 = arith.constant 0 : index
    %0 = vector.load %arg1[%c0, %c0_0] : memref<8x8xi32, #tpu.memory_space<vmem>>, vector<8x8xi32>
    %1 = tpu.iota {dimensions = array<i32: 2>} : vector<8x8x64xi32>
    %2 = vector.shape_cast %0 : vector<8x8xi32> to vector<8x8x1xi32>
    %3 = vector.broadcast %2 : vector<8x8x1xi32> to vector<8x8x64xi32>
    %4 = arith.cmpi eq, %3, %1 : vector<8x8x64xi32>
    %5 = arith.extui %4 : vector<8x8x64xi1> to vector<8x8x64xi32>
    %6 = arith.sitofp %5 : vector<8x8x64xi32> to vector<8x8x64xf32>
    %7 = arith.truncf %6 : vector<8x8x64xf32> to vector<8x8x64xbf16>
    %8 = vector.shape_cast %7 : vector<8x8x64xbf16> to vector<64x64xbf16>
    %c0_1 = arith.constant 0 : index
    %c0_2 = arith.constant 0 : index
    %9 = vector.load %arg3[%c0_1, %c0_2] : memref<64x128xbf16, #tpu.memory_space<vmem>>, vector<64x128xbf16>
    %cst = arith.constant dense<0.000000e+00> : vector<64x128xf32>
    %10 = tpu.matmul %8, %9, %cst {dimension_numbers = #tpu.dot_dimension_numbers<[1], [0], [0], [1], [0, 0, 1, 1], [], []>} : vector<64x64xbf16>, vector<64x128xbf16>, vector<64x128xf32> -> vector<64x128xf32>
    %c0_3 = arith.constant 0 : index
    %c0_4 = arith.constant 0 : index
    %11 = vector.load %arg8[%c0_3, %c0_4] : memref<1x128xf32, #tpu.memory_space<vmem>>, vector<1x128xf32>
    %12 = arith.mulf %10, %10 : vector<64x128xf32>
    %cst_5 = arith.constant dense<0.000000e+00> : vector<64xf32>
    %13 = vector.multi_reduction <add>, %12, %cst_5 [1] : vector<64x128xf32> to vector<64xf32>
    %14 = vector.shape_cast %13 : vector<64xf32> to vector<64x1xf32>
    %cst_6 = arith.constant 1.280000e+02 : f32
    %15 = vector.broadcast %cst_6 : f32 to vector<64x1xf32>
    %16 = arith.divf %14, %15 : vector<64x1xf32>
    %cst_7 = arith.constant 9.99999997E-7 : f32
    %17 = vector.broadcast %cst_7 : f32 to vector<64x1xf32>
    %18 = arith.addf %16, %17 : vector<64x1xf32>
    %19 = math.rsqrt %18 : vector<64x1xf32>
    %20 = vector.broadcast %19 : vector<64x1xf32> to vector<64x128xf32>
    %21 = arith.mulf %10, %20 : vector<64x128xf32>
    %22 = vector.broadcast %11 : vector<1x128xf32> to vector<64x128xf32>
    %23 = arith.mulf %21, %22 : vector<64x128xf32>
    %24 = arith.truncf %23 : vector<64x128xf32> to vector<64x128xbf16>
    %c0_8 = arith.constant 0 : index
    %c0_9 = arith.constant 0 : index
    %25 = vector.load %arg4[%c0_8, %c0_9] : memref<128x384xbf16, #tpu.memory_space<vmem>>, vector<128x384xbf16>
    %cst_10 = arith.constant dense<0.000000e+00> : vector<64x384xf32>
    %26 = tpu.matmul %24, %25, %cst_10 {dimension_numbers = #tpu.dot_dimension_numbers<[1], [0], [0], [1], [0, 0, 1, 1], [], []>} : vector<64x128xbf16>, vector<128x384xbf16>, vector<64x384xf32> -> vector<64x384xf32>
    %27 = vector.extract_strided_slice %26 {offsets = [0, 0], sizes = [64, 128], strides = [1, 1]} : vector<64x384xf32> to vector<64x128xf32>
    %28 = vector.shape_cast %27 : vector<64x128xf32> to vector<8x8x128xf32>
    %29 = arith.truncf %28 : vector<8x8x128xf32> to vector<8x8x128xbf16>
    %30 = vector.extract_strided_slice %26 {offsets = [0, 128], sizes = [64, 128], strides = [1, 1]} : vector<64x384xf32> to vector<64x128xf32>
    %31 = vector.shape_cast %30 : vector<64x128xf32> to vector<8x8x128xf32>
    %32 = arith.truncf %31 : vector<8x8x128xf32> to vector<8x8x128xbf16>
    %33 = vector.extract_strided_slice %26 {offsets = [0, 256], sizes = [64, 128], strides = [1, 1]} : vector<64x384xf32> to vector<64x128xf32>
    %34 = vector.shape_cast %33 : vector<64x128xf32> to vector<8x8x128xf32>
    %35 = arith.truncf %34 : vector<8x8x128xf32> to vector<8x8x128xbf16>
    "tpu.trace_start"() <{level = 10 : i32, message = "bqd,bkd->bqk"}> : () -> ()
    %cst_11 = arith.constant dense<0.000000e+00> : vector<8x8x8xf32>
    %36 = tpu.matmul %29, %32, %cst_11 {dimension_numbers = #tpu.dot_dimension_numbers<[2], [2], [1], [1], [0, 0, 0, 1, 1, 1], [0], [0]>} : vector<8x8x128xbf16>, vector<8x8x128xbf16>, vector<8x8x8xf32> -> vector<8x8x8xf32>
    "tpu.trace_stop"() : () -> ()
    %cst_12 = arith.constant 0.0883883461 : f32
    %37 = vector.broadcast %cst_12 : f32 to vector<8x8x8xf32>
    %38 = arith.mulf %36, %37 : vector<8x8x8xf32>
    %39 = tpu.iota {dimensions = array<i32: 0>} : vector<8x8xi32>
    %40 = tpu.iota {dimensions = array<i32: 1>} : vector<8x8xi32>
    %41 = arith.cmpi sge, %39, %40 : vector<8x8xi32>
    %42 = vector.shape_cast %41 : vector<8x8xi1> to vector<1x8x8xi1>
    %c0_13 = arith.constant 0 : index
    %c0_14 = arith.constant 0 : index
    %43 = vector.load %arg2[%c0_13, %c0_14] : memref<8x8xf32, #tpu.memory_space<vmem>>, vector<8x8xf32>
    %44 = vector.shape_cast %43 : vector<8x8xf32> to vector<8x1x8xf32>
    %cst_15 = arith.constant 0.000000e+00 : f32
    %45 = vector.broadcast %cst_15 : f32 to vector<8x1x8xf32>
    %46 = arith.cmpf ogt, %44, %45 : vector<8x1x8xf32>
    %47 = vector.broadcast %42 : vector<1x8x8xi1> to vector<8x8x8xi1>
    %48 = vector.broadcast %46 : vector<8x1x8xi1> to vector<8x8x8xi1>
    %49 = arith.andi %47, %48 : vector<8x8x8xi1>
    %cst_16 = arith.constant -1.000000e+30 : f32
    %50 = vector.broadcast %cst_16 : f32 to vector<8x8x8xf32>
    %51 = arith.select %49, %38, %50 : vector<8x8x8xi1>, vector<8x8x8xf32>
    %cst_17 = arith.constant dense<0xFF800000> : vector<8x8xf32>
    %52 = vector.multi_reduction <maximumf>, %51, %cst_17 [2] : vector<8x8x8xf32> to vector<8x8xf32>
    %53 = vector.shape_cast %52 : vector<8x8xf32> to vector<8x8x1xf32>
    %54 = vector.broadcast %53 : vector<8x8x1xf32> to vector<8x8x8xf32>
    %55 = arith.subf %51, %54 : vector<8x8x8xf32>
    %56 = math.exp %55 : vector<8x8x8xf32>
    %cst_18 = arith.constant dense<0.000000e+00> : vector<8x8xf32>
    %57 = vector.multi_reduction <add>, %56, %cst_18 [2] : vector<8x8x8xf32> to vector<8x8xf32>
    %58 = vector.shape_cast %57 : vector<8x8xf32> to vector<8x8x1xf32>
    %59 = tpu.reciprocal %58 {approx = true} : vector<8x8x1xf32> -> vector<8x8x1xf32>
    %60 = vector.broadcast %59 : vector<8x8x1xf32> to vector<8x8x8xf32>
    %61 = arith.mulf %56, %60 : vector<8x8x8xf32>
    %62 = arith.truncf %61 : vector<8x8x8xf32> to vector<8x8x8xbf16>
    "tpu.trace_start"() <{level = 10 : i32, message = "bqk,bkd->bqd"}> : () -> ()
    %cst_19 = arith.constant dense<0.000000e+00> : vector<8x8x128xf32>
    %63 = tpu.matmul %62, %35, %cst_19 {dimension_numbers = #tpu.dot_dimension_numbers<[2], [1], [1], [2], [0, 0, 0, 1, 1, 2], [0], [0]>} : vector<8x8x8xbf16>, vector<8x8x128xbf16>, vector<8x8x128xf32> -> vector<8x8x128xf32>
    "tpu.trace_stop"() : () -> ()
    %64 = vector.shape_cast %63 : vector<8x8x128xf32> to vector<64x128xf32>
    %65 = arith.truncf %64 : vector<64x128xf32> to vector<64x128xbf16>
    %c0_20 = arith.constant 0 : index
    %c0_21 = arith.constant 0 : index
    %66 = vector.load %arg5[%c0_20, %c0_21] : memref<128x128xbf16, #tpu.memory_space<vmem>>, vector<128x128xbf16>
    %cst_22 = arith.constant dense<0.000000e+00> : vector<64x128xf32>
    %67 = tpu.matmul %65, %66, %cst_22 {dimension_numbers = #tpu.dot_dimension_numbers<[1], [0], [0], [1], [0, 0, 1, 1], [], []>} : vector<64x128xbf16>, vector<128x128xbf16>, vector<64x128xf32> -> vector<64x128xf32>
    %68 = arith.addf %10, %67 : vector<64x128xf32>
    %c0_23 = arith.constant 0 : index
    %c0_24 = arith.constant 0 : index
    %69 = vector.load %arg9[%c0_23, %c0_24] : memref<1x128xf32, #tpu.memory_space<vmem>>, vector<1x128xf32>
    %70 = arith.mulf %68, %68 : vector<64x128xf32>
    %cst_25 = arith.constant dense<0.000000e+00> : vector<64xf32>
    %71 = vector.multi_reduction <add>, %70, %cst_25 [1] : vector<64x128xf32> to vector<64xf32>
    %72 = vector.shape_cast %71 : vector<64xf32> to vector<64x1xf32>
    %cst_26 = arith.constant 1.280000e+02 : f32
    %73 = vector.broadcast %cst_26 : f32 to vector<64x1xf32>
    %74 = arith.divf %72, %73 : vector<64x1xf32>
    %cst_27 = arith.constant 9.99999997E-7 : f32
    %75 = vector.broadcast %cst_27 : f32 to vector<64x1xf32>
    %76 = arith.addf %74, %75 : vector<64x1xf32>
    %77 = math.rsqrt %76 : vector<64x1xf32>
    %78 = vector.broadcast %77 : vector<64x1xf32> to vector<64x128xf32>
    %79 = arith.mulf %68, %78 : vector<64x128xf32>
    %80 = vector.broadcast %69 : vector<1x128xf32> to vector<64x128xf32>
    %81 = arith.mulf %79, %80 : vector<64x128xf32>
    %82 = arith.truncf %81 : vector<64x128xf32> to vector<64x128xbf16>
    %c0_28 = arith.constant 0 : index
    %c0_29 = arith.constant 0 : index
    %83 = vector.load %arg6[%c0_28, %c0_29] : memref<128x512xbf16, #tpu.memory_space<vmem>>, vector<128x512xbf16>
    %cst_30 = arith.constant dense<0.000000e+00> : vector<64x512xf32>
    %84 = tpu.matmul %82, %83, %cst_30 {dimension_numbers = #tpu.dot_dimension_numbers<[1], [0], [0], [1], [0, 0, 1, 1], [], []>} : vector<64x128xbf16>, vector<128x512xbf16>, vector<64x512xf32> -> vector<64x512xf32>
    %85 = vector.extract_strided_slice %84 {offsets = [0, 0], sizes = [64, 256], strides = [1, 1]} : vector<64x512xf32> to vector<64x256xf32>
    %86 = vector.extract_strided_slice %84 {offsets = [0, 256], sizes = [64, 256], strides = [1, 1]} : vector<64x512xf32> to vector<64x256xf32>
    %87 = arith.negf %85 : vector<64x256xf32>
    %88 = math.exp %87 : vector<64x256xf32>
    %cst_31 = arith.constant 1.000000e+00 : f32
    %89 = vector.broadcast %cst_31 : f32 to vector<64x256xf32>
    %90 = arith.addf %89, %88 : vector<64x256xf32>
    %91 = arith.divf %89, %90 : vector<64x256xf32>
    %92 = arith.mulf %85, %91 : vector<64x256xf32>
    %93 = arith.mulf %92, %86 : vector<64x256xf32>
    %94 = arith.truncf %93 : vector<64x256xf32> to vector<64x256xbf16>
    %c0_32 = arith.constant 0 : index
    %c0_33 = arith.constant 0 : index
    %95 = vector.load %arg7[%c0_32, %c0_33] : memref<256x128xbf16, #tpu.memory_space<vmem>>, vector<256x128xbf16>
    %cst_34 = arith.constant dense<0.000000e+00> : vector<64x128xf32>
    %96 = tpu.matmul %94, %95, %cst_34 {dimension_numbers = #tpu.dot_dimension_numbers<[1], [0], [0], [1], [0, 0, 1, 1], [], []>} : vector<64x256xbf16>, vector<256x128xbf16>, vector<64x128xf32> -> vector<64x128xf32>
    %97 = arith.addf %68, %96 : vector<64x128xf32>
    %c0_35 = arith.constant 0 : index
    %c0_36 = arith.constant 0 : index
    %98 = vector.load %arg2[%c0_35, %c0_36] : memref<8x8xf32, #tpu.memory_space<vmem>>, vector<8x8xf32>
    %cst_37 = arith.constant dense<0.000000e+00> : vector<8xf32>
    %99 = vector.multi_reduction <add>, %98, %cst_37 [1] : vector<8x8xf32> to vector<8xf32>
    %100 = vector.shape_cast %99 : vector<8xf32> to vector<8x1xf32>
    %101 = arith.fptosi %100 : vector<8x1xf32> to vector<8x1xi32>
    %c1_i32 = arith.constant 1 : i32
    %102 = vector.broadcast %c1_i32 : i32 to vector<8x1xi32>
    %103 = arith.subi %101, %102 : vector<8x1xi32>
    %c0_i32 = arith.constant 0 : i32
    %104 = vector.broadcast %c0_i32 : i32 to vector<8x1xi32>
    %105 = arith.maxsi %103, %104 : vector<8x1xi32>
    %106 = tpu.iota {dimensions = array<i32: 1>} : vector<8x64xi32>
    %107 = tpu.iota {dimensions = array<i32: 0>} : vector<8x64xi32>
    %c8_i32 = arith.constant 8 : i32
    %108 = vector.broadcast %c8_i32 : i32 to vector<8x64xi32>
    %109 = arith.muli %107, %108 : vector<8x64xi32>
    %110 = vector.broadcast %105 : vector<8x1xi32> to vector<8x64xi32>
    %111 = arith.addi %109, %110 : vector<8x64xi32>
    %112 = arith.cmpi eq, %106, %111 : vector<8x64xi32>
    %113 = arith.extui %112 : vector<8x64xi1> to vector<8x64xi32>
    %114 = arith.sitofp %113 : vector<8x64xi32> to vector<8x64xf32>
    %cst_38 = arith.constant dense<0.000000e+00> : vector<8x128xf32>
    %115 = tpu.matmul %114, %97, %cst_38 {dimension_numbers = #tpu.dot_dimension_numbers<[1], [0], [0], [1], [0, 0, 1, 1], [], []>} : vector<8x64xf32>, vector<64x128xf32>, vector<8x128xf32> -> vector<8x128xf32>
    %c0_39 = arith.constant 0 : index
    %c0_40 = arith.constant 0 : index
    %116 = vector.load %arg10[%c0_39, %c0_40] : memref<1x128xf32, #tpu.memory_space<vmem>>, vector<1x128xf32>
    %117 = arith.mulf %115, %115 : vector<8x128xf32>
    %cst_41 = arith.constant dense<0.000000e+00> : vector<8xf32>
    %118 = vector.multi_reduction <add>, %117, %cst_41 [1] : vector<8x128xf32> to vector<8xf32>
    %119 = vector.shape_cast %118 : vector<8xf32> to vector<8x1xf32>
    %cst_42 = arith.constant 1.280000e+02 : f32
    %120 = vector.broadcast %cst_42 : f32 to vector<8x1xf32>
    %121 = arith.divf %119, %120 : vector<8x1xf32>
    %cst_43 = arith.constant 9.99999997E-7 : f32
    %122 = vector.broadcast %cst_43 : f32 to vector<8x1xf32>
    %123 = arith.addf %121, %122 : vector<8x1xf32>
    %124 = math.rsqrt %123 : vector<8x1xf32>
    %125 = vector.broadcast %124 : vector<8x1xf32> to vector<8x128xf32>
    %126 = arith.mulf %115, %125 : vector<8x128xf32>
    %127 = vector.broadcast %116 : vector<1x128xf32> to vector<8x128xf32>
    %128 = arith.mulf %126, %127 : vector<8x128xf32>
    %129 = arith.truncf %128 : vector<8x128xf32> to vector<8x128xbf16>
    %c0_44 = arith.constant 0 : index
    %c0_45 = arith.constant 0 : index
    %130 = vector.load %arg11[%c0_44, %c0_45] : memref<128x128xbf16, #tpu.memory_space<vmem>>, vector<128x128xbf16>
    %cst_46 = arith.constant dense<0.000000e+00> : vector<8x128xf32>
    %131 = tpu.matmul %129, %130, %cst_46 {dimension_numbers = #tpu.dot_dimension_numbers<[1], [0], [0], [1], [0, 0, 1, 1], [], []>} : vector<8x128xbf16>, vector<128x128xbf16>, vector<8x128xf32> -> vector<8x128xf32>
    %c0_47 = arith.constant 0 : index
    %c0_48 = arith.constant 0 : index
    %132 = vector.load %arg12[%c0_47, %c0_48] : memref<8x128xf32, #tpu.memory_space<vmem>>, vector<8x128xf32>
    tpu.vector_store %arg12[%c0_47, %c0_48], %131 {strides = array<i32>} : memref<8x128xf32, #tpu.memory_space<vmem>>, vector<8x128xf32>,
    return
  }
  func.func @transform_0(%arg0: i32) -> (i32, i32) {
    %c0_i32 = arith.constant 0 : i32
    %c0_i32_0 = arith.constant 0 : i32
    return %arg0, %c0_i32 : i32, i32
  }
  func.func @transform_1(%arg0: i32) -> (i32, i32) {
    %c0_i32 = arith.constant 0 : i32
    %c0_i32_0 = arith.constant 0 : i32
    return %arg0, %c0_i32 : i32, i32
  }
  func.func @transform_2(%arg0: i32) -> (i32, i32) {
    %c0_i32 = arith.constant 0 : i32
    %c0_i32_0 = arith.constant 0 : i32
    %c0_i32_1 = arith.constant 0 : i32
    return %c0_i32, %c0_i32_0 : i32, i32
  }
  func.func @transform_3(%arg0: i32) -> (i32, i32) {
    %c0_i32 = arith.constant 0 : i32
    %c0_i32_0 = arith.constant 0 : i32
    %c0_i32_1 = arith.constant 0 : i32
    return %c0_i32, %c0_i32_0 : i32, i32
  }
  func.func @transform_4(%arg0: i32) -> (i32, i32) {
    %c0_i32 = arith.constant 0 : i32
    %c0_i32_0 = arith.constant 0 : i32
    %c0_i32_1 = arith.constant 0 : i32
    return %c0_i32, %c0_i32_0 : i32, i32
  }
  func.func @transform_5(%arg0: i32) -> (i32, i32) {
    %c0_i32 = arith.constant 0 : i32
    %c0_i32_0 = arith.constant 0 : i32
    %c0_i32_1 = arith.constant 0 : i32
    return %c0_i32, %c0_i32_0 : i32, i32
  }
  func.func @transform_6(%arg0: i32) -> (i32, i32) {
    %c0_i32 = arith.constant 0 : i32
    %c0_i32_0 = arith.constant 0 : i32
    %c0_i32_1 = arith.constant 0 : i32
    return %c0_i32, %c0_i32_0 : i32, i32
  }
  func.func @transform_7(%arg0: i32) -> (i32, i32) {
    %c0_i32 = arith.constant 0 : i32
    %c0_i32_0 = arith.constant 0 : i32
    %c0_i32_1 = arith.constant 0 : i32
    return %c0_i32, %c0_i32_0 : i32, i32
  }
  func.func @transform_8(%arg0: i32) -> (i32, i32) {
    %c0_i32 = arith.constant 0 : i32
    %c0_i32_0 = arith.constant 0 : i32
    %c0_i32_1 = arith.constant 0 : i32
    return %c0_i32, %c0_i32_0 : i32, i32
  }
  func.func @transform_9(%arg0: i32) -> (i32, i32) {
    %c0_i32 = arith.constant 0 : i32
    %c0_i32_0 = arith.constant 0 : i32
    %c0_i32_1 = arith.constant 0 : i32
    return %c0_i32, %c0_i32_0 : i32, i32
  }
  func.func @transform_10(%arg0: i32) -> (i32, i32) {
    %c0_i32 = arith.constant 0 : i32
    %c0_i32_0 = arith.constant 0 : i32
    %c0_i32_1 = arith.constant 0 : i32
    return %c0_i32, %c0_i32_0 : i32, i32
  }
  func.func @transform_11(%arg0: i32) -> (i32, i32) {
    %c0_i32 = arith.constant 0 : i32
    %c0_i32_0 = arith.constant 0 : i32
    return %arg0, %c0_i32 : i32, i32
  }
}

</mosaic_0001>

<llo_original>
// kernel: _starling_call.1
$region0: #{_starling_call.1}
  #allocation0 [shape = 'u32[]', space=smem, size = 0x4, offset = 0x4, fixed_abs, tag = 'smem constant byte address 0x4 - core index']
  #allocation1 [shape = 'u32[144,128]{1,0:T(1,128)}', space=vmem, size = 0x12000, scoped, tag = 'internal scratch']
  %s0 = inlined_call_operand.vmem [shape: s32[16,8], index: 0, kind: input, shape index: {}]
  %s1 = inlined_call_operand.vmem [shape: f32[16,8], index: 1, kind: input, shape index: {}]
  %s2 = inlined_call_operand.hbm [shape: bf16[64,128], index: 2, kind: input, shape index: {}]
  %s3 = inlined_call_operand.hbm [shape: bf16[128,384], index: 3, kind: input, shape index: {}]
  %s4 = inlined_call_operand.hbm [shape: bf16[128,128], index: 4, kind: input, shape index: {}]
  %s5 = inlined_call_operand.hbm [shape: bf16[128,512], index: 5, kind: input, shape index: {}]
  %s6 = inlined_call_operand.hbm [shape: bf16[256,128], index: 6, kind: input, shape index: {}]
  %s7 = inlined_call_operand.vmem [shape: f32[1,128], index: 7, kind: input, shape index: {}]
  %s8 = inlined_call_operand.vmem [shape: f32[1,128], index: 8, kind: input, shape index: {}]
  %s9 = inlined_call_operand.vmem [shape: f32[1,128], index: 9, kind: input, shape index: {}]
  %s10 = inlined_call_operand.vmem [shape: bf16[128,128], index: 10, kind: input, shape index: {}]
  %s11 = inlined_call_operand.hbm [shape: f32[16,128], index: 11, kind: output, shape index: {}]
  %s12 = sld [smem:[#allocation0]]
  $region97: #{_starling_call.1} parent=0
    _
  %s14 = ssub.s32 1, %s12
  %s15 = scalar_select 0, %s14, %s12
  $region1: #{_starling_call.1} parent=0
    #allocation2 [shape = 'u8[16384]{0}', space=vmem, size = 0x4000, scoped, tag = 'input window, operand 2, single buffered']
    #allocation3 [shape = 's32[2]{0}', space=sflag, size = 0x8, scoped, tag = 'scoped memory for _starling_call.1']
    #allocation4 [shape = 's32[2]{0}', space=sflag, size = 0x8, scoped, tag = 'scoped memory for _starling_call.1']
    #allocation5 [shape = 'u8[98304]{0}', space=vmem, size = 0x18000, scoped, tag = 'input window, operand 3, single buffered']
    #allocation6 [shape = 's32[1]{0}', space=sflag, size = 0x4, scoped, tag = 'scoped memory for _starling_call.1']
    #allocation7 [shape = 'u8[32768]{0}', space=vmem, size = 0x8000, scoped, tag = 'input window, operand 4, single buffered']
    #allocation8 [shape = 'u8[131072]{0}', space=vmem, size = 0x20000, scoped, tag = 'input window, operand 5, single buffered']
    #allocation9 [shape = 's32[1]{0}', space=sflag, size = 0x4, scoped, tag = 'scoped memory for _starling_call.1']
    #allocation10 [shape = 'u8[65536]{0}', space=vmem, size = 0x10000, scoped, tag = 'input window, operand 6, single buffered']
    #allocation11 [shape = 'u8[8192]{0}', space=vmem, size = 0x2000, scoped, tag = 'output window, operand 0']
    %16 = vsyncpa [#allocation3], 0
    %17 = vsyncpa [#allocation6], 0
    %18 = vsyncpa [#allocation9], 0
    %19 = vsyncpa [#allocation4], 0
    %s20 = scalar_lea.sflag [#allocation4], 1
    %21 = vsyncpa %s20, 0
    loop: start=0, step=1, limit=4
    $region2: #{_starling_call.1} parent=1 // loop_pre_header
      _
    $region3: #{_starling_call.1} parent=1 // loop_header
      %s23 = sphi 0, %s27
      %p24 = scmp.ge.s32.totalorder %s23, 4
      %s33 = sphi 0, %s35
      %s36 = sphi 0, %s33
      %s37 = sphi 0, %s36
      %s53 = sphi 0, %s37
      %s59 = sphi 0, %s61
      %s62 = sphi 0, %s59
      %s63 = sphi 0, %s62
      %s79 = sphi 0, %s63
      %s83 = sphi 0, %s83
      %s85 = sphi 0, %s83
      %s86 = sphi 0, %s85
      %s100 = sphi 0, %s86
      %s104 = sphi 0, %s104
      %s106 = sphi 0, %s104
      %s107 = sphi 0, %s106
      %s121 = sphi 0, %s107
      %s125 = sphi 0, %s125
      %s127 = sphi 0, %s125
      %s128 = sphi 0, %s127
      %s142 = sphi 0, %s128
      %s146 = sphi 0, %s146
      %s148 = sphi 0, %s146
      %s149 = sphi 0, %s148
      %s163 = sphi 0, %s149
      %s167 = sphi 0, %s167
      %s169 = sphi 0, %s167
      %s170 = sphi 0, %s169
      %s184 = sphi 0, %s170
      %s188 = sphi 0, %s188
      %s190 = sphi 0, %s188
      %s191 = sphi 0, %s190
      %s205 = sphi 0, %s191
      %s209 = sphi 0, %s209
      %s211 = sphi 0, %s209
      %s212 = sphi 0, %s211
      %s226 = sphi 0, %s212
      %s230 = sphi 0, %s230
      %s232 = sphi 0, %s230
      %s233 = sphi 0, %s232
      %s247 = sphi 0, %s233
      %s251 = sphi 0, %s251
      %s253 = sphi 0, %s251
      %s254 = sphi 0, %s253
      %s268 = sphi 0, %s254
      %s274 = sphi 0, %s276
      %s277 = sphi 0, %s274
      %s278 = sphi 0, %s277
      %s294 = sphi 0, %s278
    $region4: #{_starling_call.1} parent=1 // loop_header_branch
      %26 = sbr.rel (%p24) target = $region8
    $region5: #{_starling_call.1} parent=1 // loop_body
      %s28 = ssub.s32 %s23, 1
      %s29 = ssub.s32 %s23, 2
      %s30 = sadd.s32 %s23, 1
      %s31 = ssub.s32 %s23, %s30
      %p32 = scmp.eq.s32.totalorder %s31, 0
      %s34 = sadd.s32 %s33, 1
      %s35 = scalar_select %p32, %s33, %s34
      %p38 = pneg %p32
      %p39 = scmp.eq.s32.totalorder %s23, 1
      %p40 = por %p38, %p39
      %p41 = scmp.ne.s32.totalorder %s33, %s36
      %p42 = scmp.eq.s32.totalorder %s23, 0
      %p43 = por %p41, %p42
      %p44 = scmp.ne.s32.totalorder %s33, %s36
      %p45 = scmp.eq.s32.totalorder %s28, 1
      %p46 = por %p44, %p45
      %p47 = scmp.ne.s32.totalorder %s36, %s37
      %p48 = scmp.eq.s32.totalorder %s28, 0
      %p49 = por %p47, %p48
      %p50 = scmp.ne.s32.totalorder %s36, %s37
      %p51 = scmp.eq.s32.totalorder %s29, 1
      %p52 = por %p50, %p51
      %p54 = scmp.ne.s32.totalorder %s37, %s53
      %p55 = scmp.eq.s32.totalorder %s29, 0
      %p56 = por %p54, %p55
      %s57 = ssub.s32 %s23, %s30
      %p58 = scmp.eq.s32.totalorder %s57, 0
      %s60 = sadd.s32 %s59, 1
      %s61 = scalar_select %p58, %s59, %s60
      %p64 = pneg %p58
      %p65 = scmp.eq.s32.totalorder %s23, 1
      %p66 = por %p64, %p65
      %p67 = scmp.ne.s32.totalorder %s59, %s62
      %p68 = scmp.eq.s32.totalorder %s23, 0
      %p69 = por %p67, %p68
      %p70 = scmp.ne.s32.totalorder %s59, %s62
      %p71 = scmp.eq.s32.totalorder %s28, 1
      %p72 = por %p70, %p71
      %p73 = scmp.ne.s32.totalorder %s62, %s63
      %p74 = scmp.eq.s32.totalorder %s28, 0
      %p75 = por %p73, %p74
      %p76 = scmp.ne.s32.totalorder %s62, %s63
      %p77 = scmp.eq.s32.totalorder %s29, 1
      %p78 = por %p76, %p77
      %p80 = scmp.ne.s32.totalorder %s63, %s79
      %p81 = scmp.eq.s32.totalorder %s29, 0
      %p82 = por %p80, %p81
      %s84 = sadd.s32 %s83, 1
      %p87 = scmp.eq.s32.totalorder %s23, 1
      %p88 = scmp.ne.s32.totalorder %s83, %s85
      %p89 = scmp.eq.s32.totalorder %s23, 0
      %p90 = por %p88, %p89
      %p91 = scmp.ne.s32.totalorder %s83, %s85
      %p92 = scmp.eq.s32.totalorder %s28, 1
      %p93 = por %p91, %p92
      %p94 = scmp.ne.s32.totalorder %s85, %s86
      %p95 = scmp.eq.s32.totalorder %s28, 0
      %p96 = por %p94, %p95
      %p97 = scmp.ne.s32.totalorder %s85, %s86
      %p98 = scmp.eq.s32.totalorder %s29, 1
      %p99 = por %p97, %p98
      %p101 = scmp.ne.s32.totalorder %s86, %s100
      %p102 = scmp.eq.s32.totalorder %s29, 0
      %p103 = por %p101, %p102
      %s105 = sadd.s32 %s104, 1
      %p108 = scmp.eq.s32.totalorder %s23, 1
      %p109 = scmp.ne.s32.totalorder %s104, %s106
      %p110 = scmp.eq.s32.totalorder %s23, 0
      %p111 = por %p109, %p110
      %p112 = scmp.ne.s32.totalorder %s104, %s106
      %p113 = scmp.eq.s32.totalorder %s28, 1
      %p114 = por %p112, %p113
      %p115 = scmp.ne.s32.totalorder %s106, %s107
      %p116 = scmp.eq.s32.totalorder %s28, 0
      %p117 = por %p115, %p116
      %p118 = scmp.ne.s32.totalorder %s106, %s107
      %p119 = scmp.eq.s32.totalorder %s29, 1
      %p120 = por %p118, %p119
      %p122 = scmp.ne.s32.totalorder %s107, %s121
      %p123 = scmp.eq.s32.totalorder %s29, 0
      %p124 = por %p122, %p123
      %s126 = sadd.s32 %s125, 1
      %p129 = scmp.eq.s32.totalorder %s23, 1
      %p130 = scmp.ne.s32.totalorder %s125, %s127
      %p131 = scmp.eq.s32.totalorder %s23, 0
      %p132 = por %p130, %p131
      %p133 = scmp.ne.s32.totalorder %s125, %s127
      %p134 = scmp.eq.s32.totalorder %s28, 1
      %p135 = por %p133, %p134
      %p136 = scmp.ne.s32.totalorder %s127, %s128
      %p137 = scmp.eq.s32.totalorder %s28, 0
      %p138 = por %p136, %p137
      %p139 = scmp.ne.s32.totalorder %s127, %s128
      %p140 = scmp.eq.s32.totalorder %s29, 1
      %p141 = por %p139, %p140
      %p143 = scmp.ne.s32.totalorder %s128, %s142
      %p144 = scmp.eq.s32.totalorder %s29, 0
      %p145 = por %p143, %p144
      %s147 = sadd.s32 %s146, 1
      %p150 = scmp.eq.s32.totalorder %s23, 1
      %p151 = scmp.ne.s32.totalorder %s146, %s148
      %p152 = scmp.eq.s32.totalorder %s23, 0
      %p153 = por %p151, %p152
      %p154 = scmp.ne.s32.totalorder %s146, %s148
      %p155 = scmp.eq.s32.totalorder %s28, 1
      %p156 = por %p154, %p155
      %p157 = scmp.ne.s32.totalorder %s148, %s149
      %p158 = scmp.eq.s32.totalorder %s28, 0
      %p159 = por %p157, %p158
      %p160 = scmp.ne.s32.totalorder %s148, %s149
      %p161 = scmp.eq.s32.totalorder %s29, 1
      %p162 = por %p160, %p161
      %p164 = scmp.ne.s32.totalorder %s149, %s163
      %p165 = scmp.eq.s32.totalorder %s29, 0
      %p166 = por %p164, %p165
      %s168 = sadd.s32 %s167, 1
      %p171 = scmp.eq.s32.totalorder %s23, 1
      %p172 = scmp.ne.s32.totalorder %s167, %s169
      %p173 = scmp.eq.s32.totalorder %s23, 0
      %p174 = por %p172, %p173
      %p175 = scmp.ne.s32.totalorder %s167, %s169
      %p176 = scmp.eq.s32.totalorder %s28, 1
      %p177 = por %p175, %p176
      %p178 = scmp.ne.s32.totalorder %s169, %s170
      %p179 = scmp.eq.s32.totalorder %s28, 0
      %p180 = por %p178, %p179
      %p181 = scmp.ne.s32.totalorder %s169, %s170
      %p182 = scmp.eq.s32.totalorder %s29, 1
      %p183 = por %p181, %p182
      %p185 = scmp.ne.s32.totalorder %s170, %s184
      %p186 = scmp.eq.s32.totalorder %s29, 0
      %p187 = por %p185, %p186
      %s189 = sadd.s32 %s188, 1
      %p192 = scmp.eq.s32.totalorder %s23, 1
      %p193 = scmp.ne.s32.totalorder %s188, %s190
      %p194 = scmp.eq.s32.totalorder %s23, 0
      %p195 = por %p193, %p194
      %p196 = scmp.ne.s32.totalorder %s188, %s190
      %p197 = scmp.eq.s32.totalorder %s28, 1
      %p198 = por %p196, %p197
      %p199 = scmp.ne.s32.totalorder %s190, %s191
      %p200 = scmp.eq.s32.totalorder %s28, 0
      %p201 = por %p199, %p200
      %p202 = scmp.ne.s32.totalorder %s190, %s191
      %p203 = scmp.eq.s32.totalorder %s29, 1
      %p204 = por %p202, %p203
      %p206 = scmp.ne.s32.totalorder %s191, %s205
      %p207 = scmp.eq.s32.totalorder %s29, 0
      %p208 = por %p206, %p207
      %s210 = sadd.s32 %s209, 1
      %p213 = scmp.eq.s32.totalorder %s23, 1
      %p214 = scmp.ne.s32.totalorder %s209, %s211
      %p215 = scmp.eq.s32.totalorder %s23, 0
      %p216 = por %p214, %p215
      %p217 = scmp.ne.s32.totalorder %s209, %s211
      %p218 = scmp.eq.s32.totalorder %s28, 1
      %p219 = por %p217, %p218
      %p220 = scmp.ne.s32.totalorder %s211, %s212
      %p221 = scmp.eq.s32.totalorder %s28, 0
      %p222 = por %p220, %p221
      %p223 = scmp.ne.s32.totalorder %s211, %s212
      %p224 = scmp.eq.s32.totalorder %s29, 1
      %p225 = por %p223, %p224
      %p227 = scmp.ne.s32.totalorder %s212, %s226
      %p228 = scmp.eq.s32.totalorder %s29, 0
      %p229 = por %p227, %p228
      %s231 = sadd.s32 %s230, 1
      %p234 = scmp.eq.s32.totalorder %s23, 1
      %p235 = scmp.ne.s32.totalorder %s230, %s232
      %p236 = scmp.eq.s32.totalorder %s23, 0
      %p237 = por %p235, %p236
      %p238 = scmp.ne.s32.totalorder %s230, %s232
      %p239 = scmp.eq.s32.totalorder %s28, 1
      %p240 = por %p238, %p239
      %p241 = scmp.ne.s32.totalorder %s232, %s233
      %p242 = scmp.eq.s32.totalorder %s28, 0
      %p243 = por %p241, %p242
      %p244 = scmp.ne.s32.totalorder %s232, %s233
      %p245 = scmp.eq.s32.totalorder %s29, 1
      %p246 = por %p244, %p245
      %p248 = scmp.ne.s32.totalorder %s233, %s247
      %p249 = scmp.eq.s32.totalorder %s29, 0
      %p250 = por %p248, %p249
      %s252 = sadd.s32 %s251, 1
      %p255 = scmp.eq.s32.totalorder %s23, 1
      %p256 = scmp.ne.s32.totalorder %s251, %s253
      %p257 = scmp.eq.s32.totalorder %s23, 0
      %p258 = por %p256, %p257
      %p259 = scmp.ne.s32.totalorder %s251, %s253
      %p260 = scmp.eq.s32.totalorder %s28, 1
      %p261 = por %p259, %p260
      %p262 = scmp.ne.s32.totalorder %s253, %s254
      %p263 = scmp.eq.s32.totalorder %s28, 0
      %p264 = por %p262, %p263
      %p265 = scmp.ne.s32.totalorder %s253, %s254
      %p266 = scmp.eq.s32.totalorder %s29, 1
      %p267 = por %p265, %p266
      %p269 = scmp.ne.s32.totalorder %s254, %s268
      %p270 = scmp.eq.s32.totalorder %s29, 0
      %p271 = por %p269, %p270
      %s272 = ssub.s32 %s23, %s30
      %p273 = scmp.eq.s32.totalorder %s272, 0
      %s275 = sadd.s32 %s274, 1
      %s276 = scalar_select %p273, %s274, %s275
      %p279 = pneg %p273
      %p280 = scmp.eq.s32.totalorder %s23, 1
      %p281 = por %p279, %p280
      %p282 = scmp.ne.s32.totalorder %s274, %s277
      %p283 = scmp.eq.s32.totalorder %s23, 0
      %p284 = por %p282, %p283
      %p285 = scmp.ne.s32.totalorder %s274, %s277
      %p286 = scmp.eq.s32.totalorder %s28, 1
      %p287 = por %p285, %p286
      %p288 = scmp.ne.s32.totalorder %s277, %s278
      %p289 = scmp.eq.s32.totalorder %s28, 0
      %p290 = por %p288, %p289
      %p291 = scmp.ne.s32.totalorder %s277, %s278
      %p292 = scmp.eq.s32.totalorder %s29, 1
      %p293 = por %p291, %p292
      %p295 = scmp.ne.s32.totalorder %s278, %s294
      %p296 = scmp.eq.s32.totalorder %s29, 0
      %p297 = por %p295, %p296
      %p298 = scmp.le.s32.totalorder 1, %s23
      %p299 = scmp.lt.s32.totalorder %s23, 3
      %p300 = pnand %p298, %p299
      %p301 = pneg %p300
      // Predicated region
      $region9: #{_starling_call.1} parent=5 // pred_check
        _
      $region10: #{_starling_call.1} parent=5 // pred_check_branch
        %303 = sbr.rel (%p300) target = $region12
      $region11: #{_starling_call.1} parent=5 // pred_region
        %s304 = ssub.s32 %s23, 1
        // Predicated region
        $region13: #{_starling_call.1} parent=11 // pred_check
          %p305 = pneg %p96
        $region14: #{_starling_call.1} parent=11 // pred_check_branch
          %307 = sbr.rel (%p305) target = $region16
        $region15: #{_starling_call.1} parent=11 // pred_region
          %s309 = ssub.s32 512, 512
          %310 = vsyncadd [#allocation3], %s309
          %s311 = sshll.u32 [#allocation2], 4
          %s312 = int_to_ptr.vmem [resolvable:$true] %s311
          %317 = dma.hbm_to_vmem [thread:$0]  %s2, 512, %s312, [#allocation3], 64, 64, 4
        $region16: #{_starling_call.1} parent=11 // pred_fallthru
          _
        // Predicated region
        $region17: #{_starling_call.1} parent=11 // pred_check
          %p318 = pneg %p117
        $region18: #{_starling_call.1} parent=11 // pred_check_branch
          %320 = sbr.rel (%p318) target = $region20
        $region19: #{_starling_call.1} parent=11 // pred_region
          %s322 = ssub.s32 3072, 3072
          %323 = vsyncadd [#allocation6], %s322
          %s324 = sshll.u32 [#allocation5], 4
          %s325 = int_to_ptr.vmem [resolvable:$true] %s324
          %330 = dma.hbm_to_vmem [thread:$0]  %s3, 3072, %s325, [#allocation6], 192, 192, 12
        $region20: #{_starling_call.1} parent=11 // pred_fallthru
          _
        // Predicated region
        $region21: #{_starling_call.1} parent=11 // pred_check
          %p331 = pneg %p138
        $region22: #{_starling_call.1} parent=11 // pred_check_branch
          %333 = sbr.rel (%p331) target = $region24
        $region23: #{_starling_call.1} parent=11 // pred_region
          %s335 = ssub.s32 1024, 1024
          %336 = vsyncadd [#allocation6], %s335
          %s337 = sshll.u32 [#allocation7], 4
          %s338 = int_to_ptr.vmem [resolvable:$true] %s337
          %343 = dma.hbm_to_vmem [thread:$0]  %s4, 1024, %s338, [#allocation6], 64, 64, 4
        $region24: #{_starling_call.1} parent=11 // pred_fallthru
          _
        // Predicated region
        $region25: #{_starling_call.1} parent=11 // pred_check
          %p344 = pneg %p159
        $region26: #{_starling_call.1} parent=11 // pred_check_branch
          %346 = sbr.rel (%p344) target = $region28
        $region27: #{_starling_call.1} parent=11 // pred_region
          %s348 = ssub.s32 4096, 4096
          %349 = vsyncadd [#allocation9], %s348
          %s350 = sshll.u32 [#allocation8], 4
          %s351 = int_to_ptr.vmem [resolvable:$true] %s350
          %356 = dma.hbm_to_vmem [thread:$0]  %s5, 4096, %s351, [#allocation9], 256, 256, 16
        $region28: #{_starling_call.1} parent=11 // pred_fallthru
          _
        // Predicated region
        $region29: #{_starling_call.1} parent=11 // pred_check
          %p357 = pneg %p180
        $region30: #{_starling_call.1} parent=11 // pred_check_branch
          %359 = sbr.rel (%p357) target = $region32
        $region31: #{_starling_call.1} parent=11 // pred_region
          %s361 = ssub.s32 2048, 2048
          %362 = vsyncadd [#allocation9], %s361
          %s363 = sshll.u32 [#allocation10], 4
          %s364 = int_to_ptr.vmem [resolvable:$true] %s363
          %369 = dma.hbm_to_vmem [thread:$0]  %s6, 2048, %s364, [#allocation9], 64, 64, 4
        $region32: #{_starling_call.1} parent=11 // pred_fallthru
          _
        // Predicated region
        $region33: #{_starling_call.1} parent=11 // pred_check
          %p370 = pneg %p201
        $region34: #{_starling_call.1} parent=11 // pred_check_branch
          %372 = sbr.rel (%p370) target = $region36
        $region35: #{_starling_call.1} parent=11 // pred_region
          _
        $region36: #{_starling_call.1} parent=11 // pred_fallthru
          _
        // Predicated region
        $region37: #{_starling_call.1} parent=11 // pred_check
          %p373 = pneg %p222
        $region38: #{_starling_call.1} parent=11 // pred_check_branch
          %375 = sbr.rel (%p373) target = $region40
        $region39: #{_starling_call.1} parent=11 // pred_region
          _
        $region40: #{_starling_call.1} parent=11 // pred_fallthru
          _
        // Predicated region
        $region41: #{_starling_call.1} parent=11 // pred_check
          %p376 = pneg %p243
        $region42: #{_starling_call.1} parent=11 // pred_check_branch
          %378 = sbr.rel (%p376) target = $region44
        $region43: #{_starling_call.1} parent=11 // pred_region
          _
        $region44: #{_starling_call.1} parent=11 // pred_fallthru
          _
        // Predicated region
        $region45: #{_starling_call.1} parent=11 // pred_check
          %p379 = pneg %p264
        $region46: #{_starling_call.1} parent=11 // pred_check_branch
          %381 = sbr.rel (%p379) target = $region48
        $region47: #{_starling_call.1} parent=11 // pred_region
          _
        $region48: #{_starling_call.1} parent=11 // pred_fallthru
          _
      $region12: #{_starling_call.1} parent=5 // pred_fallthru
        _
      %p382 = scmp.lt.s32.totalorder %s23, 2
      // Predicated region
      $region49: #{_starling_call.1} parent=5 // pred_check
        %p383 = pneg %p382
      $region50: #{_starling_call.1} parent=5 // pred_check_branch
        %385 = sbr.rel (%p383) target = $region52
      $region51: #{_starling_call.1} parent=5 // pred_region
        // Predicated region
        $region53: #{_starling_call.1} parent=51 // pred_check
          %p386 = pneg %p43
        $region54: #{_starling_call.1} parent=51 // pred_check_branch
          %388 = sbr.rel (%p386) target = $region56
        $region55: #{_starling_call.1} parent=51 // pred_region
          %p389 = scmp.lt.s32.totalorder %s23, 1
          %s390 = scalar_select %p389, %s23, 1
          %s391 = smul.addr %s390, 8
          %s392 = scalar_lea.vmem %s0, %s391
        $region56: #{_starling_call.1} parent=51 // pred_fallthru
          _
        // Predicated region
        $region57: #{_starling_call.1} parent=51 // pred_check
          %p393 = pneg %p69
        $region58: #{_starling_call.1} parent=51 // pred_check_branch
          %395 = sbr.rel (%p393) target = $region60
        $region59: #{_starling_call.1} parent=51 // pred_region
          %p396 = scmp.lt.s32.totalorder %s23, 1
          %s397 = scalar_select %p396, %s23, 1
          %s398 = smul.addr %s397, 8
          %s399 = scalar_lea.vmem %s1, %s398
        $region60: #{_starling_call.1} parent=51 // pred_fallthru
          _
      $region52: #{_starling_call.1} parent=5 // pred_fallthru
        _
      %p400 = scmp.le.s32.totalorder 1, %s23
      %p401 = scmp.lt.s32.totalorder %s23, 3
      %p402 = pnand %p400, %p401
      %p403 = pneg %p402
      // Predicated region
      $region61: #{_starling_call.1} parent=5 // pred_check
        _
      $region62: #{_starling_call.1} parent=5 // pred_check_branch
        %405 = sbr.rel (%p402) target = $region64
      $region63: #{_starling_call.1} parent=5 // pred_region
        %s406 = ssub.s32 %s23, 1
        // Predicated region
        $region65: #{_starling_call.1} parent=63 // pred_check
          %p407 = pneg %p96
        $region66: #{_starling_call.1} parent=63 // pred_check_branch
          %409 = sbr.rel (%p407) target = $region68
        $region67: #{_starling_call.1} parent=63 // pred_region
          %410 = dma.done [#allocation3], 512
        $region68: #{_starling_call.1} parent=63 // pred_fallthru
          _
        // Predicated region
        $region69: #{_starling_call.1} parent=63 // pred_check
          %p411 = pneg %p117
        $region70: #{_starling_call.1} parent=63 // pred_check_branch
          %413 = sbr.rel (%p411) target = $region72
        $region71: #{_starling_call.1} parent=63 // pred_region
          %414 = dma.done [#allocation6], 3072
        $region72: #{_starling_call.1} parent=63 // pred_fallthru
          _
        // Predicated region
        $region73: #{_starling_call.1} parent=63 // pred_check
          %p415 = pneg %p138
        $region74: #{_starling_call.1} parent=63 // pred_check_branch
          %417 = sbr.rel (%p415) target = $region76
        $region75: #{_starling_call.1} parent=63 // pred_region
          %418 = dma.done [#allocation6], 1024
        $region76: #{_starling_call.1} parent=63 // pred_fallthru
          _
        // Predicated region
        $region77: #{_starling_call.1} parent=63 // pred_check
          %p419 = pneg %p159
        $region78: #{_starling_call.1} parent=63 // pred_check_branch
          %421 = sbr.rel (%p419) target = $region80
        $region79: #{_starling_call.1} parent=63 // pred_region
          %422 = dma.done [#allocation9], 4096
        $region80: #{_starling_call.1} parent=63 // pred_fallthru
          _
        // Predicated region
        $region81: #{_starling_call.1} parent=63 // pred_check
          %p423 = pneg %p180
        $region82: #{_starling_call.1} parent=63 // pred_check_branch
          %425 = sbr.rel (%p423) target = $region84
        $region83: #{_starling_call.1} parent=63 // pred_region
          %426 = dma.done [#allocation9], 2048
        $region84: #{_starling_call.1} parent=63 // pred_fallthru
          _
        %p427 = scmp.lt.s32.totalorder %s28, 1
        %s428 = scalar_select %p427, %s28, 1
        %s429 = smul.addr %s428, 8
        %s430 = scalar_lea.vmem %s0, %s429
        %p431 = pneg %p49
        %p432 = pneg %p46
        %p433 = scmp.lt.s32.totalorder %s28, 1
        %s434 = scalar_select %p433, %s28, 1
        %s435 = smul.addr %s434, 8
        %s436 = scalar_lea.vmem %s1, %s435
        %p437 = pneg %p75
        %p438 = pneg %p72
        %p439 = pneg %p96
        %p440 = pneg %p93
        %p441 = pneg %p117
        %p442 = pneg %p114
        %p443 = pneg %p138
        %p444 = pneg %p135
        %p445 = pneg %p159
        %p446 = pneg %p156
        %p447 = pneg %p180
        %p448 = pneg %p177
        %p449 = pneg %p201
        %p450 = pneg %p198
        %p451 = pneg %p222
        %p452 = pneg %p219
        %p453 = pneg %p243
        %p454 = pneg %p240
        %p455 = pneg %p264
        %p456 = pneg %p261
        %p457 = pneg %p290
        %p458 = pneg %p287
        %s459 = sand.u32 %s277, 1
        %s460 = scalar_lea.sflag [#allocation4], %s459
        %s461 = sand.u32 %s277, 1
        %s462 = smul.addr %s461, 8
        %s463 = scalar_lea.vmem [#allocation11], %s462
        %p464 = scmp.lt.s32.totalorder %s28, 1
        %s465 = scalar_select %p464, %s28, 1
        %s466 = smul.addr %s465, 8
        %s467 = scalar_lea.vmem %s0, %s466
        %p468 = scmp.lt.s32.totalorder %s28, 1
        %s469 = scalar_select %p468, %s28, 1
        %s470 = smul.addr %s469, 8
        %s471 = scalar_lea.vmem %s1, %s470
        %v473 = vld [vmem:[%s467] sm:$0xff]
        %v474 = vlaneseq
        %v475 = vand.u32 %v474, 127
        %v476 = vlaneseq
        %v477 = vshrl.u32 %v476, 7
        %v478 = vsub.s32 0, %v477
        %v479 = vrot.slane %v473, %v478
        %481 = vbcast.lane.b32.xlu0 %v479, 256
        %v482 = vpop.permute.xlu0 %481
        %v483 = vlaneseq
        %v484 = vshrl.u32 %v483, 7
        %v485 = vsub.s32 1, %v484
        %v486 = vrot.slane %v473, %v485
        %488 = vbcast.lane.b32.xlu0 %v486, 256
        %v489 = vpop.permute.xlu0 %488
        %v490 = vlaneseq
        %v491 = vshrl.u32 %v490, 7
        %v492 = vsub.s32 2, %v491
        %v493 = vrot.slane %v473, %v492
        %495 = vbcast.lane.b32.xlu0 %v493, 256
        %v496 = vpop.permute.xlu0 %495
        %v497 = vlaneseq
        %v498 = vshrl.u32 %v497, 7
        %v499 = vsub.s32 3, %v498
        %v500 = vrot.slane %v473, %v499
        %502 = vbcast.lane.b32.xlu0 %v500, 256
        %v503 = vpop.permute.xlu0 %502
        %v504 = vlaneseq
        %v505 = vshrl.u32 %v504, 7
        %v506 = vsub.s32 4, %v505
        %v507 = vrot.slane %v473, %v506
        %509 = vbcast.lane.b32.xlu0 %v507, 256
        %v510 = vpop.permute.xlu0 %509
        %v511 = vlaneseq
        %v512 = vshrl.u32 %v511, 7
        %v513 = vsub.s32 5, %v512
        %v514 = vrot.slane %v473, %v513
        %516 = vbcast.lane.b32.xlu0 %v514, 256
        %v517 = vpop.permute.xlu0 %516
        %v518 = vlaneseq
        %v519 = vshrl.u32 %v518, 7
        %v520 = vsub.s32 6, %v519
        %v521 = vrot.slane %v473, %v520
        %523 = vbcast.lane.b32.xlu0 %v521, 256
        %v524 = vpop.permute.xlu0 %523
        %v525 = vlaneseq
        %v526 = vshrl.u32 %v525, 7
        %v527 = vsub.s32 7, %v526
        %v528 = vrot.slane %v473, %v527
        %530 = vbcast.lane.b32.xlu0 %v528, 256
        %v531 = vpop.permute.xlu0 %530
        %vm532 = vcmp.eq.s32.totalorder %v482, %v475
        %vm533 = vcmp.eq.s32.totalorder %v489, %v475
        %vm534 = vcmp.eq.s32.totalorder %v496, %v475
        %vm535 = vcmp.eq.s32.totalorder %v503, %v475
        %vm536 = vcmp.eq.s32.totalorder %v510, %v475
        %vm537 = vcmp.eq.s32.totalorder %v517, %v475
        %vm538 = vcmp.eq.s32.totalorder %v524, %v475
        %vm539 = vcmp.eq.s32.totalorder %v531, %v475
        %v540 = vsel %vm532, 1, 0
        %v541 = vsel %vm533, 1, 0
        %v542 = vsel %vm534, 1, 0
        %v543 = vsel %vm535, 1, 0
        %v544 = vsel %vm536, 1, 0
        %v545 = vsel %vm537, 1, 0
        %v546 = vsel %vm538, 1, 0
        %v547 = vsel %vm539, 1, 0
        %v548 = vcvt.s32.f32 %v540
        %v549 = vcvt.s32.f32 %v541
        %v550 = vcvt.s32.f32 %v542
        %v551 = vcvt.s32.f32 %v543
        %v552 = vcvt.s32.f32 %v544
        %v553 = vcvt.s32.f32 %v545
        %v554 = vcvt.s32.f32 %v546
        %v555 = vcvt.s32.f32 %v547
        %v556 = vpack.c.bf16 %v548, %v548
        %v557 = vpack.c.bf16 %v549, %v549
        %v558 = vpack.c.bf16 %v550, %v550
        %v559 = vpack.c.bf16 %v551, %v551
        %v560 = vpack.c.bf16 %v552, %v552
        %v561 = vpack.c.bf16 %v553, %v553
        %v562 = vpack.c.bf16 %v554, %v554
        %v563 = vpack.c.bf16 %v555, %v555
        %v564 = vld [vmem:[#allocation2] sm:$0xf]
        %v565 = vld [vmem:[#allocation2 + $0x4] sm:$0xf]
        %v566 = vld [vmem:[#allocation2 + $0x8] sm:$0xf]
        %v567 = vld [vmem:[#allocation2 + $0xc] sm:$0xf]
        %v568 = vld [vmem:[#allocation2 + $0x10] sm:$0xf]
        %v569 = vld [vmem:[#allocation2 + $0x14] sm:$0xf]
        %v570 = vld [vmem:[#allocation2 + $0x18] sm:$0xf]
        %v571 = vld [vmem:[#allocation2 + $0x1c] sm:$0xf]
        %v580 = vunpack.c.l.b16 %v556
        %v581 = vunpack.c.l.b16 %v557
        %v582 = vunpack.c.l.b16 %v558
        %v583 = vunpack.c.l.b16 %v559
        %v584 = vunpack.c.l.b16 %v560
        %v585 = vunpack.c.l.b16 %v561
        %v586 = vunpack.c.l.b16 %v562
        %v587 = vunpack.c.l.b16 %v563
        %v588 = vpack.c.b16 %v581, %v580
        %v589 = vpack.c.b16 %v583, %v582
        %v590 = vpack.c.b16 %v585, %v584
        %v591 = vpack.c.b16 %v587, %v586
        %v600 = vunpack.c.l.b16 %v564
        %v601 = vunpack.c.l.b16 %v565
        %v602 = vunpack.c.l.b16 %v566
        %v603 = vunpack.c.l.b16 %v567
        %v604 = vunpack.c.l.b16 %v568
        %v605 = vunpack.c.l.b16 %v569
        %v606 = vunpack.c.l.b16 %v570
        %v607 = vunpack.c.l.b16 %v571
        %v608 = vpack.c.b16 %v601, %v600
        %v609 = vpack.c.b16 %v603, %v602
        %v610 = vpack.c.b16 %v605, %v604
        %v611 = vpack.c.b16 %v607, %v606
        %vm616 = vcmask 523264
        %v618 = vsel %vm616, %v588, 0
        %v621 = vsel %vm616, %v589, 0
        %v624 = vsel %vm616, %v590, 0
        %v627 = vsel %vm616, %v591, 0
        %629 = vmatprep.subr.bf16.mxu0 0
        %630 = vmatpush1.bf16.msra.mxu0 %v608
        %631 = vmatprep.subr.bf16.mxu0 0
        %632 = vmatpush1.bf16.msra.mxu0 %v609
        %633 = vmatprep.subr.bf16.mxu0 0
        %634 = vmatpush1.bf16.msra.mxu0 %v610
        %635 = vmatprep.subr.bf16.mxu0 0
        %636 = vmatpush1.bf16.msra.mxu0 %v611
        %637 = vmatprep.subr.bf16.mxu0 0
        %638 = vmatpush1.bf16.msra.mxu0 0
        %639 = vmatprep.subr.bf16.mxu0 0
        %640 = vmatpush1.bf16.msra.mxu0 0
        %641 = vmatprep.subr.bf16.mxu0 0
        %642 = vmatpush1.bf16.msra.mxu0 0
        %643 = vmatprep.subr.bf16.mxu0 0
        %644 = vmatpush1.bf16.msra.mxu0 0
        %645 = vmatprep.subr.bf16.mxu0 0
        %646 = vmatpush1.bf16.msra.mxu0 0
        %647 = vmatprep.subr.bf16.mxu0 0
        %648 = vmatpush1.bf16.msra.mxu0 0
        %649 = vmatprep.subr.bf16.mxu0 0
        %650 = vmatpush1.bf16.msra.mxu0 0
        %651 = vmatprep.subr.bf16.mxu0 0
        %652 = vmatpush1.bf16.msra.mxu0 0
        %653 = vmatprep.subr.bf16.mxu0 0
        %654 = vmatpush1.bf16.msra.mxu0 0
        %655 = vmatprep.subr.bf16.mxu0 0
        %656 = vmatpush1.bf16.msra.mxu0 0
        %657 = vmatprep.subr.bf16.mxu0 0
        %658 = vmatpush1.bf16.msra.mxu0 0
        %659 = vmatprep.subr.bf16.mxu0 0
        %660 = vmatpush1.bf16.msra.mxu0 0
        %661 = vmatprep.mubr.bf16.mxu0 0
        %662 = vmatmul.mubr.bf16.gmra.mrb[0].mxu0 %v618
        %v663 = vpop.f32.mrb[0].mxu0
        %v664 = vadd.f32 0.0, %v663
        %v665 = vpop.f32.mrb[0].mxu0
        %v666 = vpop.f32.mrb[0].mxu0
        %v667 = vadd.f32 0.0, %v666
        %v668 = vpop.f32.mrb[0].mxu0
        %669 = vmatprep.mubr.bf16.mxu0 0
        %670 = vmatmul.mubr.bf16.gmra.mrb[0].mxu0 %v621
        %v671 = vpop.f32.mrb[0].mxu0
        %v672 = vadd.f32 0.0, %v671
        %v673 = vpop.f32.mrb[0].mxu0
        %v674 = vpop.f32.mrb[0].mxu0
        %v675 = vadd.f32 0.0, %v674
        %v676 = vpop.f32.mrb[0].mxu0
        %677 = vmatprep.mubr.bf16.mxu0 0
        %678 = vmatmul.mubr.bf16.gmra.mrb[0].mxu0 %v624
        %v679 = vpop.f32.mrb[0].mxu0
        %v680 = vadd.f32 0.0, %v679
        %v681 = vpop.f32.mrb[0].mxu0
        %v682 = vpop.f32.mrb[0].mxu0
        %v683 = vadd.f32 0.0, %v682
        %v684 = vpop.f32.mrb[0].mxu0
        %685 = vmatprep.mubr.bf16.mxu0 0
        %686 = vmatmul.mubr.bf16.gmra.mrb[0].mxu0 %v627
        %v687 = vpop.f32.mrb[0].mxu0
        %v688 = vadd.f32 0.0, %v687
        %v689 = vpop.f32.mrb[0].mxu0
        %v690 = vpop.f32.mrb[0].mxu0
        %v691 = vadd.f32 0.0, %v690
        %v692 = vpop.f32.mrb[0].mxu0
        %693 = vdwg.mxu0
        %v694 = vld [vmem:[%s7] sm:$0x1]
        %v695 = vmul.f32 %v664, %v664
        %v696 = vmul.f32 %v667, %v667
        %v697 = vmul.f32 %v672, %v672
        %v698 = vmul.f32 %v675, %v675
        %v699 = vmul.f32 %v680, %v680
        %v700 = vmul.f32 %v683, %v683
        %v701 = vmul.f32 %v688, %v688
        %v702 = vmul.f32 %v691, %v691
        %703 = vadd.xlane.f32.xlu0 %v695
        %v704 = vpop.xlane.xlu0 %703
        %705 = vadd.xlane.f32.xlu0 %v696
        %v706 = vpop.xlane.xlu0 %705
        %707 = vadd.xlane.f32.xlu0 %v697
        %v708 = vpop.xlane.xlu0 %707
        %709 = vadd.xlane.f32.xlu0 %v698
        %v710 = vpop.xlane.xlu0 %709
        %711 = vadd.xlane.f32.xlu0 %v699
        %v712 = vpop.xlane.xlu0 %711
        %713 = vadd.xlane.f32.xlu0 %v700
        %v714 = vpop.xlane.xlu0 %713
        %715 = vadd.xlane.f32.xlu0 %v701
        %v716 = vpop.xlane.xlu0 %715
        %717 = vadd.xlane.f32.xlu0 %v702
        %v718 = vpop.xlane.xlu0 %717
        %v719 = vrcp.pop 128.0
        %v720 = vmul.f32 %v704, %v719
        %v721 = vmul.f32 %v706, %v719
        %v722 = vmul.f32 %v708, %v719
        %v723 = vmul.f32 %v710, %v719
        %v724 = vmul.f32 %v712, %v719
        %v725 = vmul.f32 %v714, %v719
        %v726 = vmul.f32 %v716, %v719
        %v727 = vmul.f32 %v718, %v719
        %v728 = vadd.f32 %v720, 1e-06
        %v729 = vadd.f32 %v721, 1e-06
        %v730 = vadd.f32 %v722, 1e-06
        %v731 = vadd.f32 %v723, 1e-06
        %v732 = vadd.f32 %v724, 1e-06
        %v733 = vadd.f32 %v725, 1e-06
        %v734 = vadd.f32 %v726, 1e-06
        %v735 = vadd.f32 %v727, 1e-06
        %v736 = vrsqrt.pop %v728
        %v737 = vrsqrt.pop %v729
        %v738 = vrsqrt.pop %v730
        %v739 = vrsqrt.pop %v731
        %v740 = vrsqrt.pop %v732
        %v741 = vrsqrt.pop %v733
        %v742 = vrsqrt.pop %v734
        %v743 = vrsqrt.pop %v735
        %v744 = vmul.f32 %v664, %v736
        %v745 = vmul.f32 %v667, %v737
        %v746 = vmul.f32 %v672, %v738
        %v747 = vmul.f32 %v675, %v739
        %v748 = vmul.f32 %v680, %v740
        %v749 = vmul.f32 %v683, %v741
        %v750 = vmul.f32 %v688, %v742
        %v751 = vmul.f32 %v691, %v743
        %v753 = vlaneseq
        %v754 = vshrl.u32 %v753, 7
        %v755 = vsub.s32 0, %v754
        %v756 = vrot.slane %v694, %v755
        %v758 = vmul.f32 %v744, %v756
        %v759 = vmul.f32 %v745, %v756
        %v760 = vmul.f32 %v746, %v756
        %v761 = vmul.f32 %v747, %v756
        %v762 = vmul.f32 %v748, %v756
        %v763 = vmul.f32 %v749, %v756
        %v764 = vmul.f32 %v750, %v756
        %v765 = vmul.f32 %v751, %v756
        %v766 = vpack.c.bf16 %v759, %v758
        %v767 = vpack.c.bf16 %v761, %v760
        %v768 = vpack.c.bf16 %v763, %v762
        %v769 = vpack.c.bf16 %v765, %v764
        %v770 = vld [vmem:[#allocation5] sm:$0xff]
        %v771 = vld [vmem:[#allocation5 + $0x8] sm:$0xf]
        %v772 = vld [vmem:[#allocation5 + $0xc] sm:$0xff]
        %v773 = vld [vmem:[#allocation5 + $0x14] sm:$0xf]
        %v774 = vld [vmem:[#allocation5 + $0x18] sm:$0xff]
        %v775 = vld [vmem:[#allocation5 + $0x20] sm:$0xf]
        %v776 = vld [vmem:[#allocation5 + $0x24] sm:$0xff]
        %v777 = vld [vmem:[#allocation5 + $0x2c] sm:$0xf]
        %v778 = vld [vmem:[#allocation5 + $0x30] sm:$0xff]
        %v779 = vld [vmem:[#allocation5 + $0x38] sm:$0xf]
        %v780 = vld [vmem:[#allocation5 + $0x3c] sm:$0xff]
        %v781 = vld [vmem:[#allocation5 + $0x44] sm:$0xf]
        %v782 = vld [vmem:[#allocation5 + $0x48] sm:$0xff]
        %v783 = vld [vmem:[#allocation5 + $0x50] sm:$0xf]
        %v784 = vld [vmem:[#allocation5 + $0x54] sm:$0xff]
        %v785 = vld [vmem:[#allocation5 + $0x5c] sm:$0xf]
        %v786 = vld [vmem:[#allocation5 + $0x60] sm:$0xff]
        %v787 = vld [vmem:[#allocation5 + $0x68] sm:$0xf]
        %v788 = vld [vmem:[#allocation5 + $0x6c] sm:$0xff]
        %v789 = vld [vmem:[#allocation5 + $0x74] sm:$0xf]
        %v790 = vld [vmem:[#allocation5 + $0x78] sm:$0xff]
        %v791 = vld [vmem:[#allocation5 + $0x80] sm:$0xf]
        %v792 = vld [vmem:[#allocation5 + $0x84] sm:$0xff]
        %v793 = vld [vmem:[#allocation5 + $0x8c] sm:$0xf]
        %v794 = vld [vmem:[#allocation5 + $0x90] sm:$0xff]
        %v795 = vld [vmem:[#allocation5 + $0x98] sm:$0xf]
        %v796 = vld [vmem:[#allocation5 + $0x9c] sm:$0xff]
        %v797 = vld [vmem:[#allocation5 + $0xa4] sm:$0xf]
        %v798 = vld [vmem:[#allocation5 + $0xa8] sm:$0xff]
        %v799 = vld [vmem:[#allocation5 + $0xb0] sm:$0xf]
        %v800 = vld [vmem:[#allocation5 + $0xb4] sm:$0xff]
        %v801 = vld [vmem:[#allocation5 + $0xbc] sm:$0xf]
        %v834 = vunpack.c.l.b16 %v770
        %v835 = vunpack.c.h.b16 %v770
        %v836 = vunpack.c.l.b16 %v771
        %v837 = vunpack.c.l.b16 %v772
        %v838 = vunpack.c.h.b16 %v772
        %v839 = vunpack.c.l.b16 %v773
        %v840 = vunpack.c.l.b16 %v774
        %v841 = vunpack.c.h.b16 %v774
        %v842 = vunpack.c.l.b16 %v775
        %v843 = vunpack.c.l.b16 %v776
        %v844 = vunpack.c.h.b16 %v776
        %v845 = vunpack.c.l.b16 %v777
        %v846 = vunpack.c.l.b16 %v778
        %v847 = vunpack.c.h.b16 %v778
        %v848 = vunpack.c.l.b16 %v779
        %v849 = vunpack.c.l.b16 %v780
        %v850 = vunpack.c.h.b16 %v780
        %v851 = vunpack.c.l.b16 %v781
        %v852 = vunpack.c.l.b16 %v782
        %v853 = vunpack.c.h.b16 %v782
        %v854 = vunpack.c.l.b16 %v783
        %v855 = vunpack.c.l.b16 %v784
        %v856 = vunpack.c.h.b16 %v784
        %v857 = vunpack.c.l.b16 %v785
        %v858 = vunpack.c.l.b16 %v786
        %v859 = vunpack.c.h.b16 %v786
        %v860 = vunpack.c.l.b16 %v787
        %v861 = vunpack.c.l.b16 %v788
        %v862 = vunpack.c.h.b16 %v788
        %v863 = vunpack.c.l.b16 %v789
        %v864 = vunpack.c.l.b16 %v790
        %v865 = vunpack.c.h.b16 %v790
        %v866 = vunpack.c.l.b16 %v791
        %v867 = vunpack.c.l.b16 %v792
        %v868 = vunpack.c.h.b16 %v792
        %v869 = vunpack.c.l.b16 %v793
        %v870 = vunpack.c.l.b16 %v794
        %v871 = vunpack.c.h.b16 %v794
        %v872 = vunpack.c.l.b16 %v795
        %v873 = vunpack.c.l.b16 %v796
        %v874 = vunpack.c.h.b16 %v796
        %v875 = vunpack.c.l.b16 %v797
        %v876 = vunpack.c.l.b16 %v798
        %v877 = vunpack.c.h.b16 %v798
        %v878 = vunpack.c.l.b16 %v799
        %v879 = vunpack.c.l.b16 %v800
        %v880 = vunpack.c.h.b16 %v800
        %v881 = vunpack.c.l.b16 %v801
        %v882 = vpack.c.b16 %v837, %v834
        %v883 = vpack.c.b16 %v838, %v835
        %v884 = vpack.c.b16 %v839, %v836
        %v885 = vpack.c.b16 %v843, %v840
        %v886 = vpack.c.b16 %v844, %v841
        %v887 = vpack.c.b16 %v845, %v842
        %v888 = vpack.c.b16 %v849, %v846
        %v889 = vpack.c.b16 %v850, %v847
        %v890 = vpack.c.b16 %v851, %v848
        %v891 = vpack.c.b16 %v855, %v852
        %v892 = vpack.c.b16 %v856, %v853
        %v893 = vpack.c.b16 %v857, %v854
        %v894 = vpack.c.b16 %v861, %v858
        %v895 = vpack.c.b16 %v862, %v859
        %v896 = vpack.c.b16 %v863, %v860
        %v897 = vpack.c.b16 %v867, %v864
        %v898 = vpack.c.b16 %v868, %v865
        %v899 = vpack.c.b16 %v869, %v866
        %v900 = vpack.c.b16 %v873, %v870
        %v901 = vpack.c.b16 %v874, %v871
        %v902 = vpack.c.b16 %v875, %v872
        %v903 = vpack.c.b16 %v879, %v876
        %v904 = vpack.c.b16 %v880, %v877
        %v905 = vpack.c.b16 %v881, %v878
        %930 = vmatprep.subr.bf16.mxu0 %v883
        %931 = vmatpush1.bf16.msra.mxu0 %v882
        %932 = vmatprep.subr.bf16.mxu0 %v886
        %933 = vmatpush1.bf16.msra.mxu0 %v885
        %934 = vmatprep.subr.bf16.mxu0 %v889
        %935 = vmatpush1.bf16.msra.mxu0 %v888
        %936 = vmatprep.subr.bf16.mxu0 %v892
        %937 = vmatpush1.bf16.msra.mxu0 %v891
        %938 = vmatprep.subr.bf16.mxu0 %v895
        %939 = vmatpush1.bf16.msra.mxu0 %v894
        %940 = vmatprep.subr.bf16.mxu0 %v898
        %941 = vmatpush1.bf16.msra.mxu0 %v897
        %942 = vmatprep.subr.bf16.mxu0 %v901
        %943 = vmatpush1.bf16.msra.mxu0 %v900
        %944 = vmatprep.subr.bf16.mxu0 %v904
        %945 = vmatpush1.bf16.msra.mxu0 %v903
        %946 = vmatprep.subr.bf16.mxu0 0
        %947 = vmatpush1.bf16.msra.mxu0 0
        %948 = vmatprep.subr.bf16.mxu0 0
        %949 = vmatpush1.bf16.msra.mxu0 0
        %950 = vmatprep.subr.bf16.mxu0 0
        %951 = vmatpush1.bf16.msra.mxu0 0
        %952 = vmatprep.subr.bf16.mxu0 0
        %953 = vmatpush1.bf16.msra.mxu0 0
        %954 = vmatprep.subr.bf16.mxu0 0
        %955 = vmatpush1.bf16.msra.mxu0 0
        %956 = vmatprep.subr.bf16.mxu0 0
        %957 = vmatpush1.bf16.msra.mxu0 0
        %958 = vmatprep.subr.bf16.mxu0 0
        %959 = vmatpush1.bf16.msra.mxu0 0
        %960 = vmatprep.subr.bf16.mxu0 0
        %961 = vmatpush1.bf16.msra.mxu0 0
        %962 = vmatprep.mubr.bf16.mxu0 0
        %963 = vmatmul.mubr.bf16.gmra.mrb[0].mxu0 %v766
        %v964 = vpop.f32.mrb[0].mxu0
        %v965 = vadd.f32 0.0, %v964
        %v966 = vpop.f32.mrb[0].mxu0
        %v967 = vadd.f32 0.0, %v966
        %v968 = vpop.f32.mrb[0].mxu0
        %v969 = vadd.f32 0.0, %v968
        %v970 = vpop.f32.mrb[0].mxu0
        %v971 = vadd.f32 0.0, %v970
        %972 = vmatprep.mubr.bf16.mxu0 0
        %973 = vmatmul.mubr.bf16.gmra.mrb[0].mxu0 %v767
        %v974 = vpop.f32.mrb[0].mxu0
        %v975 = vadd.f32 0.0, %v974
        %v976 = vpop.f32.mrb[0].mxu0
        %v977 = vadd.f32 0.0, %v976
        %v978 = vpop.f32.mrb[0].mxu0
        %v979 = vadd.f32 0.0, %v978
        %v980 = vpop.f32.mrb[0].mxu0
        %v981 = vadd.f32 0.0, %v980
        %982 = vmatprep.mubr.bf16.mxu0 0
        %983 = vmatmul.mubr.bf16.gmra.mrb[0].mxu0 %v768
        %v984 = vpop.f32.mrb[0].mxu0
        %v985 = vadd.f32 0.0, %v984
        %v986 = vpop.f32.mrb[0].mxu0
        %v987 = vadd.f32 0.0, %v986
        %v988 = vpop.f32.mrb[0].mxu0
        %v989 = vadd.f32 0.0, %v988
        %v990 = vpop.f32.mrb[0].mxu0
        %v991 = vadd.f32 0.0, %v990
        %992 = vmatprep.mubr.bf16.mxu0 0
        %993 = vmatmul.mubr.bf16.gmra.mrb[0].mxu0 %v769
        %v994 = vpop.f32.mrb[0].mxu0
        %v995 = vadd.f32 0.0, %v994
        %v996 = vpop.f32.mrb[0].mxu0
        %v997 = vadd.f32 0.0, %v996
        %v998 = vpop.f32.mrb[0].mxu0
        %v999 = vadd.f32 0.0, %v998
        %v1000 = vpop.f32.mrb[0].mxu0
        %v1001 = vadd.f32 0.0, %v1000
        %1002 = vdwg.mxu0
        %1003 = vmatprep.subr.bf16.mxu0 0
        %1004 = vmatpush1.bf16.msra.mxu0 %v884
        %1005 = vmatprep.subr.bf16.mxu0 0
        %1006 = vmatpush1.bf16.msra.mxu0 %v887
        %1007 = vmatprep.subr.bf16.mxu0 0
        %1008 = vmatpush1.bf16.msra.mxu0 %v890
        %1009 = vmatprep.subr.bf16.mxu0 0
        %1010 = vmatpush1.bf16.msra.mxu0 %v893
        %1011 = vmatprep.subr.bf16.mxu0 0
        %1012 = vmatpush1.bf16.msra.mxu0 %v896
        %1013 = vmatprep.subr.bf16.mxu0 0
        %1014 = vmatpush1.bf16.msra.mxu0 %v899
        %1015 = vmatprep.subr.bf16.mxu0 0
        %1016 = vmatpush1.bf16.msra.mxu0 %v902
        %1017 = vmatprep.subr.bf16.mxu0 0
        %1018 = vmatpush1.bf16.msra.mxu0 %v905
        %1019 = vmatprep.subr.bf16.mxu0 0
        %1020 = vmatpush1.bf16.msra.mxu0 0
        %1021 = vmatprep.subr.bf16.mxu0 0
        %1022 = vmatpush1.bf16.msra.mxu0 0
        %1023 = vmatprep.subr.bf16.mxu0 0
        %1024 = vmatpush1.bf16.msra.mxu0 0
        %1025 = vmatprep.subr.bf16.mxu0 0
        %1026 = vmatpush1.bf16.msra.mxu0 0
        %1027 = vmatprep.subr.bf16.mxu0 0
        %1028 = vmatpush1.bf16.msra.mxu0 0
        %1029 = vmatprep.subr.bf16.mxu0 0
        %1030 = vmatpush1.bf16.msra.mxu0 0
        %1031 = vmatprep.subr.bf16.mxu0 0
        %1032 = vmatpush1.bf16.msra.mxu0 0
        %1033 = vmatprep.subr.bf16.mxu0 0
        %1034 = vmatpush1.bf16.msra.mxu0 0
        %1035 = vmatprep.mubr.bf16.mxu0 0
        %1036 = vmatmul.mubr.bf16.gmra.mrb[0].mxu0 %v766
        %v1037 = vpop.f32.mrb[0].mxu0
        %v1038 = vadd.f32 0.0, %v1037
        %v1039 = vpop.f32.mrb[0].mxu0
        %v1040 = vpop.f32.mrb[0].mxu0
        %v1041 = vadd.f32 0.0, %v1040
        %v1042 = vpop.f32.mrb[0].mxu0
        %1043 = vmatprep.mubr.bf16.mxu0 0
        %1044 = vmatmul.mubr.bf16.gmra.mrb[0].mxu0 %v767
        %v1045 = vpop.f32.mrb[0].mxu0
        %v1046 = vadd.f32 0.0, %v1045
        %v1047 = vpop.f32.mrb[0].mxu0
        %v1048 = vpop.f32.mrb[0].mxu0
        %v1049 = vadd.f32 0.0, %v1048
        %v1050 = vpop.f32.mrb[0].mxu0
        %1051 = vmatprep.mubr.bf16.mxu0 0
        %1052 = vmatmul.mubr.bf16.gmra.mrb[0].mxu0 %v768
        %v1053 = vpop.f32.mrb[0].mxu0
        %v1054 = vadd.f32 0.0, %v1053
        %v1055 = vpop.f32.mrb[0].mxu0
        %v1056 = vpop.f32.mrb[0].mxu0
        %v1057 = vadd.f32 0.0, %v1056
        %v1058 = vpop.f32.mrb[0].mxu0
        %1059 = vmatprep.mubr.bf16.mxu0 0
        %1060 = vmatmul.mubr.bf16.gmra.mrb[0].mxu0 %v769
        %v1061 = vpop.f32.mrb[0].mxu0
        %v1062 = vadd.f32 0.0, %v1061
        %v1063 = vpop.f32.mrb[0].mxu0
        %v1064 = vpop.f32.mrb[0].mxu0
        %v1065 = vadd.f32 0.0, %v1064
        %v1066 = vpop.f32.mrb[0].mxu0
        %1067 = vdwg.mxu0
        %v1068 = vpack.c.bf16 %v965, %v965
        %v1069 = vpack.c.bf16 %v969, %v969
        %v1070 = vpack.c.bf16 %v975, %v975
        %v1071 = vpack.c.bf16 %v979, %v979
        %v1072 = vpack.c.bf16 %v985, %v985
        %v1073 = vpack.c.bf16 %v989, %v989
        %v1074 = vpack.c.bf16 %v995, %v995
        %v1075 = vpack.c.bf16 %v999, %v999
        %v1076 = vpack.c.bf16 %v967, %v967
        %v1077 = vpack.c.bf16 %v971, %v971
        %v1078 = vpack.c.bf16 %v977, %v977
        %v1079 = vpack.c.bf16 %v981, %v981
        %v1080 = vpack.c.bf16 %v987, %v987
        %v1081 = vpack.c.bf16 %v991, %v991
        %v1082 = vpack.c.bf16 %v997, %v997
        %v1083 = vpack.c.bf16 %v1001, %v1001
        %v1084 = vpack.c.bf16 %v1038, %v1038
        %v1085 = vpack.c.bf16 %v1041, %v1041
        %v1086 = vpack.c.bf16 %v1046, %v1046
        %v1087 = vpack.c.bf16 %v1049, %v1049
        %v1088 = vpack.c.bf16 %v1054, %v1054
        %v1089 = vpack.c.bf16 %v1057, %v1057
        %v1090 = vpack.c.bf16 %v1062, %v1062
        %v1091 = vpack.c.bf16 %v1065, %v1065
        %1092 = vmatprep.subr.bf16.mxu0 0
        %1093 = vmatpush1.bf16.xpose.msra.mxu0 %v1076
        %1094 = vmatprep.subr.bf16.mxu0 0
        %1095 = vmatpush1.bf16.xpose.msra.mxu0 0
        %1096 = vmatprep.subr.bf16.mxu0 0
        %1097 = vmatpush1.bf16.xpose.msra.mxu0 0
        %1098 = vmatprep.subr.bf16.mxu0 0
        %1099 = vmatpush1.bf16.xpose.msra.mxu0 0
        %1100 = vmatprep.subr.bf16.mxu0 0
        %1101 = vmatpush1.bf16.xpose.msra.mxu0 0
        %1102 = vmatprep.subr.bf16.mxu0 0
        %1103 = vmatpush1.bf16.xpose.msra.mxu0 0
        %1104 = vmatprep.subr.bf16.mxu0 0
        %1105 = vmatpush1.bf16.xpose.msra.mxu0 0
        %1106 = vmatprep.subr.bf16.mxu0 0
        %1107 = vmatpush1.bf16.xpose.msra.mxu0 0
        %1108 = vmatprep.subr.bf16.mxu0 0
        %1109 = vmatpush1.bf16.xpose.msra.mxu0 0
        %1110 = vmatprep.subr.bf16.mxu0 0
        %1111 = vmatpush1.bf16.xpose.msra.mxu0 0
        %1112 = vmatprep.subr.bf16.mxu0 0
        %1113 = vmatpush1.bf16.xpose.msra.mxu0 0
        %1114 = vmatprep.subr.bf16.mxu0 0
        %1115 = vmatpush1.bf16.xpose.msra.mxu0 0
        %1116 = vmatprep.subr.bf16.mxu0 0
        %1117 = vmatpush1.bf16.xpose.msra.mxu0 0
        %1118 = vmatprep.subr.bf16.mxu0 0
        %1119 = vmatpush1.bf16.xpose.msra.mxu0 0
        %1120 = vmatprep.subr.bf16.mxu0 0
        %1121 = vmatpush1.bf16.xpose.msra.mxu0 0
        %1122 = vmatprep.subr.bf16.mxu0 0
        %1123 = vmatpush1.bf16.xpose.msra.mxu0 0
        %1124 = vmatprep.mubr.bf16.mxu0 0
        %1125 = vmatmul.mubr.bf16.gmra.mrb[0].mxu0 %v1068
        %v1126 = vpop.f32.mrb[0].mxu0
        %v1127 = vadd.f32 0.0, %v1126
        %v1128 = vpop.f32.mrb[0].mxu0
        %v1129 = vpop.f32.mrb[0].mxu0
        %v1130 = vpop.f32.mrb[0].mxu0
        %1131 = vdwg.mxu0
        %1132 = vmatprep.subr.bf16.mxu0 0
        %1133 = vmatpush1.bf16.xpose.msra.mxu0 %v1077
        %1134 = vmatprep.subr.bf16.mxu0 0
        %1135 = vmatpush1.bf16.xpose.msra.mxu0 0
        %1136 = vmatprep.subr.bf16.mxu0 0
        %1137 = vmatpush1.bf16.xpose.msra.mxu0 0
        %1138 = vmatprep.subr.bf16.mxu0 0
        %1139 = vmatpush1.bf16.xpose.msra.mxu0 0
        %1140 = vmatprep.subr.bf16.mxu0 0
        %1141 = vmatpush1.bf16.xpose.msra.mxu0 0
        %1142 = vmatprep.subr.bf16.mxu0 0
        %1143 = vmatpush1.bf16.xpose.msra.mxu0 0
        %1144 = vmatprep.subr.bf16.mxu0 0
        %1145 = vmatpush1.bf16.xpose.msra.mxu0 0
        %1146 = vmatprep.subr.bf16.mxu0 0
        %1147 = vmatpush1.bf16.xpose.msra.mxu0 0
        %1148 = vmatprep.subr.bf16.mxu0 0
        %1149 = vmatpush1.bf16.xpose.msra.mxu0 0
        %1150 = vmatprep.subr.bf16.mxu0 0
        %1151 = vmatpush1.bf16.xpose.msra.mxu0 0
        %1152 = vmatprep.subr.bf16.mxu0 0
        %1153 = vmatpush1.bf16.xpose.msra.mxu0 0
        %1154 = vmatprep.subr.bf16.mxu0 0
        %1155 = vmatpush1.bf16.xpose.msra.mxu0 0
        %1156 = vmatprep.subr.bf16.mxu0 0
        %1157 = vmatpush1.bf16.xpose.msra.mxu0 0
        %1158 = vmatprep.subr.bf16.mxu0 0
        %1159 = vmatpush1.bf16.xpose.msra.mxu0 0
        %1160 = vmatprep.subr.bf16.mxu0 0
        %1161 = vmatpush1.bf16.xpose.msra.mxu0 0
        %1162 = vmatprep.subr.bf16.mxu0 0
        %1163 = vmatpush1.bf16.xpose.msra.mxu0 0
        %1164 = vmatprep.mubr.bf16.mxu0 0
        %1165 = vmatmul.mubr.bf16.gmra.mrb[0].mxu0 %v1069
        %v1166 = vpop.f32.mrb[0].mxu0
        %v1167 = vadd.f32 0.0, %v1166
        %v1168 = vpop.f32.mrb[0].mxu0
        %v1169 = vpop.f32.mrb[0].mxu0
        %v1170 = vpop.f32.mrb[0].mxu0
        %1171 = vdwg.mxu0
        %1172 = vmatprep.subr.bf16.mxu0 0
        %1173 = vmatpush1.bf16.xpose.msra.mxu0 %v1078
        %1174 = vmatprep.subr.bf16.mxu0 0
        %1175 = vmatpush1.bf16.xpose.msra.mxu0 0
        %1176 = vmatprep.subr.bf16.mxu0 0
        %1177 = vmatpush1.bf16.xpose.msra.mxu0 0
        %1178 = vmatprep.subr.bf16.mxu0 0
        %1179 = vmatpush1.bf16.xpose.msra.mxu0 0
        %1180 = vmatprep.subr.bf16.mxu0 0
        %1181 = vmatpush1.bf16.xpose.msra.mxu0 0
        %1182 = vmatprep.subr.bf16.mxu0 0
        %1183 = vmatpush1.bf16.xpose.msra.mxu0 0
        %1184 = vmatprep.subr.bf16.mxu0 0
        %1185 = vmatpush1.bf16.xpose.msra.mxu0 0
        %1186 = vmatprep.subr.bf16.mxu0 0
        %1187 = vmatpush1.bf16.xpose.msra.mxu0 0
        %1188 = vmatprep.subr.bf16.mxu0 0
        %1189 = vmatpush1.bf16.xpose.msra.mxu0 0
        %1190 = vmatprep.subr.bf16.mxu0 0
        %1191 = vmatpush1.bf16.xpose.msra.mxu0 0
        %1192 = vmatprep.subr.bf16.mxu0 0
        %1193 = vmatpush1.bf16.xpose.msra.mxu0 0
        %1194 = vmatprep.subr.bf16.mxu0 0
        %1195 = vmatpush1.bf16.xpose.msra.mxu0 0
        %1196 = vmatprep.subr.bf16.mxu0 0
        %1197 = vmatpush1.bf16.xpose.msra.mxu0 0
        %1198 = vmatprep.subr.bf16.mxu0 0
        %1199 = vmatpush1.bf16.xpose.msra.mxu0 0
        %1200 = vmatprep.subr.bf16.mxu0 0
        %1201 = vmatpush1.bf16.xpose.msra.mxu0 0
        %1202 = vmatprep.subr.bf16.mxu0 0
        %1203 = vmatpush1.bf16.xpose.msra.mxu0 0
        %1204 = vmatprep.mubr.bf16.mxu0 0
        %1205 = vmatmul.mubr.bf16.gmra.mrb[0].mxu0 %v1070
        %v1206 = vpop.f32.mrb[0].mxu0
        %v1207 = vadd.f32 0.0, %v1206
        %v1208 = vpop.f32.mrb[0].mxu0
        %v1209 = vpop.f32.mrb[0].mxu0
        %v1210 = vpop.f32.mrb[0].mxu0
        %1211 = vdwg.mxu0
        %1212 = vmatprep.subr.bf16.mxu0 0
        %1213 = vmatpush1.bf16.xpose.msra.mxu0 %v1079
        %1214 = vmatprep.subr.bf16.mxu0 0
        %1215 = vmatpush1.bf16.xpose.msra.mxu0 0
        %1216 = vmatprep.subr.bf16.mxu0 0
        %1217 = vmatpush1.bf16.xpose.msra.mxu0 0
        %1218 = vmatprep.subr.bf16.mxu0 0
        %1219 = vmatpush1.bf16.xpose.msra.mxu0 0
        %1220 = vmatprep.subr.bf16.mxu0 0
        %1221 = vmatpush1.bf16.xpose.msra.mxu0 0
        %1222 = vmatprep.subr.bf16.mxu0 0
        %1223 = vmatpush1.bf16.xpose.msra.mxu0 0
        %1224 = vmatprep.subr.bf16.mxu0 0
        %1225 = vmatpush1.bf16.xpose.msra.mxu0 0
        %1226 = vmatprep.subr.bf16.mxu0 0
        %1227 = vmatpush1.bf16.xpose.msra.mxu0 0
        %1228 = vmatprep.subr.bf16.mxu0 0
        %1229 = vmatpush1.bf16.xpose.msra.mxu0 0
        %1230 = vmatprep.subr.bf16.mxu0 0
        %1231 = vmatpush1.bf16.xpose.msra.mxu0 0
        %1232 = vmatprep.subr.bf16.mxu0 0
        %1233 = vmatpush1.bf16.xpose.msra.mxu0 0
        %1234 = vmatprep.subr.bf16.mxu0 0
        %1235 = vmatpush1.bf16.xpose.msra.mxu0 0
        %1236 = vmatprep.subr.bf16.mxu0 0
        %1237 = vmatpush1.bf16.xpose.msra.mxu0 0
        %1238 = vmatprep.subr.bf16.mxu0 0
        %1239 = vmatpush1.bf16.xpose.msra.mxu0 0
        %1240 = vmatprep.subr.bf16.mxu0 0
        %1241 = vmatpush1.bf16.xpose.msra.mxu0 0
        %1242 = vmatprep.subr.bf16.mxu0 0
        %1243 = vmatpush1.bf16.xpose.msra.mxu0 0
        %1244 = vmatprep.mubr.bf16.mxu0 0
        %1245 = vmatmul.mubr.bf16.gmra.mrb[0].mxu0 %v1071
        %v1246 = vpop.f32.mrb[0].mxu0
        %v1247 = vadd.f32 0.0, %v1246
        %v1248 = vpop.f32.mrb[0].mxu0
        %v1249 = vpop.f32.mrb[0].mxu0
        %v1250 = vpop.f32.mrb[0].mxu0
        %1251 = vdwg.mxu0
        %1252 = vmatprep.subr.bf16.mxu0 0
        %1253 = vmatpush1.bf16.xpose.msra.mxu0 %v1080
        %1254 = vmatprep.subr.bf16.mxu0 0
        %1255 = vmatpush1.bf16.xpose.msra.mxu0 0
        %1256 = vmatprep.subr.bf16.mxu0 0
        %1257 = vmatpush1.bf16.xpose.msra.mxu0 0
        %1258 = vmatprep.subr.bf16.mxu0 0
        %1259 = vmatpush1.bf16.xpose.msra.mxu0 0
        %1260 = vmatprep.subr.bf16.mxu0 0
        %1261 = vmatpush1.bf16.xpose.msra.mxu0 0
        %1262 = vmatprep.subr.bf16.mxu0 0
        %1263 = vmatpush1.bf16.xpose.msra.mxu0 0
        %1264 = vmatprep.subr.bf16.mxu0 0
        %1265 = vmatpush1.bf16.xpose.msra.mxu0 0
        %1266 = vmatprep.subr.bf16.mxu0 0
        %1267 = vmatpush1.bf16.xpose.msra.mxu0 0
        %1268 = vmatprep.subr.bf16.mxu0 0
        %1269 = vmatpush1.bf16.xpose.msra.mxu0 0
        %1270 = vmatprep.subr.bf16.mxu0 0
        %1271 = vmatpush1.bf16.xpose.msra.mxu0 0
        %1272 = vmatprep.subr.bf16.mxu0 0
        %1273 = vmatpush1.bf16.xpose.msra.mxu0 0
        %1274 = vmatprep.subr.bf16.mxu0 0
        %1275 = vmatpush1.bf16.xpose.msra.mxu0 0
        %1276 = vmatprep.subr.bf16.mxu0 0
        %1277 = vmatpush1.bf16.xpose.msra.mxu0 0
        %1278 = vmatprep.subr.bf16.mxu0 0
        %1279 = vmatpush1.bf16.xpose.msra.mxu0 0
        %1280 = vmatprep.subr.bf16.mxu0 0
        %1281 = vmatpush1.bf16.xpose.msra.mxu0 0
        %1282 = vmatprep.subr.bf16.mxu0 0
        %1283 = vmatpush1.bf16.xpose.msra.mxu0 0
        %1284 = vmatprep.mubr.bf16.mxu0 0
        %1285 = vmatmul.mubr.bf16.gmra.mrb[0].mxu0 %v1072
        %v1286 = vpop.f32.mrb[0].mxu0
        %v1287 = vadd.f32 0.0, %v1286
        %v1288 = vpop.f32.mrb[0].mxu0
        %v1289 = vpop.f32.mrb[0].mxu0
        %v1290 = vpop.f32.mrb[0].mxu0
        %1291 = vdwg.mxu0
        %1292 = vmatprep.subr.bf16.mxu0 0
        %1293 = vmatpush1.bf16.xpose.msra.mxu0 %v1081
        %1294 = vmatprep.subr.bf16.mxu0 0
        %1295 = vmatpush1.bf16.xpose.msra.mxu0 0
        %1296 = vmatprep.subr.bf16.mxu0 0
        %1297 = vmatpush1.bf16.xpose.msra.mxu0 0
        %1298 = vmatprep.subr.bf16.mxu0 0
        %1299 = vmatpush1.bf16.xpose.msra.mxu0 0
        %1300 = vmatprep.subr.bf16.mxu0 0
        %1301 = vmatpush1.bf16.xpose.msra.mxu0 0
        %1302 = vmatprep.subr.bf16.mxu0 0
        %1303 = vmatpush1.bf16.xpose.msra.mxu0 0
        %1304 = vmatprep.subr.bf16.mxu0 0
        %1305 = vmatpush1.bf16.xpose.msra.mxu0 0
        %1306 = vmatprep.subr.bf16.mxu0 0
        %1307 = vmatpush1.bf16.xpose.msra.mxu0 0
        %1308 = vmatprep.subr.bf16.mxu0 0
        %1309 = vmatpush1.bf16.xpose.msra.mxu0 0
        %1310 = vmatprep.subr.bf16.mxu0 0
        %1311 = vmatpush1.bf16.xpose.msra.mxu0 0
        %1312 = vmatprep.subr.bf16.mxu0 0
        %1313 = vmatpush1.bf16.xpose.msra.mxu0 0
        %1314 = vmatprep.subr.bf16.mxu0 0
        %1315 = vmatpush1.bf16.xpose.msra.mxu0 0
        %1316 = vmatprep.subr.bf16.mxu0 0
        %1317 = vmatpush1.bf16.xpose.msra.mxu0 0
        %1318 = vmatprep.subr.bf16.mxu0 0
        %1319 = vmatpush1.bf16.xpose.msra.mxu0 0
        %1320 = vmatprep.subr.bf16.mxu0 0
        %1321 = vmatpush1.bf16.xpose.msra.mxu0 0
        %1322 = vmatprep.subr.bf16.mxu0 0
        %1323 = vmatpush1.bf16.xpose.msra.mxu0 0
        %1324 = vmatprep.mubr.bf16.mxu0 0
        %1325 = vmatmul.mubr.bf16.gmra.mrb[0].mxu0 %v1073
        %v1326 = vpop.f32.mrb[0].mxu0
        %v1327 = vadd.f32 0.0, %v1326
        %v1328 = vpop.f32.mrb[0].mxu0
        %v1329 = vpop.f32.mrb[0].mxu0
        %v1330 = vpop.f32.mrb[0].mxu0
        %1331 = vdwg.mxu0
        %1332 = vmatprep.subr.bf16.mxu0 0
        %1333 = vmatpush1.bf16.xpose.msra.mxu0 %v1082
        %1334 = vmatprep.subr.bf16.mxu0 0
        %1335 = vmatpush1.bf16.xpose.msra.mxu0 0
        %1336 = vmatprep.subr.bf16.mxu0 0
        %1337 = vmatpush1.bf16.xpose.msra.mxu0 0
        %1338 = vmatprep.subr.bf16.mxu0 0
        %1339 = vmatpush1.bf16.xpose.msra.mxu0 0
        %1340 = vmatprep.subr.bf16.mxu0 0
        %1341 = vmatpush1.bf16.xpose.msra.mxu0 0
        %1342 = vmatprep.subr.bf16.mxu0 0
        %1343 = vmatpush1.bf16.xpose.msra.mxu0 0
        %1344 = vmatprep.subr.bf16.mxu0 0
        %1345 = vmatpush1.bf16.xpose.msra.mxu0 0
        %1346 = vmatprep.subr.bf16.mxu0 0
        %1347 = vmatpush1.bf16.xpose.msra.mxu0 0
        %1348 = vmatprep.subr.bf16.mxu0 0
        %1349 = vmatpush1.bf16.xpose.msra.mxu0 0
        %1350 = vmatprep.subr.bf16.mxu0 0
        %1351 = vmatpush1.bf16.xpose.msra.mxu0 0
        %1352 = vmatprep.subr.bf16.mxu0 0
        %1353 = vmatpush1.bf16.xpose.msra.mxu0 0
        %1354 = vmatprep.subr.bf16.mxu0 0
        %1355 = vmatpush1.bf16.xpose.msra.mxu0 0
        %1356 = vmatprep.subr.bf16.mxu0 0
        %1357 = vmatpush1.bf16.xpose.msra.mxu0 0
        %1358 = vmatprep.subr.bf16.mxu0 0
        %1359 = vmatpush1.bf16.xpose.msra.mxu0 0
        %1360 = vmatprep.subr.bf16.mxu0 0
        %1361 = vmatpush1.bf16.xpose.msra.mxu0 0
        %1362 = vmatprep.subr.bf16.mxu0 0
        %1363 = vmatpush1.bf16.xpose.msra.mxu0 0
        %1364 = vmatprep.mubr.bf16.mxu0 0
        %1365 = vmatmul.mubr.bf16.gmra.mrb[0].mxu0 %v1074
        %v1366 = vpop.f32.mrb[0].mxu0
        %v1367 = vadd.f32 0.0, %v1366
        %v1368 = vpop.f32.mrb[0].mxu0
        %v1369 = vpop.f32.mrb[0].mxu0
        %v1370 = vpop.f32.mrb[0].mxu0
        %1371 = vdwg.mxu0
        %1372 = vmatprep.subr.bf16.mxu0 0
        %1373 = vmatpush1.bf16.xpose.msra.mxu0 %v1083
        %1374 = vmatprep.subr.bf16.mxu0 0
        %1375 = vmatpush1.bf16.xpose.msra.mxu0 0
        %1376 = vmatprep.subr.bf16.mxu0 0
        %1377 = vmatpush1.bf16.xpose.msra.mxu0 0
        %1378 = vmatprep.subr.bf16.mxu0 0
        %1379 = vmatpush1.bf16.xpose.msra.mxu0 0
        %1380 = vmatprep.subr.bf16.mxu0 0
        %1381 = vmatpush1.bf16.xpose.msra.mxu0 0
        %1382 = vmatprep.subr.bf16.mxu0 0
        %1383 = vmatpush1.bf16.xpose.msra.mxu0 0
        %1384 = vmatprep.subr.bf16.mxu0 0
        %1385 = vmatpush1.bf16.xpose.msra.mxu0 0
        %1386 = vmatprep.subr.bf16.mxu0 0
        %1387 = vmatpush1.bf16.xpose.msra.mxu0 0
        %1388 = vmatprep.subr.bf16.mxu0 0
        %1389 = vmatpush1.bf16.xpose.msra.mxu0 0
        %1390 = vmatprep.subr.bf16.mxu0 0
        %1391 = vmatpush1.bf16.xpose.msra.mxu0 0
        %1392 = vmatprep.subr.bf16.mxu0 0
        %1393 = vmatpush1.bf16.xpose.msra.mxu0 0
        %1394 = vmatprep.subr.bf16.mxu0 0
        %1395 = vmatpush1.bf16.xpose.msra.mxu0 0
        %1396 = vmatprep.subr.bf16.mxu0 0
        %1397 = vmatpush1.bf16.xpose.msra.mxu0 0
        %1398 = vmatprep.subr.bf16.mxu0 0
        %1399 = vmatpush1.bf16.xpose.msra.mxu0 0
        %1400 = vmatprep.subr.bf16.mxu0 0
        %1401 = vmatpush1.bf16.xpose.msra.mxu0 0
        %1402 = vmatprep.subr.bf16.mxu0 0
        %1403 = vmatpush1.bf16.xpose.msra.mxu0 0
        %1404 = vmatprep.mubr.bf16.mxu0 0
        %1405 = vmatmul.mubr.bf16.gmra.mrb[0].mxu0 %v1075
        %v1406 = vpop.f32.mrb[0].mxu0
        %v1407 = vadd.f32 0.0, %v1406
        %v1408 = vpop.f32.mrb[0].mxu0
        %v1409 = vpop.f32.mrb[0].mxu0
        %v1410 = vpop.f32.mrb[0].mxu0
        %1411 = vdwg.mxu0
        %v1412 = vmul.f32 %v1127, 0.088388346
        %v1413 = vmul.f32 %v1167, 0.088388346
        %v1414 = vmul.f32 %v1207, 0.088388346
        %v1415 = vmul.f32 %v1247, 0.088388346
        %v1416 = vmul.f32 %v1287, 0.088388346
        %v1417 = vmul.f32 %v1327, 0.088388346
        %v1418 = vmul.f32 %v1367, 0.088388346
        %v1419 = vmul.f32 %v1407, 0.088388346
        %v1420 = vlaneseq
        %v1421 = vshrl.u32 %v1420, 7
        %vm1422 = vcmp.ge.s32.totalorder %v1421, %v475
        %v1423 = vld [vmem:[%s471] sm:$0xff]
        %v1425 = vcombine.high %v1423, %v1423
        %v1427 = vunpack.c.l.s4 1966171168
        %v1428 = vunpack.c.0.s8 %v1427
        %v1429 = vlaneseq
        %v1430 = vshrl.u32 %v1429, 7
        %v1431 = vsub.s32 %v1428, %v1430
        %v1432 = vrot.slane %v1423, %v1431
        %v1434 = vunpack.c.l.s4 1966171168
        %v1435 = vunpack.c.0.s8 %v1434
        %v1436 = vlaneseq
        %v1437 = vshrl.u32 %v1436, 7
        %v1438 = vsub.s32 %v1435, %v1437
        %v1439 = vrot.slane %v1425, %v1438
        %v1440 = vcombine.high %v1432, %v1432
        %v1441 = vcombine.high %v1439, %v1439
        %v1443 = vunpack.c.l.s4 1966171168
        %v1444 = vunpack.c.0.s8 %v1443
        %v1445 = vlaneseq
        %v1446 = vshrl.u32 %v1445, 7
        %v1447 = vsub.s32 %v1444, %v1446
        %v1448 = vrot.slane %v1432, %v1447
        %v1450 = vunpack.c.l.s4 1966171168
        %v1451 = vunpack.c.0.s8 %v1450
        %v1452 = vlaneseq
        %v1453 = vshrl.u32 %v1452, 7
        %v1454 = vsub.s32 %v1451, %v1453
        %v1455 = vrot.slane %v1439, %v1454
        %v1457 = vunpack.c.l.s4 1966171168
        %v1458 = vunpack.c.0.s8 %v1457
        %v1459 = vlaneseq
        %v1460 = vshrl.u32 %v1459, 7
        %v1461 = vsub.s32 %v1458, %v1460
        %v1462 = vrot.slane %v1440, %v1461
        %v1464 = vunpack.c.l.s4 1966171168
        %v1465 = vunpack.c.0.s8 %v1464
        %v1466 = vlaneseq
        %v1467 = vshrl.u32 %v1466, 7
        %v1468 = vsub.s32 %v1465, %v1467
        %v1469 = vrot.slane %v1441, %v1468
        %v1470 = vcombine.high %v1448, %v1448
        %v1471 = vcombine.high %v1455, %v1455
        %v1472 = vcombine.high %v1462, %v1462
        %v1473 = vcombine.high %v1469, %v1469
        %vm1482 = vcmp.gt.f32.partialorder %v1448, 0.0
        %vm1483 = vcmp.gt.f32.partialorder %v1462, 0.0
        %vm1484 = vcmp.gt.f32.partialorder %v1470, 0.0
        %vm1485 = vcmp.gt.f32.partialorder %v1472, 0.0
        %vm1486 = vcmp.gt.f32.partialorder %v1455, 0.0
        %vm1487 = vcmp.gt.f32.partialorder %v1469, 0.0
        %vm1488 = vcmp.gt.f32.partialorder %v1471, 0.0
        %vm1489 = vcmp.gt.f32.partialorder %v1473, 0.0
        %v1490 = vsel %vm1422, 1, 0
        %vm1491 = vcmp.eq.s32.totalorder %v1490, 1
        %v1492 = vsel %vm1482, 1, 0
        %v1493 = vsel %vm1483, 1, 0
        %v1494 = vsel %vm1484, 1, 0
        %v1495 = vsel %vm1485, 1, 0
        %v1496 = vsel %vm1486, 1, 0
        %v1497 = vsel %vm1487, 1, 0
        %v1498 = vsel %vm1488, 1, 0
        %v1499 = vsel %vm1489, 1, 0
        %v1500 = vlaneseq
        %v1501 = vshrl.u32 %v1500, 7
        %v1502 = vsub.s32 0, %v1501
        %v1503 = vrot.slane %v1492, %v1502
        %v1504 = vlaneseq
        %v1505 = vshrl.u32 %v1504, 7
        %v1506 = vsub.s32 0, %v1505
        %v1507 = vrot.slane %v1493, %v1506
        %v1508 = vlaneseq
        %v1509 = vshrl.u32 %v1508, 7
        %v1510 = vsub.s32 0, %v1509
        %v1511 = vrot.slane %v1494, %v1510
        %v1512 = vlaneseq
        %v1513 = vshrl.u32 %v1512, 7
        %v1514 = vsub.s32 0, %v1513
        %v1515 = vrot.slane %v1495, %v1514
        %v1516 = vlaneseq
        %v1517 = vshrl.u32 %v1516, 7
        %v1518 = vsub.s32 0, %v1517
        %v1519 = vrot.slane %v1496, %v1518
        %v1520 = vlaneseq
        %v1521 = vshrl.u32 %v1520, 7
        %v1522 = vsub.s32 0, %v1521
        %v1523 = vrot.slane %v1497, %v1522
        %v1524 = vlaneseq
        %v1525 = vshrl.u32 %v1524, 7
        %v1526 = vsub.s32 0, %v1525
        %v1527 = vrot.slane %v1498, %v1526
        %v1528 = vlaneseq
        %v1529 = vshrl.u32 %v1528, 7
        %v1530 = vsub.s32 0, %v1529
        %v1531 = vrot.slane %v1499, %v1530
        %vm1532 = vcmp.eq.s32.totalorder %v1503, 1
        %vm1533 = vcmp.eq.s32.totalorder %v1507, 1
        %vm1534 = vcmp.eq.s32.totalorder %v1511, 1
        %vm1535 = vcmp.eq.s32.totalorder %v1515, 1
        %vm1536 = vcmp.eq.s32.totalorder %v1519, 1
        %vm1537 = vcmp.eq.s32.totalorder %v1523, 1
        %vm1538 = vcmp.eq.s32.totalorder %v1527, 1
        %vm1539 = vcmp.eq.s32.totalorder %v1531, 1
        %vm1540 = vmand %vm1491, %vm1532
        %vm1541 = vmand %vm1491, %vm1533
        %vm1542 = vmand %vm1491, %vm1534
        %vm1543 = vmand %vm1491, %vm1535
        %vm1544 = vmand %vm1491, %vm1536
        %vm1545 = vmand %vm1491, %vm1537
        %vm1546 = vmand %vm1491, %vm1538
        %vm1547 = vmand %vm1491, %vm1539
        %v1548 = vsel %vm1540, %v1412, -1e+30
        %v1549 = vsel %vm1541, %v1413, -1e+30
        %v1550 = vsel %vm1542, %v1414, -1e+30
        %v1551 = vsel %vm1543, %v1415, -1e+30
        %v1552 = vsel %vm1544, %v1416, -1e+30
        %v1553 = vsel %vm1545, %v1417, -1e+30
        %v1554 = vsel %vm1546, %v1418, -1e+30
        %v1555 = vsel %vm1547, %v1419, -1e+30
        %vm1556 = vcmask 64512
        %v1557 = vsel %vm1556, %v1548, -inf
        %1558 = vmax.xlane.f32.xlu0 %v1557
        %v1559 = vpop.xlane.xlu0 %1558
        %v1560 = vsel %vm1556, %v1549, -inf
        %1561 = vmax.xlane.f32.xlu0 %v1560
        %v1562 = vpop.xlane.xlu0 %1561
        %v1563 = vsel %vm1556, %v1550, -inf
        %1564 = vmax.xlane.f32.xlu0 %v1563
        %v1565 = vpop.xlane.xlu0 %1564
        %v1566 = vsel %vm1556, %v1551, -inf
        %1567 = vmax.xlane.f32.xlu0 %v1566
        %v1568 = vpop.xlane.xlu0 %1567
        %v1569 = vsel %vm1556, %v1552, -inf
        %1570 = vmax.xlane.f32.xlu0 %v1569
        %v1571 = vpop.xlane.xlu0 %1570
        %v1572 = vsel %vm1556, %v1553, -inf
        %1573 = vmax.xlane.f32.xlu0 %v1572
        %v1574 = vpop.xlane.xlu0 %1573
        %v1575 = vsel %vm1556, %v1554, -inf
        %1576 = vmax.xlane.f32.xlu0 %v1575
        %v1577 = vpop.xlane.xlu0 %1576
        %v1578 = vsel %vm1556, %v1555, -inf
        %1579 = vmax.xlane.f32.xlu0 %v1578
        %v1580 = vpop.xlane.xlu0 %1579
        %v1581 = vsub.f32 %v1548, %v1559
        %v1582 = vsub.f32 %v1549, %v1562
        %v1583 = vsub.f32 %v1550, %v1565
        %v1584 = vsub.f32 %v1551, %v1568
        %v1585 = vsub.f32 %v1552, %v1571
        %v1586 = vsub.f32 %v1553, %v1574
        %v1587 = vsub.f32 %v1554, %v1577
        %v1588 = vsub.f32 %v1555, %v1580
        %v1589 = vmul.f32 %v1581, 1.442695
        %v1590 = vpow.pop %v1589
        %v1591 = vmul.f32 %v1582, 1.442695
        %v1592 = vpow.pop %v1591
        %v1593 = vmul.f32 %v1583, 1.442695
        %v1594 = vpow.pop %v1593
        %v1595 = vmul.f32 %v1584, 1.442695
        %v1596 = vpow.pop %v1595
        %v1597 = vmul.f32 %v1585, 1.442695
        %v1598 = vpow.pop %v1597
        %v1599 = vmul.f32 %v1586, 1.442695
        %v1600 = vpow.pop %v1599
        %v1601 = vmul.f32 %v1587, 1.442695
        %v1602 = vpow.pop %v1601
        %v1603 = vmul.f32 %v1588, 1.442695
        %v1604 = vpow.pop %v1603
        %v1605 = vsel %vm1556, %v1590, 0.0
        %1606 = vadd.xlane.f32.xlu0 %v1605
        %v1607 = vpop.xlane.xlu0 %1606
        %v1608 = vsel %vm1556, %v1592, 0.0
        %1609 = vadd.xlane.f32.xlu0 %v1608
        %v1610 = vpop.xlane.xlu0 %1609
        %v1611 = vsel %vm1556, %v1594, 0.0
        %1612 = vadd.xlane.f32.xlu0 %v1611
        %v1613 = vpop.xlane.xlu0 %1612
        %v1614 = vsel %vm1556, %v1596, 0.0
        %1615 = vadd.xlane.f32.xlu0 %v1614
        %v1616 = vpop.xlane.xlu0 %1615
        %v1617 = vsel %vm1556, %v1598, 0.0
        %1618 = vadd.xlane.f32.xlu0 %v1617
        %v1619 = vpop.xlane.xlu0 %1618
        %v1620 = vsel %vm1556, %v1600, 0.0
        %1621 = vadd.xlane.f32.xlu0 %v1620
        %v1622 = vpop.xlane.xlu0 %1621
        %v1623 = vsel %vm1556, %v1602, 0.0
        %1624 = vadd.xlane.f32.xlu0 %v1623
        %v1625 = vpop.xlane.xlu0 %1624
        %v1626 = vsel %vm1556, %v1604, 0.0
        %1627 = vadd.xlane.f32.xlu0 %v1626
        %v1628 = vpop.xlane.xlu0 %1627
        %v1629 = vrcp.pop %v1607
        %v1630 = vrcp.pop %v1610
        %v1631 = vrcp.pop %v1613
        %v1632 = vrcp.pop %v1616
        %v1633 = vrcp.pop %v1619
        %v1634 = vrcp.pop %v1622
        %v1635 = vrcp.pop %v1625
        %v1636 = vrcp.pop %v1628
        %v1637 = vmul.f32 %v1590, %v1629
        %v1638 = vmul.f32 %v1592, %v1630
        %v1639 = vmul.f32 %v1594, %v1631
        %v1640 = vmul.f32 %v1596, %v1632
        %v1641 = vmul.f32 %v1598, %v1633
        %v1642 = vmul.f32 %v1600, %v1634
        %v1643 = vmul.f32 %v1602, %v1635
        %v1644 = vmul.f32 %v1604, %v1636
        %v1645 = vpack.c.bf16 %v1637, %v1637
        %v1646 = vpack.c.bf16 %v1638, %v1638
        %v1647 = vpack.c.bf16 %v1639, %v1639
        %v1648 = vpack.c.bf16 %v1640, %v1640
        %v1649 = vpack.c.bf16 %v1641, %v1641
        %v1650 = vpack.c.bf16 %v1642, %v1642
        %v1651 = vpack.c.bf16 %v1643, %v1643
        %v1652 = vpack.c.bf16 %v1644, %v1644
        %v1654 = vsel %vm1556, %v1645, 0
        %vm1656 = vcmask 1043456
        %v1658 = vsel %vm1656, %v1084, 0
        %1660 = vmatprep.subr.bf16.mxu0 0
        %1661 = vmatpush1.bf16.msra.mxu0 %v1658
        %1662 = vmatprep.subr.bf16.mxu0 0
        %1663 = vmatpush1.bf16.msra.mxu0 0
        %1664 = vmatprep.subr.bf16.mxu0 0
        %1665 = vmatpush1.bf16.msra.mxu0 0
        %1666 = vmatprep.subr.bf16.mxu0 0
        %1667 = vmatpush1.bf16.msra.mxu0 0
        %1668 = vmatprep.subr.bf16.mxu0 0
        %1669 = vmatpush1.bf16.msra.mxu0 0
        %1670 = vmatprep.subr.bf16.mxu0 0
        %1671 = vmatpush1.bf16.msra.mxu0 0
        %1672 = vmatprep.subr.bf16.mxu0 0
        %1673 = vmatpush1.bf16.msra.mxu0 0
        %1674 = vmatprep.subr.bf16.mxu0 0
        %1675 = vmatpush1.bf16.msra.mxu0 0
        %1676 = vmatprep.subr.bf16.mxu0 0
        %1677 = vmatpush1.bf16.msra.mxu0 0
        %1678 = vmatprep.subr.bf16.mxu0 0
        %1679 = vmatpush1.bf16.msra.mxu0 0
        %1680 = vmatprep.subr.bf16.mxu0 0
        %1681 = vmatpush1.bf16.msra.mxu0 0
        %1682 = vmatprep.subr.bf16.mxu0 0
        %1683 = vmatpush1.bf16.msra.mxu0 0
        %1684 = vmatprep.subr.bf16.mxu0 0
        %1685 = vmatpush1.bf16.msra.mxu0 0
        %1686 = vmatprep.subr.bf16.mxu0 0
        %1687 = vmatpush1.bf16.msra.mxu0 0
        %1688 = vmatprep.subr.bf16.mxu0 0
        %1689 = vmatpush1.bf16.msra.mxu0 0
        %1690 = vmatprep.subr.bf16.mxu0 0
        %1691 = vmatpush1.bf16.msra.mxu0 0
        %1692 = vmatprep.mubr.bf16.mxu0 0
        %1693 = vmatmul.mubr.bf16.gmra.mrb[0].mxu0 %v1654
        %v1694 = vpop.f32.mrb[0].mxu0
        %v1695 = vadd.f32 0.0, %v1694
        %v1696 = vpop.f32.mrb[0].mxu0
        %v1697 = vpop.f32.mrb[0].mxu0
        %v1698 = vpop.f32.mrb[0].mxu0
        %1699 = vdwg.mxu0
        %v1701 = vsel %vm1556, %v1646, 0
        %v1704 = vsel %vm1656, %v1085, 0
        %1706 = vmatprep.subr.bf16.mxu0 0
        %1707 = vmatpush1.bf16.msra.mxu0 %v1704
        %1708 = vmatprep.subr.bf16.mxu0 0
        %1709 = vmatpush1.bf16.msra.mxu0 0
        %1710 = vmatprep.subr.bf16.mxu0 0
        %1711 = vmatpush1.bf16.msra.mxu0 0
        %1712 = vmatprep.subr.bf16.mxu0 0
        %1713 = vmatpush1.bf16.msra.mxu0 0
        %1714 = vmatprep.subr.bf16.mxu0 0
        %1715 = vmatpush1.bf16.msra.mxu0 0
        %1716 = vmatprep.subr.bf16.mxu0 0
        %1717 = vmatpush1.bf16.msra.mxu0 0
        %1718 = vmatprep.subr.bf16.mxu0 0
        %1719 = vmatpush1.bf16.msra.mxu0 0
        %1720 = vmatprep.subr.bf16.mxu0 0
        %1721 = vmatpush1.bf16.msra.mxu0 0
        %1722 = vmatprep.subr.bf16.mxu0 0
        %1723 = vmatpush1.bf16.msra.mxu0 0
        %1724 = vmatprep.subr.bf16.mxu0 0
        %1725 = vmatpush1.bf16.msra.mxu0 0
        %1726 = vmatprep.subr.bf16.mxu0 0
        %1727 = vmatpush1.bf16.msra.mxu0 0
        %1728 = vmatprep.subr.bf16.mxu0 0
        %1729 = vmatpush1.bf16.msra.mxu0 0
        %1730 = vmatprep.subr.bf16.mxu0 0
        %1731 = vmatpush1.bf16.msra.mxu0 0
        %1732 = vmatprep.subr.bf16.mxu0 0
        %1733 = vmatpush1.bf16.msra.mxu0 0
        %1734 = vmatprep.subr.bf16.mxu0 0
        %1735 = vmatpush1.bf16.msra.mxu0 0
        %1736 = vmatprep.subr.bf16.mxu0 0
        %1737 = vmatpush1.bf16.msra.mxu0 0
        %1738 = vmatprep.mubr.bf16.mxu0 0
        %1739 = vmatmul.mubr.bf16.gmra.mrb[0].mxu0 %v1701
        %v1740 = vpop.f32.mrb[0].mxu0
        %v1741 = vadd.f32 0.0, %v1740
        %v1742 = vpop.f32.mrb[0].mxu0
        %v1743 = vpop.f32.mrb[0].mxu0
        %v1744 = vpop.f32.mrb[0].mxu0
        %1745 = vdwg.mxu0
        %v1747 = vsel %vm1556, %v1647, 0
        %v1750 = vsel %vm1656, %v1086, 0
        %1752 = vmatprep.subr.bf16.mxu0 0
        %1753 = vmatpush1.bf16.msra.mxu0 %v1750
        %1754 = vmatprep.subr.bf16.mxu0 0
        %1755 = vmatpush1.bf16.msra.mxu0 0
        %1756 = vmatprep.subr.bf16.mxu0 0
        %1757 = vmatpush1.bf16.msra.mxu0 0
        %1758 = vmatprep.subr.bf16.mxu0 0
        %1759 = vmatpush1.bf16.msra.mxu0 0
        %1760 = vmatprep.subr.bf16.mxu0 0
        %1761 = vmatpush1.bf16.msra.mxu0 0
        %1762 = vmatprep.subr.bf16.mxu0 0
        %1763 = vmatpush1.bf16.msra.mxu0 0
        %1764 = vmatprep.subr.bf16.mxu0 0
        %1765 = vmatpush1.bf16.msra.mxu0 0
        %1766 = vmatprep.subr.bf16.mxu0 0
        %1767 = vmatpush1.bf16.msra.mxu0 0
        %1768 = vmatprep.subr.bf16.mxu0 0
        %1769 = vmatpush1.bf16.msra.mxu0 0
        %1770 = vmatprep.subr.bf16.mxu0 0
        %1771 = vmatpush1.bf16.msra.mxu0 0
        %1772 = vmatprep.subr.bf16.mxu0 0
        %1773 = vmatpush1.bf16.msra.mxu0 0
        %1774 = vmatprep.subr.bf16.mxu0 0
        %1775 = vmatpush1.bf16.msra.mxu0 0
        %1776 = vmatprep.subr.bf16.mxu0 0
        %1777 = vmatpush1.bf16.msra.mxu0 0
        %1778 = vmatprep.subr.bf16.mxu0 0
        %1779 = vmatpush1.bf16.msra.mxu0 0
        %1780 = vmatprep.subr.bf16.mxu0 0
        %1781 = vmatpush1.bf16.msra.mxu0 0
        %1782 = vmatprep.subr.bf16.mxu0 0
        %1783 = vmatpush1.bf16.msra.mxu0 0
        %1784 = vmatprep.mubr.bf16.mxu0 0
        %1785 = vmatmul.mubr.bf16.gmra.mrb[0].mxu0 %v1747
        %v1786 = vpop.f32.mrb[0].mxu0
        %v1787 = vadd.f32 0.0, %v1786
        %v1788 = vpop.f32.mrb[0].mxu0
        %v1789 = vpop.f32.mrb[0].mxu0
        %v1790 = vpop.f32.mrb[0].mxu0
        %1791 = vdwg.mxu0
        %v1793 = vsel %vm1556, %v1648, 0
        %v1796 = vsel %vm1656, %v1087, 0
        %1798 = vmatprep.subr.bf16.mxu0 0
        %1799 = vmatpush1.bf16.msra.mxu0 %v1796
        %1800 = vmatprep.subr.bf16.mxu0 0
        %1801 = vmatpush1.bf16.msra.mxu0 0
        %1802 = vmatprep.subr.bf16.mxu0 0
        %1803 = vmatpush1.bf16.msra.mxu0 0
        %1804 = vmatprep.subr.bf16.mxu0 0
        %1805 = vmatpush1.bf16.msra.mxu0 0
        %1806 = vmatprep.subr.bf16.mxu0 0
        %1807 = vmatpush1.bf16.msra.mxu0 0
        %1808 = vmatprep.subr.bf16.mxu0 0
        %1809 = vmatpush1.bf16.msra.mxu0 0
        %1810 = vmatprep.subr.bf16.mxu0 0
        %1811 = vmatpush1.bf16.msra.mxu0 0
        %1812 = vmatprep.subr.bf16.mxu0 0
        %1813 = vmatpush1.bf16.msra.mxu0 0
        %1814 = vmatprep.subr.bf16.mxu0 0
        %1815 = vmatpush1.bf16.msra.mxu0 0
        %1816 = vmatprep.subr.bf16.mxu0 0
        %1817 = vmatpush1.bf16.msra.mxu0 0
        %1818 = vmatprep.subr.bf16.mxu0 0
        %1819 = vmatpush1.bf16.msra.mxu0 0
        %1820 = vmatprep.subr.bf16.mxu0 0
        %1821 = vmatpush1.bf16.msra.mxu0 0
        %1822 = vmatprep.subr.bf16.mxu0 0
        %1823 = vmatpush1.bf16.msra.mxu0 0
        %1824 = vmatprep.subr.bf16.mxu0 0
        %1825 = vmatpush1.bf16.msra.mxu0 0
        %1826 = vmatprep.subr.bf16.mxu0 0
        %1827 = vmatpush1.bf16.msra.mxu0 0
        %1828 = vmatprep.subr.bf16.mxu0 0
        %1829 = vmatpush1.bf16.msra.mxu0 0
        %1830 = vmatprep.mubr.bf16.mxu0 0
        %1831 = vmatmul.mubr.bf16.gmra.mrb[0].mxu0 %v1793
        %v1832 = vpop.f32.mrb[0].mxu0
        %v1833 = vadd.f32 0.0, %v1832
        %v1834 = vpop.f32.mrb[0].mxu0
        %v1835 = vpop.f32.mrb[0].mxu0
        %v1836 = vpop.f32.mrb[0].mxu0
        %1837 = vdwg.mxu0
        %v1839 = vsel %vm1556, %v1649, 0
        %v1842 = vsel %vm1656, %v1088, 0
        %1844 = vmatprep.subr.bf16.mxu0 0
        %1845 = vmatpush1.bf16.msra.mxu0 %v1842
        %1846 = vmatprep.subr.bf16.mxu0 0
        %1847 = vmatpush1.bf16.msra.mxu0 0
        %1848 = vmatprep.subr.bf16.mxu0 0
        %1849 = vmatpush1.bf16.msra.mxu0 0
        %1850 = vmatprep.subr.bf16.mxu0 0
        %1851 = vmatpush1.bf16.msra.mxu0 0
        %1852 = vmatprep.subr.bf16.mxu0 0
        %1853 = vmatpush1.bf16.msra.mxu0 0
        %1854 = vmatprep.subr.bf16.mxu0 0
        %1855 = vmatpush1.bf16.msra.mxu0 0
        %1856 = vmatprep.subr.bf16.mxu0 0
        %1857 = vmatpush1.bf16.msra.mxu0 0
        %1858 = vmatprep.subr.bf16.mxu0 0
        %1859 = vmatpush1.bf16.msra.mxu0 0
        %1860 = vmatprep.subr.bf16.mxu0 0
        %1861 = vmatpush1.bf16.msra.mxu0 0
        %1862 = vmatprep.subr.bf16.mxu0 0
        %1863 = vmatpush1.bf16.msra.mxu0 0
        %1864 = vmatprep.subr.bf16.mxu0 0
        %1865 = vmatpush1.bf16.msra.mxu0 0
        %1866 = vmatprep.subr.bf16.mxu0 0
        %1867 = vmatpush1.bf16.msra.mxu0 0
        %1868 = vmatprep.subr.bf16.mxu0 0
        %1869 = vmatpush1.bf16.msra.mxu0 0
        %1870 = vmatprep.subr.bf16.mxu0 0
        %1871 = vmatpush1.bf16.msra.mxu0 0
        %1872 = vmatprep.subr.bf16.mxu0 0
        %1873 = vmatpush1.bf16.msra.mxu0 0
        %1874 = vmatprep.subr.bf16.mxu0 0
        %1875 = vmatpush1.bf16.msra.mxu0 0
        %1876 = vmatprep.mubr.bf16.mxu0 0
        %1877 = vmatmul.mubr.bf16.gmra.mrb[0].mxu0 %v1839
        %v1878 = vpop.f32.mrb[0].mxu0
        %v1879 = vadd.f32 0.0, %v1878
        %v1880 = vpop.f32.mrb[0].mxu0
        %v1881 = vpop.f32.mrb[0].mxu0
        %v1882 = vpop.f32.mrb[0].mxu0
        %1883 = vdwg.mxu0
        %v1885 = vsel %vm1556, %v1650, 0
        %v1888 = vsel %vm1656, %v1089, 0
        %1890 = vmatprep.subr.bf16.mxu0 0
        %1891 = vmatpush1.bf16.msra.mxu0 %v1888
        %1892 = vmatprep.subr.bf16.mxu0 0
        %1893 = vmatpush1.bf16.msra.mxu0 0
        %1894 = vmatprep.subr.bf16.mxu0 0
        %1895 = vmatpush1.bf16.msra.mxu0 0
        %1896 = vmatprep.subr.bf16.mxu0 0
        %1897 = vmatpush1.bf16.msra.mxu0 0
        %1898 = vmatprep.subr.bf16.mxu0 0
        %1899 = vmatpush1.bf16.msra.mxu0 0
        %1900 = vmatprep.subr.bf16.mxu0 0
        %1901 = vmatpush1.bf16.msra.mxu0 0
        %1902 = vmatprep.subr.bf16.mxu0 0
        %1903 = vmatpush1.bf16.msra.mxu0 0
        %1904 = vmatprep.subr.bf16.mxu0 0
        %1905 = vmatpush1.bf16.msra.mxu0 0
        %1906 = vmatprep.subr.bf16.mxu0 0
        %1907 = vmatpush1.bf16.msra.mxu0 0
        %1908 = vmatprep.subr.bf16.mxu0 0
        %1909 = vmatpush1.bf16.msra.mxu0 0
        %1910 = vmatprep.subr.bf16.mxu0 0
        %1911 = vmatpush1.bf16.msra.mxu0 0
        %1912 = vmatprep.subr.bf16.mxu0 0
        %1913 = vmatpush1.bf16.msra.mxu0 0
        %1914 = vmatprep.subr.bf16.mxu0 0
        %1915 = vmatpush1.bf16.msra.mxu0 0
        %1916 = vmatprep.subr.bf16.mxu0 0
        %1917 = vmatpush1.bf16.msra.mxu0 0
        %1918 = vmatprep.subr.bf16.mxu0 0
        %1919 = vmatpush1.bf16.msra.mxu0 0
        %1920 = vmatprep.subr.bf16.mxu0 0
        %1921 = vmatpush1.bf16.msra.mxu0 0
        %1922 = vmatprep.mubr.bf16.mxu0 0
        %1923 = vmatmul.mubr.bf16.gmra.mrb[0].mxu0 %v1885
        %v1924 = vpop.f32.mrb[0].mxu0
        %v1925 = vadd.f32 0.0, %v1924
        %v1926 = vpop.f32.mrb[0].mxu0
        %v1927 = vpop.f32.mrb[0].mxu0
        %v1928 = vpop.f32.mrb[0].mxu0
        %1929 = vdwg.mxu0
        %v1931 = vsel %vm1556, %v1651, 0
        %v1934 = vsel %vm1656, %v1090, 0
        %1936 = vmatprep.subr.bf16.mxu0 0
        %1937 = vmatpush1.bf16.msra.mxu0 %v1934
        %1938 = vmatprep.subr.bf16.mxu0 0
        %1939 = vmatpush1.bf16.msra.mxu0 0
        %1940 = vmatprep.subr.bf16.mxu0 0
        %1941 = vmatpush1.bf16.msra.mxu0 0
        %1942 = vmatprep.subr.bf16.mxu0 0
        %1943 = vmatpush1.bf16.msra.mxu0 0
        %1944 = vmatprep.subr.bf16.mxu0 0
        %1945 = vmatpush1.bf16.msra.mxu0 0
        %1946 = vmatprep.subr.bf16.mxu0 0
        %1947 = vmatpush1.bf16.msra.mxu0 0
        %1948 = vmatprep.subr.bf16.mxu0 0
        %1949 = vmatpush1.bf16.msra.mxu0 0
        %1950 = vmatprep.subr.bf16.mxu0 0
        %1951 = vmatpush1.bf16.msra.mxu0 0
        %1952 = vmatprep.subr.bf16.mxu0 0
        %1953 = vmatpush1.bf16.msra.mxu0 0
        %1954 = vmatprep.subr.bf16.mxu0 0
        %1955 = vmatpush1.bf16.msra.mxu0 0
        %1956 = vmatprep.subr.bf16.mxu0 0
        %1957 = vmatpush1.bf16.msra.mxu0 0
        %1958 = vmatprep.subr.bf16.mxu0 0
        %1959 = vmatpush1.bf16.msra.mxu0 0
        %1960 = vmatprep.subr.bf16.mxu0 0
        %1961 = vmatpush1.bf16.msra.mxu0 0
        %1962 = vmatprep.subr.bf16.mxu0 0
        %1963 = vmatpush1.bf16.msra.mxu0 0
        %1964 = vmatprep.subr.bf16.mxu0 0
        %1965 = vmatpush1.bf16.msra.mxu0 0
        %1966 = vmatprep.subr.bf16.mxu0 0
        %1967 = vmatpush1.bf16.msra.mxu0 0
        %1968 = vmatprep.mubr.bf16.mxu0 0
        %1969 = vmatmul.mubr.bf16.gmra.mrb[0].mxu0 %v1931
        %v1970 = vpop.f32.mrb[0].mxu0
        %v1971 = vadd.f32 0.0, %v1970
        %v1972 = vpop.f32.mrb[0].mxu0
        %v1973 = vpop.f32.mrb[0].mxu0
        %v1974 = vpop.f32.mrb[0].mxu0
        %1975 = vdwg.mxu0
        %v1977 = vsel %vm1556, %v1652, 0
        %v1980 = vsel %vm1656, %v1091, 0
        %1982 = vmatprep.subr.bf16.mxu0 0
        %1983 = vmatpush1.bf16.msra.mxu0 %v1980
        %1984 = vmatprep.subr.bf16.mxu0 0
        %1985 = vmatpush1.bf16.msra.mxu0 0
        %1986 = vmatprep.subr.bf16.mxu0 0
        %1987 = vmatpush1.bf16.msra.mxu0 0
        %1988 = vmatprep.subr.bf16.mxu0 0
        %1989 = vmatpush1.bf16.msra.mxu0 0
        %1990 = vmatprep.subr.bf16.mxu0 0
        %1991 = vmatpush1.bf16.msra.mxu0 0
        %1992 = vmatprep.subr.bf16.mxu0 0
        %1993 = vmatpush1.bf16.msra.mxu0 0
        %1994 = vmatprep.subr.bf16.mxu0 0
        %1995 = vmatpush1.bf16.msra.mxu0 0
        %1996 = vmatprep.subr.bf16.mxu0 0
        %1997 = vmatpush1.bf16.msra.mxu0 0
        %1998 = vmatprep.subr.bf16.mxu0 0
        %1999 = vmatpush1.bf16.msra.mxu0 0
        %2000 = vmatprep.subr.bf16.mxu0 0
        %2001 = vmatpush1.bf16.msra.mxu0 0
        %2002 = vmatprep.subr.bf16.mxu0 0
        %2003 = vmatpush1.bf16.msra.mxu0 0
        %2004 = vmatprep.subr.bf16.mxu0 0
        %2005 = vmatpush1.bf16.msra.mxu0 0
        %2006 = vmatprep.subr.bf16.mxu0 0
        %2007 = vmatpush1.bf16.msra.mxu0 0
        %2008 = vmatprep.subr.bf16.mxu0 0
        %2009 = vmatpush1.bf16.msra.mxu0 0
        %2010 = vmatprep.subr.bf16.mxu0 0
        %2011 = vmatpush1.bf16.msra.mxu0 0
        %2012 = vmatprep.subr.bf16.mxu0 0
        %2013 = vmatpush1.bf16.msra.mxu0 0
        %2014 = vmatprep.mubr.bf16.mxu0 0
        %2015 = vmatmul.mubr.bf16.gmra.mrb[0].mxu0 %v1977
        %v2016 = vpop.f32.mrb[0].mxu0
        %v2017 = vadd.f32 0.0, %v2016
        %v2018 = vpop.f32.mrb[0].mxu0
        %v2019 = vpop.f32.mrb[0].mxu0
        %v2020 = vpop.f32.mrb[0].mxu0
        %2021 = vdwg.mxu0
        %v2022 = vpack.c.bf16 %v1741, %v1695
        %v2023 = vpack.c.bf16 %v1833, %v1787
        %v2024 = vpack.c.bf16 %v1925, %v1879
        %v2025 = vpack.c.bf16 %v2017, %v1971
        %v2026 = vld [vmem:[#allocation7] sm:$0xf]
        %v2027 = vld [vmem:[#allocation7 + $0x4] sm:$0xf]
        %v2028 = vld [vmem:[#allocation7 + $0x8] sm:$0xf]
        %v2029 = vld [vmem:[#allocation7 + $0xc] sm:$0xf]
        %v2030 = vld [vmem:[#allocation7 + $0x10] sm:$0xf]
        %v2031 = vld [vmem:[#allocation7 + $0x14] sm:$0xf]
        %v2032 = vld [vmem:[#allocation7 + $0x18] sm:$0xf]
        %v2033 = vld [vmem:[#allocation7 + $0x1c] sm:$0xf]
        %v2034 = vld [vmem:[#allocation7 + $0x20] sm:$0xf]
        %v2035 = vld [vmem:[#allocation7 + $0x24] sm:$0xf]
        %v2036 = vld [vmem:[#allocation7 + $0x28] sm:$0xf]
        %v2037 = vld [vmem:[#allocation7 + $0x2c] sm:$0xf]
        %v2038 = vld [vmem:[#allocation7 + $0x30] sm:$0xf]
        %v2039 = vld [vmem:[#allocation7 + $0x34] sm:$0xf]
        %v2040 = vld [vmem:[#allocation7 + $0x38] sm:$0xf]
        %v2041 = vld [vmem:[#allocation7 + $0x3c] sm:$0xf]
        %v2058 = vunpack.c.l.b16 %v2026
        %v2059 = vunpack.c.l.b16 %v2027
        %v2060 = vunpack.c.l.b16 %v2028
        %v2061 = vunpack.c.l.b16 %v2029
        %v2062 = vunpack.c.l.b16 %v2030
        %v2063 = vunpack.c.l.b16 %v2031
        %v2064 = vunpack.c.l.b16 %v2032
        %v2065 = vunpack.c.l.b16 %v2033
        %v2066 = vunpack.c.l.b16 %v2034
        %v2067 = vunpack.c.l.b16 %v2035
        %v2068 = vunpack.c.l.b16 %v2036
        %v2069 = vunpack.c.l.b16 %v2037
        %v2070 = vunpack.c.l.b16 %v2038
        %v2071 = vunpack.c.l.b16 %v2039
        %v2072 = vunpack.c.l.b16 %v2040
        %v2073 = vunpack.c.l.b16 %v2041
        %v2074 = vpack.c.b16 %v2059, %v2058
        %v2075 = vpack.c.b16 %v2061, %v2060
        %v2076 = vpack.c.b16 %v2063, %v2062
        %v2077 = vpack.c.b16 %v2065, %v2064
        %v2078 = vpack.c.b16 %v2067, %v2066
        %v2079 = vpack.c.b16 %v2069, %v2068
        %v2080 = vpack.c.b16 %v2071, %v2070
        %v2081 = vpack.c.b16 %v2073, %v2072
        %2090 = vmatprep.subr.bf16.mxu0 0
        %2091 = vmatpush1.bf16.msra.mxu0 %v2074
        %2092 = vmatprep.subr.bf16.mxu0 0
        %2093 = vmatpush1.bf16.msra.mxu0 %v2075
        %2094 = vmatprep.subr.bf16.mxu0 0
        %2095 = vmatpush1.bf16.msra.mxu0 %v2076
        %2096 = vmatprep.subr.bf16.mxu0 0
        %2097 = vmatpush1.bf16.msra.mxu0 %v2077
        %2098 = vmatprep.subr.bf16.mxu0 0
        %2099 = vmatpush1.bf16.msra.mxu0 %v2078
        %2100 = vmatprep.subr.bf16.mxu0 0
        %2101 = vmatpush1.bf16.msra.mxu0 %v2079
        %2102 = vmatprep.subr.bf16.mxu0 0
        %2103 = vmatpush1.bf16.msra.mxu0 %v2080
        %2104 = vmatprep.subr.bf16.mxu0 0
        %2105 = vmatpush1.bf16.msra.mxu0 %v2081
        %2106 = vmatprep.subr.bf16.mxu0 0
        %2107 = vmatpush1.bf16.msra.mxu0 0
        %2108 = vmatprep.subr.bf16.mxu0 0
        %2109 = vmatpush1.bf16.msra.mxu0 0
        %2110 = vmatprep.subr.bf16.mxu0 0
        %2111 = vmatpush1.bf16.msra.mxu0 0
        %2112 = vmatprep.subr.bf16.mxu0 0
        %2113 = vmatpush1.bf16.msra.mxu0 0
        %2114 = vmatprep.subr.bf16.mxu0 0
        %2115 = vmatpush1.bf16.msra.mxu0 0
        %2116 = vmatprep.subr.bf16.mxu0 0
        %2117 = vmatpush1.bf16.msra.mxu0 0
        %2118 = vmatprep.subr.bf16.mxu0 0
        %2119 = vmatpush1.bf16.msra.mxu0 0
        %2120 = vmatprep.subr.bf16.mxu0 0
        %2121 = vmatpush1.bf16.msra.mxu0 0
        %2122 = vmatprep.mubr.bf16.mxu0 0
        %2123 = vmatmul.mubr.bf16.gmra.mrb[0].mxu0 %v2022
        %v2124 = vpop.f32.mrb[0].mxu0
        %v2125 = vadd.f32 0.0, %v2124
        %v2126 = vpop.f32.mrb[0].mxu0
        %v2127 = vpop.f32.mrb[0].mxu0
        %v2128 = vadd.f32 0.0, %v2127
        %v2129 = vpop.f32.mrb[0].mxu0
        %2130 = vmatprep.mubr.bf16.mxu0 0
        %2131 = vmatmul.mubr.bf16.gmra.mrb[0].mxu0 %v2023
        %v2132 = vpop.f32.mrb[0].mxu0
        %v2133 = vadd.f32 0.0, %v2132
        %v2134 = vpop.f32.mrb[0].mxu0
        %v2135 = vpop.f32.mrb[0].mxu0
        %v2136 = vadd.f32 0.0, %v2135
        %v2137 = vpop.f32.mrb[0].mxu0
        %2138 = vmatprep.mubr.bf16.mxu0 0
        %2139 = vmatmul.mubr.bf16.gmra.mrb[0].mxu0 %v2024
        %v2140 = vpop.f32.mrb[0].mxu0
        %v2141 = vadd.f32 0.0, %v2140
        %v2142 = vpop.f32.mrb[0].mxu0
        %v2143 = vpop.f32.mrb[0].mxu0
        %v2144 = vadd.f32 0.0, %v2143
        %v2145 = vpop.f32.mrb[0].mxu0
        %2146 = vmatprep.mubr.bf16.mxu0 0
        %2147 = vmatmul.mubr.bf16.gmra.mrb[0].mxu0 %v2025
        %v2148 = vpop.f32.mrb[0].mxu0
        %v2149 = vadd.f32 0.0, %v2148
        %v2150 = vpop.f32.mrb[0].mxu0
        %v2151 = vpop.f32.mrb[0].mxu0
        %v2152 = vadd.f32 0.0, %v2151
        %v2153 = vpop.f32.mrb[0].mxu0
        %2154 = vdwg.mxu0
        %v2155 = vadd.f32 %v664, %v2125
        %v2156 = vadd.f32 %v667, %v2128
        %v2157 = vadd.f32 %v672, %v2133
        %v2158 = vadd.f32 %v675, %v2136
        %v2159 = vadd.f32 %v680, %v2141
        %v2160 = vadd.f32 %v683, %v2144
        %v2161 = vadd.f32 %v688, %v2149
        %v2162 = vadd.f32 %v691, %v2152
        %v2163 = vld [vmem:[%s8] sm:$0x1]
        %v2164 = vmul.f32 %v2155, %v2155
        %v2165 = vmul.f32 %v2156, %v2156
        %v2166 = vmul.f32 %v2157, %v2157
        %v2167 = vmul.f32 %v2158, %v2158
        %v2168 = vmul.f32 %v2159, %v2159
        %v2169 = vmul.f32 %v2160, %v2160
        %v2170 = vmul.f32 %v2161, %v2161
        %v2171 = vmul.f32 %v2162, %v2162
        %2172 = vadd.xlane.f32.xlu0 %v2164
        %v2173 = vpop.xlane.xlu0 %2172
        %2174 = vadd.xlane.f32.xlu0 %v2165
        %v2175 = vpop.xlane.xlu0 %2174
        %2176 = vadd.xlane.f32.xlu0 %v2166
        %v2177 = vpop.xlane.xlu0 %2176
        %2178 = vadd.xlane.f32.xlu0 %v2167
        %v2179 = vpop.xlane.xlu0 %2178
        %2180 = vadd.xlane.f32.xlu0 %v2168
        %v2181 = vpop.xlane.xlu0 %2180
        %2182 = vadd.xlane.f32.xlu0 %v2169
        %v2183 = vpop.xlane.xlu0 %2182
        %2184 = vadd.xlane.f32.xlu0 %v2170
        %v2185 = vpop.xlane.xlu0 %2184
        %2186 = vadd.xlane.f32.xlu0 %v2171
        %v2187 = vpop.xlane.xlu0 %2186
        %v2188 = vmul.f32 %v2173, %v719
        %v2189 = vmul.f32 %v2175, %v719
        %v2190 = vmul.f32 %v2177, %v719
        %v2191 = vmul.f32 %v2179, %v719
        %v2192 = vmul.f32 %v2181, %v719
        %v2193 = vmul.f32 %v2183, %v719
        %v2194 = vmul.f32 %v2185, %v719
        %v2195 = vmul.f32 %v2187, %v719
        %v2196 = vadd.f32 %v2188, 1e-06
        %v2197 = vadd.f32 %v2189, 1e-06
        %v2198 = vadd.f32 %v2190, 1e-06
        %v2199 = vadd.f32 %v2191, 1e-06
        %v2200 = vadd.f32 %v2192, 1e-06
        %v2201 = vadd.f32 %v2193, 1e-06
        %v2202 = vadd.f32 %v2194, 1e-06
        %v2203 = vadd.f32 %v2195, 1e-06
        %v2204 = vrsqrt.pop %v2196
        %v2205 = vrsqrt.pop %v2197
        %v2206 = vrsqrt.pop %v2198
        %v2207 = vrsqrt.pop %v2199
        %v2208 = vrsqrt.pop %v2200
        %v2209 = vrsqrt.pop %v2201
        %v2210 = vrsqrt.pop %v2202
        %v2211 = vrsqrt.pop %v2203
        %v2212 = vmul.f32 %v2155, %v2204
        %v2213 = vmul.f32 %v2156, %v2205
        %v2214 = vmul.f32 %v2157, %v2206
        %v2215 = vmul.f32 %v2158, %v2207
        %v2216 = vmul.f32 %v2159, %v2208
        %v2217 = vmul.f32 %v2160, %v2209
        %v2218 = vmul.f32 %v2161, %v2210
        %v2219 = vmul.f32 %v2162, %v2211
        %v2221 = vlaneseq
        %v2222 = vshrl.u32 %v2221, 7
        %v2223 = vsub.s32 0, %v2222
        %v2224 = vrot.slane %v2163, %v2223
        %v2226 = vmul.f32 %v2212, %v2224
        %v2227 = vmul.f32 %v2213, %v2224
        %v2228 = vmul.f32 %v2214, %v2224
        %v2229 = vmul.f32 %v2215, %v2224
        %v2230 = vmul.f32 %v2216, %v2224
        %v2231 = vmul.f32 %v2217, %v2224
        %v2232 = vmul.f32 %v2218, %v2224
        %v2233 = vmul.f32 %v2219, %v2224
        %v2234 = vpack.c.bf16 %v2227, %v2226
        %v2235 = vpack.c.bf16 %v2229, %v2228
        %v2236 = vpack.c.bf16 %v2231, %v2230
        %v2237 = vpack.c.bf16 %v2233, %v2232
        %v2238 = vld [vmem:[#allocation8] sm:$0xff]
        %v2239 = vld [vmem:[#allocation8 + $0x8] sm:$0xff]
        %v2240 = vld [vmem:[#allocation8 + $0x10] sm:$0xff]
        %v2241 = vld [vmem:[#allocation8 + $0x18] sm:$0xff]
        %v2242 = vld [vmem:[#allocation8 + $0x20] sm:$0xff]
        %v2243 = vld [vmem:[#allocation8 + $0x28] sm:$0xff]
        %v2244 = vld [vmem:[#allocation8 + $0x30] sm:$0xff]
        %v2245 = vld [vmem:[#allocation8 + $0x38] sm:$0xff]
        %v2246 = vld [vmem:[#allocation8 + $0x40] sm:$0xff]
        %v2247 = vld [vmem:[#allocation8 + $0x48] sm:$0xff]
        %v2248 = vld [vmem:[#allocation8 + $0x50] sm:$0xff]
        %v2249 = vld [vmem:[#allocation8 + $0x58] sm:$0xff]
        %v2250 = vld [vmem:[#allocation8 + $0x60] sm:$0xff]
        %v2251 = vld [vmem:[#allocation8 + $0x68] sm:$0xff]
        %v2252 = vld [vmem:[#allocation8 + $0x70] sm:$0xff]
        %v2253 = vld [vmem:[#allocation8 + $0x78] sm:$0xff]
        %v2254 = vld [vmem:[#allocation8 + $0x80] sm:$0xff]
        %v2255 = vld [vmem:[#allocation8 + $0x88] sm:$0xff]
        %v2256 = vld [vmem:[#allocation8 + $0x90] sm:$0xff]
        %v2257 = vld [vmem:[#allocation8 + $0x98] sm:$0xff]
        %v2258 = vld [vmem:[#allocation8 + $0xa0] sm:$0xff]
        %v2259 = vld [vmem:[#allocation8 + $0xa8] sm:$0xff]
        %v2260 = vld [vmem:[#allocation8 + $0xb0] sm:$0xff]
        %v2261 = vld [vmem:[#allocation8 + $0xb8] sm:$0xff]
        %v2262 = vld [vmem:[#allocation8 + $0xc0] sm:$0xff]
        %v2263 = vld [vmem:[#allocation8 + $0xc8] sm:$0xff]
        %v2264 = vld [vmem:[#allocation8 + $0xd0] sm:$0xff]
        %v2265 = vld [vmem:[#allocation8 + $0xd8] sm:$0xff]
        %v2266 = vld [vmem:[#allocation8 + $0xe0] sm:$0xff]
        %v2267 = vld [vmem:[#allocation8 + $0xe8] sm:$0xff]
        %v2268 = vld [vmem:[#allocation8 + $0xf0] sm:$0xff]
        %v2269 = vld [vmem:[#allocation8 + $0xf8] sm:$0xff]
        %v2302 = vunpack.c.l.b16 %v2238
        %v2303 = vunpack.c.h.b16 %v2238
        %v2304 = vunpack.c.l.b16 %v2239
        %v2305 = vunpack.c.h.b16 %v2239
        %v2306 = vunpack.c.l.b16 %v2240
        %v2307 = vunpack.c.h.b16 %v2240
        %v2308 = vunpack.c.l.b16 %v2241
        %v2309 = vunpack.c.h.b16 %v2241
        %v2310 = vunpack.c.l.b16 %v2242
        %v2311 = vunpack.c.h.b16 %v2242
        %v2312 = vunpack.c.l.b16 %v2243
        %v2313 = vunpack.c.h.b16 %v2243
        %v2314 = vunpack.c.l.b16 %v2244
        %v2315 = vunpack.c.h.b16 %v2244
        %v2316 = vunpack.c.l.b16 %v2245
        %v2317 = vunpack.c.h.b16 %v2245
        %v2318 = vunpack.c.l.b16 %v2246
        %v2319 = vunpack.c.h.b16 %v2246
        %v2320 = vunpack.c.l.b16 %v2247
        %v2321 = vunpack.c.h.b16 %v2247
        %v2322 = vunpack.c.l.b16 %v2248
        %v2323 = vunpack.c.h.b16 %v2248
        %v2324 = vunpack.c.l.b16 %v2249
        %v2325 = vunpack.c.h.b16 %v2249
        %v2326 = vunpack.c.l.b16 %v2250
        %v2327 = vunpack.c.h.b16 %v2250
        %v2328 = vunpack.c.l.b16 %v2251
        %v2329 = vunpack.c.h.b16 %v2251
        %v2330 = vunpack.c.l.b16 %v2252
        %v2331 = vunpack.c.h.b16 %v2252
        %v2332 = vunpack.c.l.b16 %v2253
        %v2333 = vunpack.c.h.b16 %v2253
        %v2334 = vunpack.c.l.b16 %v2254
        %v2335 = vunpack.c.h.b16 %v2254
        %v2336 = vunpack.c.l.b16 %v2255
        %v2337 = vunpack.c.h.b16 %v2255
        %v2338 = vunpack.c.l.b16 %v2256
        %v2339 = vunpack.c.h.b16 %v2256
        %v2340 = vunpack.c.l.b16 %v2257
        %v2341 = vunpack.c.h.b16 %v2257
        %v2342 = vunpack.c.l.b16 %v2258
        %v2343 = vunpack.c.h.b16 %v2258
        %v2344 = vunpack.c.l.b16 %v2259
        %v2345 = vunpack.c.h.b16 %v2259
        %v2346 = vunpack.c.l.b16 %v2260
        %v2347 = vunpack.c.h.b16 %v2260
        %v2348 = vunpack.c.l.b16 %v2261
        %v2349 = vunpack.c.h.b16 %v2261
        %v2350 = vunpack.c.l.b16 %v2262
        %v2351 = vunpack.c.h.b16 %v2262
        %v2352 = vunpack.c.l.b16 %v2263
        %v2353 = vunpack.c.h.b16 %v2263
        %v2354 = vunpack.c.l.b16 %v2264
        %v2355 = vunpack.c.h.b16 %v2264
        %v2356 = vunpack.c.l.b16 %v2265
        %v2357 = vunpack.c.h.b16 %v2265
        %v2358 = vunpack.c.l.b16 %v2266
        %v2359 = vunpack.c.h.b16 %v2266
        %v2360 = vunpack.c.l.b16 %v2267
        %v2361 = vunpack.c.h.b16 %v2267
        %v2362 = vunpack.c.l.b16 %v2268
        %v2363 = vunpack.c.h.b16 %v2268
        %v2364 = vunpack.c.l.b16 %v2269
        %v2365 = vunpack.c.h.b16 %v2269
        %v2366 = vpack.c.b16 %v2306, %v2302
        %v2367 = vpack.c.b16 %v2307, %v2303
        %v2368 = vpack.c.b16 %v2308, %v2304
        %v2369 = vpack.c.b16 %v2309, %v2305
        %v2370 = vpack.c.b16 %v2314, %v2310
        %v2371 = vpack.c.b16 %v2315, %v2311
        %v2372 = vpack.c.b16 %v2316, %v2312
        %v2373 = vpack.c.b16 %v2317, %v2313
        %v2374 = vpack.c.b16 %v2322, %v2318
        %v2375 = vpack.c.b16 %v2323, %v2319
        %v2376 = vpack.c.b16 %v2324, %v2320
        %v2377 = vpack.c.b16 %v2325, %v2321
        %v2378 = vpack.c.b16 %v2330, %v2326
        %v2379 = vpack.c.b16 %v2331, %v2327
        %v2380 = vpack.c.b16 %v2332, %v2328
        %v2381 = vpack.c.b16 %v2333, %v2329
        %v2382 = vpack.c.b16 %v2338, %v2334
        %v2383 = vpack.c.b16 %v2339, %v2335
        %v2384 = vpack.c.b16 %v2340, %v2336
        %v2385 = vpack.c.b16 %v2341, %v2337
        %v2386 = vpack.c.b16 %v2346, %v2342
        %v2387 = vpack.c.b16 %v2347, %v2343
        %v2388 = vpack.c.b16 %v2348, %v2344
        %v2389 = vpack.c.b16 %v2349, %v2345
        %v2390 = vpack.c.b16 %v2354, %v2350
        %v2391 = vpack.c.b16 %v2355, %v2351
        %v2392 = vpack.c.b16 %v2356, %v2352
        %v2393 = vpack.c.b16 %v2357, %v2353
        %v2394 = vpack.c.b16 %v2362, %v2358
        %v2395 = vpack.c.b16 %v2363, %v2359
        %v2396 = vpack.c.b16 %v2364, %v2360
        %v2397 = vpack.c.b16 %v2365, %v2361
        %2430 = vmatprep.subr.bf16.mxu0 %v2367
        %2431 = vmatpush1.bf16.msra.mxu0 %v2366
        %2432 = vmatprep.subr.bf16.mxu0 %v2371
        %2433 = vmatpush1.bf16.msra.mxu0 %v2370
        %2434 = vmatprep.subr.bf16.mxu0 %v2375
        %2435 = vmatpush1.bf16.msra.mxu0 %v2374
        %2436 = vmatprep.subr.bf16.mxu0 %v2379
        %2437 = vmatpush1.bf16.msra.mxu0 %v2378
        %2438 = vmatprep.subr.bf16.mxu0 %v2383
        %2439 = vmatpush1.bf16.msra.mxu0 %v2382
        %2440 = vmatprep.subr.bf16.mxu0 %v2387
        %2441 = vmatpush1.bf16.msra.mxu0 %v2386
        %2442 = vmatprep.subr.bf16.mxu0 %v2391
        %2443 = vmatpush1.bf16.msra.mxu0 %v2390
        %2444 = vmatprep.subr.bf16.mxu0 %v2395
        %2445 = vmatpush1.bf16.msra.mxu0 %v2394
        %2446 = vmatprep.subr.bf16.mxu0 0
        %2447 = vmatpush1.bf16.msra.mxu0 0
        %2448 = vmatprep.subr.bf16.mxu0 0
        %2449 = vmatpush1.bf16.msra.mxu0 0
        %2450 = vmatprep.subr.bf16.mxu0 0
        %2451 = vmatpush1.bf16.msra.mxu0 0
        %2452 = vmatprep.subr.bf16.mxu0 0
        %2453 = vmatpush1.bf16.msra.mxu0 0
        %2454 = vmatprep.subr.bf16.mxu0 0
        %2455 = vmatpush1.bf16.msra.mxu0 0
        %2456 = vmatprep.subr.bf16.mxu0 0
        %2457 = vmatpush1.bf16.msra.mxu0 0
        %2458 = vmatprep.subr.bf16.mxu0 0
        %2459 = vmatpush1.bf16.msra.mxu0 0
        %2460 = vmatprep.subr.bf16.mxu0 0
        %2461 = vmatpush1.bf16.msra.mxu0 0
        %2462 = vmatprep.mubr.bf16.mxu0 0
        %2463 = vmatmul.mubr.bf16.gmra.mrb[0].mxu0 %v2234
        %v2464 = vpop.f32.mrb[0].mxu0
        %v2465 = vadd.f32 0.0, %v2464
        %v2466 = vpop.f32.mrb[0].mxu0
        %v2467 = vadd.f32 0.0, %v2466
        %v2468 = vpop.f32.mrb[0].mxu0
        %v2469 = vadd.f32 0.0, %v2468
        %v2470 = vpop.f32.mrb[0].mxu0
        %v2471 = vadd.f32 0.0, %v2470
        %2472 = vmatprep.mubr.bf16.mxu0 0
        %2473 = vmatmul.mubr.bf16.gmra.mrb[0].mxu0 %v2235
        %v2474 = vpop.f32.mrb[0].mxu0
        %v2475 = vadd.f32 0.0, %v2474
        %v2476 = vpop.f32.mrb[0].mxu0
        %v2477 = vadd.f32 0.0, %v2476
        %v2478 = vpop.f32.mrb[0].mxu0
        %v2479 = vadd.f32 0.0, %v2478
        %v2480 = vpop.f32.mrb[0].mxu0
        %v2481 = vadd.f32 0.0, %v2480
        %2482 = vmatprep.mubr.bf16.mxu0 0
        %2483 = vmatmul.mubr.bf16.gmra.mrb[0].mxu0 %v2236
        %v2484 = vpop.f32.mrb[0].mxu0
        %v2485 = vadd.f32 0.0, %v2484
        %v2486 = vpop.f32.mrb[0].mxu0
        %v2487 = vadd.f32 0.0, %v2486
        %v2488 = vpop.f32.mrb[0].mxu0
        %v2489 = vadd.f32 0.0, %v2488
        %v2490 = vpop.f32.mrb[0].mxu0
        %v2491 = vadd.f32 0.0, %v2490
        %2492 = vmatprep.mubr.bf16.mxu0 0
        %2493 = vmatmul.mubr.bf16.gmra.mrb[0].mxu0 %v2237
        %v2494 = vpop.f32.mrb[0].mxu0
        %v2495 = vadd.f32 0.0, %v2494
        %v2496 = vpop.f32.mrb[0].mxu0
        %v2497 = vadd.f32 0.0, %v2496
        %v2498 = vpop.f32.mrb[0].mxu0
        %v2499 = vadd.f32 0.0, %v2498
        %v2500 = vpop.f32.mrb[0].mxu0
        %v2501 = vadd.f32 0.0, %v2500
        %2502 = vdwg.mxu0
        %2503 = vmatprep.subr.bf16.mxu0 %v2369
        %2504 = vmatpush1.bf16.msra.mxu0 %v2368
        %2505 = vmatprep.subr.bf16.mxu0 %v2373
        %2506 = vmatpush1.bf16.msra.mxu0 %v2372
        %2507 = vmatprep.subr.bf16.mxu0 %v2377
        %2508 = vmatpush1.bf16.msra.mxu0 %v2376
        %2509 = vmatprep.subr.bf16.mxu0 %v2381
        %2510 = vmatpush1.bf16.msra.mxu0 %v2380
        %2511 = vmatprep.subr.bf16.mxu0 %v2385
        %2512 = vmatpush1.bf16.msra.mxu0 %v2384
        %2513 = vmatprep.subr.bf16.mxu0 %v2389
        %2514 = vmatpush1.bf16.msra.mxu0 %v2388
        %2515 = vmatprep.subr.bf16.mxu0 %v2393
        %2516 = vmatpush1.bf16.msra.mxu0 %v2392
        %2517 = vmatprep.subr.bf16.mxu0 %v2397
        %2518 = vmatpush1.bf16.msra.mxu0 %v2396
        %2519 = vmatprep.subr.bf16.mxu0 0
        %2520 = vmatpush1.bf16.msra.mxu0 0
        %2521 = vmatprep.subr.bf16.mxu0 0
        %2522 = vmatpush1.bf16.msra.mxu0 0
        %2523 = vmatprep.subr.bf16.mxu0 0
        %2524 = vmatpush1.bf16.msra.mxu0 0
        %2525 = vmatprep.subr.bf16.mxu0 0
        %2526 = vmatpush1.bf16.msra.mxu0 0
        %2527 = vmatprep.subr.bf16.mxu0 0
        %2528 = vmatpush1.bf16.msra.mxu0 0
        %2529 = vmatprep.subr.bf16.mxu0 0
        %2530 = vmatpush1.bf16.msra.mxu0 0
        %2531 = vmatprep.subr.bf16.mxu0 0
        %2532 = vmatpush1.bf16.msra.mxu0 0
        %2533 = vmatprep.subr.bf16.mxu0 0
        %2534 = vmatpush1.bf16.msra.mxu0 0
        %2535 = vmatprep.mubr.bf16.mxu0 0
        %2536 = vmatmul.mubr.bf16.gmra.mrb[0].mxu0 %v2234
        %v2537 = vpop.f32.mrb[0].mxu0
        %v2538 = vadd.f32 0.0, %v2537
        %v2539 = vpop.f32.mrb[0].mxu0
        %v2540 = vadd.f32 0.0, %v2539
        %v2541 = vpop.f32.mrb[0].mxu0
        %v2542 = vadd.f32 0.0, %v2541
        %v2543 = vpop.f32.mrb[0].mxu0
        %v2544 = vadd.f32 0.0, %v2543
        %2545 = vmatprep.mubr.bf16.mxu0 0
        %2546 = vmatmul.mubr.bf16.gmra.mrb[0].mxu0 %v2235
        %v2547 = vpop.f32.mrb[0].mxu0
        %v2548 = vadd.f32 0.0, %v2547
        %v2549 = vpop.f32.mrb[0].mxu0
        %v2550 = vadd.f32 0.0, %v2549
        %v2551 = vpop.f32.mrb[0].mxu0
        %v2552 = vadd.f32 0.0, %v2551
        %v2553 = vpop.f32.mrb[0].mxu0
        %v2554 = vadd.f32 0.0, %v2553
        %2555 = vmatprep.mubr.bf16.mxu0 0
        %2556 = vmatmul.mubr.bf16.gmra.mrb[0].mxu0 %v2236
        %v2557 = vpop.f32.mrb[0].mxu0
        %v2558 = vadd.f32 0.0, %v2557
        %v2559 = vpop.f32.mrb[0].mxu0
        %v2560 = vadd.f32 0.0, %v2559
        %v2561 = vpop.f32.mrb[0].mxu0
        %v2562 = vadd.f32 0.0, %v2561
        %v2563 = vpop.f32.mrb[0].mxu0
        %v2564 = vadd.f32 0.0, %v2563
        %2565 = vmatprep.mubr.bf16.mxu0 0
        %2566 = vmatmul.mubr.bf16.gmra.mrb[0].mxu0 %v2237
        %v2567 = vpop.f32.mrb[0].mxu0
        %v2568 = vadd.f32 0.0, %v2567
        %v2569 = vpop.f32.mrb[0].mxu0
        %v2570 = vadd.f32 0.0, %v2569
        %v2571 = vpop.f32.mrb[0].mxu0
        %v2572 = vadd.f32 0.0, %v2571
        %v2573 = vpop.f32.mrb[0].mxu0
        %v2574 = vadd.f32 0.0, %v2573
        %2575 = vdwg.mxu0
        %v2576 = vxor.u32 %v2465, 2147483648
        %v2577 = vxor.u32 %v2467, 2147483648
        %v2578 = vxor.u32 %v2469, 2147483648
        %v2579 = vxor.u32 %v2471, 2147483648
        %v2580 = vxor.u32 %v2475, 2147483648
        %v2581 = vxor.u32 %v2477, 2147483648
        %v2582 = vxor.u32 %v2479, 2147483648
        %v2583 = vxor.u32 %v2481, 2147483648
        %v2584 = vxor.u32 %v2485, 2147483648
        %v2585 = vxor.u32 %v2487, 2147483648
        %v2586 = vxor.u32 %v2489, 2147483648
        %v2587 = vxor.u32 %v2491, 2147483648
        %v2588 = vxor.u32 %v2495, 2147483648
        %v2589 = vxor.u32 %v2497, 2147483648
        %v2590 = vxor.u32 %v2499, 2147483648
        %v2591 = vxor.u32 %v2501, 2147483648
        %v2592 = vmul.f32 %v2576, 1.442695
        %v2593 = vpow.pop %v2592
        %v2594 = vmul.f32 %v2577, 1.442695
        %v2595 = vpow.pop %v2594
        %v2596 = vmul.f32 %v2578, 1.442695
        %v2597 = vpow.pop %v2596
        %v2598 = vmul.f32 %v2579, 1.442695
        %v2599 = vpow.pop %v2598
        %v2600 = vmul.f32 %v2580, 1.442695
        %v2601 = vpow.pop %v2600
        %v2602 = vmul.f32 %v2581, 1.442695
        %v2603 = vpow.pop %v2602
        %v2604 = vmul.f32 %v2582, 1.442695
        %v2605 = vpow.pop %v2604
        %v2606 = vmul.f32 %v2583, 1.442695
        %v2607 = vpow.pop %v2606
        %v2608 = vmul.f32 %v2584, 1.442695
        %v2609 = vpow.pop %v2608
        %v2610 = vmul.f32 %v2585, 1.442695
        %v2611 = vpow.pop %v2610
        %v2612 = vmul.f32 %v2586, 1.442695
        %v2613 = vpow.pop %v2612
        %v2614 = vmul.f32 %v2587, 1.442695
        %v2615 = vpow.pop %v2614
        %v2616 = vmul.f32 %v2588, 1.442695
        %v2617 = vpow.pop %v2616
        %v2618 = vmul.f32 %v2589, 1.442695
        %v2619 = vpow.pop %v2618
        %v2620 = vmul.f32 %v2590, 1.442695
        %v2621 = vpow.pop %v2620
        %v2622 = vmul.f32 %v2591, 1.442695
        %v2623 = vpow.pop %v2622
        %v2624 = vadd.f32 %v2593, 1.0
        %v2625 = vadd.f32 %v2595, 1.0
        %v2626 = vadd.f32 %v2597, 1.0
        %v2627 = vadd.f32 %v2599, 1.0
        %v2628 = vadd.f32 %v2601, 1.0
        %v2629 = vadd.f32 %v2603, 1.0
        %v2630 = vadd.f32 %v2605, 1.0
        %v2631 = vadd.f32 %v2607, 1.0
        %v2632 = vadd.f32 %v2609, 1.0
        %v2633 = vadd.f32 %v2611, 1.0
        %v2634 = vadd.f32 %v2613, 1.0
        %v2635 = vadd.f32 %v2615, 1.0
        %v2636 = vadd.f32 %v2617, 1.0
        %v2637 = vadd.f32 %v2619, 1.0
        %v2638 = vadd.f32 %v2621, 1.0
        %v2639 = vadd.f32 %v2623, 1.0
        %v2640 = vrcp.pop %v2624
        %v2641 = vmul.f32 1.0, %v2640
        %v2642 = vrcp.pop %v2625
        %v2643 = vmul.f32 1.0, %v2642
        %v2644 = vrcp.pop %v2626
        %v2645 = vmul.f32 1.0, %v2644
        %v2646 = vrcp.pop %v2627
        %v2647 = vmul.f32 1.0, %v2646
        %v2648 = vrcp.pop %v2628
        %v2649 = vmul.f32 1.0, %v2648
        %v2650 = vrcp.pop %v2629
        %v2651 = vmul.f32 1.0, %v2650
        %v2652 = vrcp.pop %v2630
        %v2653 = vmul.f32 1.0, %v2652
        %v2654 = vrcp.pop %v2631
        %v2655 = vmul.f32 1.0, %v2654
        %v2656 = vrcp.pop %v2632
        %v2657 = vmul.f32 1.0, %v2656
        %v2658 = vrcp.pop %v2633
        %v2659 = vmul.f32 1.0, %v2658
        %v2660 = vrcp.pop %v2634
        %v2661 = vmul.f32 1.0, %v2660
        %v2662 = vrcp.pop %v2635
        %v2663 = vmul.f32 1.0, %v2662
        %v2664 = vrcp.pop %v2636
        %v2665 = vmul.f32 1.0, %v2664
        %v2666 = vrcp.pop %v2637
        %v2667 = vmul.f32 1.0, %v2666
        %v2668 = vrcp.pop %v2638
        %v2669 = vmul.f32 1.0, %v2668
        %v2670 = vrcp.pop %v2639
        %v2671 = vmul.f32 1.0, %v2670
        %v2672 = vmul.f32 %v2465, %v2641
        %v2673 = vmul.f32 %v2467, %v2643
        %v2674 = vmul.f32 %v2469, %v2645
        %v2675 = vmul.f32 %v2471, %v2647
        %v2676 = vmul.f32 %v2475, %v2649
        %v2677 = vmul.f32 %v2477, %v2651
        %v2678 = vmul.f32 %v2479, %v2653
        %v2679 = vmul.f32 %v2481, %v2655
        %v2680 = vmul.f32 %v2485, %v2657
        %v2681 = vmul.f32 %v2487, %v2659
        %v2682 = vmul.f32 %v2489, %v2661
        %v2683 = vmul.f32 %v2491, %v2663
        %v2684 = vmul.f32 %v2495, %v2665
        %v2685 = vmul.f32 %v2497, %v2667
        %v2686 = vmul.f32 %v2499, %v2669
        %v2687 = vmul.f32 %v2501, %v2671
        %v2688 = vmul.f32 %v2672, %v2538
        %v2689 = vmul.f32 %v2673, %v2540
        %v2690 = vmul.f32 %v2674, %v2542
        %v2691 = vmul.f32 %v2675, %v2544
        %v2692 = vmul.f32 %v2676, %v2548
        %v2693 = vmul.f32 %v2677, %v2550
        %v2694 = vmul.f32 %v2678, %v2552
        %v2695 = vmul.f32 %v2679, %v2554
        %v2696 = vmul.f32 %v2680, %v2558
        %v2697 = vmul.f32 %v2681, %v2560
        %v2698 = vmul.f32 %v2682, %v2562
        %v2699 = vmul.f32 %v2683, %v2564
        %v2700 = vmul.f32 %v2684, %v2568
        %v2701 = vmul.f32 %v2685, %v2570
        %v2702 = vmul.f32 %v2686, %v2572
        %v2703 = vmul.f32 %v2687, %v2574
        %v2704 = vpack.c.bf16 %v2690, %v2688
        %v2705 = vpack.c.bf16 %v2691, %v2689
        %v2706 = vpack.c.bf16 %v2694, %v2692
        %v2707 = vpack.c.bf16 %v2695, %v2693
        %v2708 = vpack.c.bf16 %v2698, %v2696
        %v2709 = vpack.c.bf16 %v2699, %v2697
        %v2710 = vpack.c.bf16 %v2702, %v2700
        %v2711 = vpack.c.bf16 %v2703, %v2701
        %v2712 = vld [vmem:[#allocation10] sm:$0xf]
        %v2713 = vld [vmem:[#allocation10 + $0x4] sm:$0xf]
        %v2714 = vld [vmem:[#allocation10 + $0x8] sm:$0xf]
        %v2715 = vld [vmem:[#allocation10 + $0xc] sm:$0xf]
        %v2716 = vld [vmem:[#allocation10 + $0x10] sm:$0xf]
        %v2717 = vld [vmem:[#allocation10 + $0x14] sm:$0xf]
        %v2718 = vld [vmem:[#allocation10 + $0x18] sm:$0xf]
        %v2719 = vld [vmem:[#allocation10 + $0x1c] sm:$0xf]
        %v2720 = vld [vmem:[#allocation10 + $0x20] sm:$0xf]
        %v2721 = vld [vmem:[#allocation10 + $0x24] sm:$0xf]
        %v2722 = vld [vmem:[#allocation10 + $0x28] sm:$0xf]
        %v2723 = vld [vmem:[#allocation10 + $0x2c] sm:$0xf]
        %v2724 = vld [vmem:[#allocation10 + $0x30] sm:$0xf]
        %v2725 = vld [vmem:[#allocation10 + $0x34] sm:$0xf]
        %v2726 = vld [vmem:[#allocation10 + $0x38] sm:$0xf]
        %v2727 = vld [vmem:[#allocation10 + $0x3c] sm:$0xf]
        %v2728 = vld [vmem:[#allocation10 + $0x40] sm:$0xf]
        %v2729 = vld [vmem:[#allocation10 + $0x44] sm:$0xf]
        %v2730 = vld [vmem:[#allocation10 + $0x48] sm:$0xf]
        %v2731 = vld [vmem:[#allocation10 + $0x4c] sm:$0xf]
        %v2732 = vld [vmem:[#allocation10 + $0x50] sm:$0xf]
        %v2733 = vld [vmem:[#allocation10 + $0x54] sm:$0xf]
        %v2734 = vld [vmem:[#allocation10 + $0x58] sm:$0xf]
        %v2735 = vld [vmem:[#allocation10 + $0x5c] sm:$0xf]
        %v2736 = vld [vmem:[#allocation10 + $0x60] sm:$0xf]
        %v2737 = vld [vmem:[#allocation10 + $0x64] sm:$0xf]
        %v2738 = vld [vmem:[#allocation10 + $0x68] sm:$0xf]
        %v2739 = vld [vmem:[#allocation10 + $0x6c] sm:$0xf]
        %v2740 = vld [vmem:[#allocation10 + $0x70] sm:$0xf]
        %v2741 = vld [vmem:[#allocation10 + $0x74] sm:$0xf]
        %v2742 = vld [vmem:[#allocation10 + $0x78] sm:$0xf]
        %v2743 = vld [vmem:[#allocation10 + $0x7c] sm:$0xf]
        %v2776 = vunpack.c.l.b16 %v2712
        %v2777 = vunpack.c.l.b16 %v2713
        %v2778 = vunpack.c.l.b16 %v2714
        %v2779 = vunpack.c.l.b16 %v2715
        %v2780 = vunpack.c.l.b16 %v2716
        %v2781 = vunpack.c.l.b16 %v2717
        %v2782 = vunpack.c.l.b16 %v2718
        %v2783 = vunpack.c.l.b16 %v2719
        %v2784 = vunpack.c.l.b16 %v2720
        %v2785 = vunpack.c.l.b16 %v2721
        %v2786 = vunpack.c.l.b16 %v2722
        %v2787 = vunpack.c.l.b16 %v2723
        %v2788 = vunpack.c.l.b16 %v2724
        %v2789 = vunpack.c.l.b16 %v2725
        %v2790 = vunpack.c.l.b16 %v2726
        %v2791 = vunpack.c.l.b16 %v2727
        %v2792 = vunpack.c.l.b16 %v2728
        %v2793 = vunpack.c.l.b16 %v2729
        %v2794 = vunpack.c.l.b16 %v2730
        %v2795 = vunpack.c.l.b16 %v2731
        %v2796 = vunpack.c.l.b16 %v2732
        %v2797 = vunpack.c.l.b16 %v2733
        %v2798 = vunpack.c.l.b16 %v2734
        %v2799 = vunpack.c.l.b16 %v2735
        %v2800 = vunpack.c.l.b16 %v2736
        %v2801 = vunpack.c.l.b16 %v2737
        %v2802 = vunpack.c.l.b16 %v2738
        %v2803 = vunpack.c.l.b16 %v2739
        %v2804 = vunpack.c.l.b16 %v2740
        %v2805 = vunpack.c.l.b16 %v2741
        %v2806 = vunpack.c.l.b16 %v2742
        %v2807 = vunpack.c.l.b16 %v2743
        %v2808 = vpack.c.b16 %v2777, %v2776
        %v2809 = vpack.c.b16 %v2779, %v2778
        %v2810 = vpack.c.b16 %v2781, %v2780
        %v2811 = vpack.c.b16 %v2783, %v2782
        %v2812 = vpack.c.b16 %v2785, %v2784
        %v2813 = vpack.c.b16 %v2787, %v2786
        %v2814 = vpack.c.b16 %v2789, %v2788
        %v2815 = vpack.c.b16 %v2791, %v2790
        %v2816 = vpack.c.b16 %v2793, %v2792
        %v2817 = vpack.c.b16 %v2795, %v2794
        %v2818 = vpack.c.b16 %v2797, %v2796
        %v2819 = vpack.c.b16 %v2799, %v2798
        %v2820 = vpack.c.b16 %v2801, %v2800
        %v2821 = vpack.c.b16 %v2803, %v2802
        %v2822 = vpack.c.b16 %v2805, %v2804
        %v2823 = vpack.c.b16 %v2807, %v2806
        %2840 = vmatprep.subr.bf16.mxu0 0
        %2841 = vmatpush1.bf16.msra.mxu0 %v2808
        %2842 = vmatprep.subr.bf16.mxu0 0
        %2843 = vmatpush1.bf16.msra.mxu0 %v2809
        %2844 = vmatprep.subr.bf16.mxu0 0
        %2845 = vmatpush1.bf16.msra.mxu0 %v2810
        %2846 = vmatprep.subr.bf16.mxu0 0
        %2847 = vmatpush1.bf16.msra.mxu0 %v2811
        %2848 = vmatprep.subr.bf16.mxu0 0
        %2849 = vmatpush1.bf16.msra.mxu0 %v2812
        %2850 = vmatprep.subr.bf16.mxu0 0
        %2851 = vmatpush1.bf16.msra.mxu0 %v2813
        %2852 = vmatprep.subr.bf16.mxu0 0
        %2853 = vmatpush1.bf16.msra.mxu0 %v2814
        %2854 = vmatprep.subr.bf16.mxu0 0
        %2855 = vmatpush1.bf16.msra.mxu0 %v2815
        %2856 = vmatprep.subr.bf16.mxu0 0
        %2857 = vmatpush1.bf16.msra.mxu0 %v2816
        %2858 = vmatprep.subr.bf16.mxu0 0
        %2859 = vmatpush1.bf16.msra.mxu0 %v2817
        %2860 = vmatprep.subr.bf16.mxu0 0
        %2861 = vmatpush1.bf16.msra.mxu0 %v2818
        %2862 = vmatprep.subr.bf16.mxu0 0
        %2863 = vmatpush1.bf16.msra.mxu0 %v2819
        %2864 = vmatprep.subr.bf16.mxu0 0
        %2865 = vmatpush1.bf16.msra.mxu0 %v2820
        %2866 = vmatprep.subr.bf16.mxu0 0
        %2867 = vmatpush1.bf16.msra.mxu0 %v2821
        %2868 = vmatprep.subr.bf16.mxu0 0
        %2869 = vmatpush1.bf16.msra.mxu0 %v2822
        %2870 = vmatprep.subr.bf16.mxu0 0
        %2871 = vmatpush1.bf16.msra.mxu0 %v2823
        %2872 = vmatprep.mubr.bf16.mxu0 %v2705
        %2873 = vmatmul.mubr.bf16.gmra.mrb[0].mxu0 %v2704
        %v2874 = vpop.f32.mrb[0].mxu0
        %v2875 = vadd.f32 0.0, %v2874
        %v2876 = vpop.f32.mrb[0].mxu0
        %v2877 = vpop.f32.mrb[0].mxu0
        %v2878 = vadd.f32 0.0, %v2877
        %v2879 = vpop.f32.mrb[0].mxu0
        %2880 = vmatprep.mubr.bf16.mxu0 %v2707
        %2881 = vmatmul.mubr.bf16.gmra.mrb[0].mxu0 %v2706
        %v2882 = vpop.f32.mrb[0].mxu0
        %v2883 = vadd.f32 0.0, %v2882
        %v2884 = vpop.f32.mrb[0].mxu0
        %v2885 = vpop.f32.mrb[0].mxu0
        %v2886 = vadd.f32 0.0, %v2885
        %v2887 = vpop.f32.mrb[0].mxu0
        %2888 = vmatprep.mubr.bf16.mxu0 %v2709
        %2889 = vmatmul.mubr.bf16.gmra.mrb[0].mxu0 %v2708
        %v2890 = vpop.f32.mrb[0].mxu0
        %v2891 = vadd.f32 0.0, %v2890
        %v2892 = vpop.f32.mrb[0].mxu0
        %v2893 = vpop.f32.mrb[0].mxu0
        %v2894 = vadd.f32 0.0, %v2893
        %v2895 = vpop.f32.mrb[0].mxu0
        %2896 = vmatprep.mubr.bf16.mxu0 %v2711
        %2897 = vmatmul.mubr.bf16.gmra.mrb[0].mxu0 %v2710
        %v2898 = vpop.f32.mrb[0].mxu0
        %v2899 = vadd.f32 0.0, %v2898
        %v2900 = vpop.f32.mrb[0].mxu0
        %v2901 = vpop.f32.mrb[0].mxu0
        %v2902 = vadd.f32 0.0, %v2901
        %v2903 = vpop.f32.mrb[0].mxu0
        %2904 = vdwg.mxu0
        %v2905 = vadd.f32 %v2155, %v2875
        %v2906 = vadd.f32 %v2156, %v2878
        %v2907 = vadd.f32 %v2157, %v2883
        %v2908 = vadd.f32 %v2158, %v2886
        %v2909 = vadd.f32 %v2159, %v2891
        %v2910 = vadd.f32 %v2160, %v2894
        %v2911 = vadd.f32 %v2161, %v2899
        %v2912 = vadd.f32 %v2162, %v2902
        %v2913 = vld [vmem:[%s471] sm:$0xff]
        %v2914 = vsel %vm1556, %v2913, 0.0
        %2915 = vadd.xlane.f32.xlu0 %v2914
        %v2916 = vpop.xlane.xlu0 %2915
        %v2917 = vcvt.f32.s32.to.zero.pseudo %v2916
        %v2918 = vsub.s32 %v2917, 1
        %vm2919 = vcmp.gt.s32.totalorder %v2918, 0
        %v2920 = vsel %vm2919, %v2918, 0
        %v2921 = vmul.u32 %v1421, 8
        %v2922 = vadd.s32 %v2921, %v2920
        %vm2923 = vcmp.eq.s32.totalorder %v475, %v2922
        %v2924 = vsel %vm2923, 1, 0
        %v2925 = vcvt.s32.f32 %v2924
        %v2927 = vsel %vm616, %v2925, 0
        %2929 = vmatprep.subr.mxu0 0.0
        %2930 = vmatpush1.msra.mxu0 %v2905
        %2931 = vmatprep.subr.mxu0 0.0
        %2932 = vmatpush1.msra.mxu0 %v2906
        %2933 = vmatprep.subr.mxu0 0.0
        %2934 = vmatpush1.msra.mxu0 %v2907
        %2935 = vmatprep.subr.mxu0 0.0
        %2936 = vmatpush1.msra.mxu0 %v2908
        %2937 = vmatprep.subr.mxu0 0.0
        %2938 = vmatpush1.msra.mxu0 %v2909
        %2939 = vmatprep.subr.mxu0 0.0
        %2940 = vmatpush1.msra.mxu0 %v2910
        %2941 = vmatprep.subr.mxu0 0.0
        %2942 = vmatpush1.msra.mxu0 %v2911
        %2943 = vmatprep.subr.mxu0 0.0
        %2944 = vmatpush1.msra.mxu0 %v2912
        %2945 = vmatprep.subr.mxu0 0.0
        %2946 = vmatpush1.msra.mxu0 0.0
        %2947 = vmatprep.subr.mxu0 0.0
        %2948 = vmatpush1.msra.mxu0 0.0
        %2949 = vmatprep.subr.mxu0 0.0
        %2950 = vmatpush1.msra.mxu0 0.0
        %2951 = vmatprep.subr.mxu0 0.0
        %2952 = vmatpush1.msra.mxu0 0.0
        %2953 = vmatprep.subr.mxu0 0.0
        %2954 = vmatpush1.msra.mxu0 0.0
        %2955 = vmatprep.subr.mxu0 0.0
        %2956 = vmatpush1.msra.mxu0 0.0
        %2957 = vmatprep.subr.mxu0 0.0
        %2958 = vmatpush1.msra.mxu0 0.0
        %2959 = vmatprep.subr.mxu0 0.0
        %2960 = vmatpush1.msra.mxu0 0.0
        %2961 = vmatprep.subr.mxu0 0.0
        %2962 = vmatpush1.msra.mxu0 0.0
        %2963 = vmatprep.subr.mxu0 0.0
        %2964 = vmatpush1.msra.mxu0 0.0
        %2965 = vmatprep.subr.mxu0 0.0
        %2966 = vmatpush1.msra.mxu0 0.0
        %2967 = vmatprep.subr.mxu0 0.0
        %2968 = vmatpush1.msra.mxu0 0.0
        %2969 = vmatprep.subr.mxu0 0.0
        %2970 = vmatpush1.msra.mxu0 0.0
        %2971 = vmatprep.subr.mxu0 0.0
        %2972 = vmatpush1.msra.mxu0 0.0
        %2973 = vmatprep.subr.mxu0 0.0
        %2974 = vmatpush1.msra.mxu0 0.0
        %2975 = vmatprep.subr.mxu0 0.0
        %2976 = vmatpush1.msra.mxu0 0.0
        %2977 = vmatprep.subr.mxu0 0.0
        %2978 = vmatpush1.msra.mxu0 0.0
        %2979 = vmatprep.subr.mxu0 0.0
        %2980 = vmatpush1.msra.mxu0 0.0
        %2981 = vmatprep.subr.mxu0 0.0
        %2982 = vmatpush1.msra.mxu0 0.0
        %2983 = vmatprep.subr.mxu0 0.0
        %2984 = vmatpush1.msra.mxu0 0.0
        %2985 = vmatprep.subr.mxu0 0.0
        %2986 = vmatpush1.msra.mxu0 0.0
        %2987 = vmatprep.subr.mxu0 0.0
        %2988 = vmatpush1.msra.mxu0 0.0
        %2989 = vmatprep.subr.mxu0 0.0
        %2990 = vmatpush1.msra.mxu0 0.0
        %2991 = vmatprep.subr.mxu0 0.0
        %2992 = vmatpush1.msra.mxu0 0.0
        %2993 = vmatprep.mubr.f32.mxu0 0.0
        %2994 = vmatmul.mubr.f32.gmra.mrb[0].mxu0 %v2927
        %v2995 = vpop.f32.mrb[0].mxu0
        %v2996 = vadd.f32 0.0, %v2995
        %v2997 = vpop.f32.mrb[0].mxu0
        %2998 = vdwg.mxu0
        %v2999 = vld [vmem:[%s9] sm:$0x1]
        %v3000 = vmul.f32 %v2996, %v2996
        %3001 = vadd.xlane.f32.xlu0 %v3000
        %v3002 = vpop.xlane.xlu0 %3001
        %v3003 = vmul.f32 %v3002, %v719
        %v3004 = vadd.f32 %v3003, 1e-06
        %v3005 = vrsqrt.pop %v3004
        %v3006 = vmul.f32 %v2996, %v3005
        %v3008 = vlaneseq
        %v3009 = vshrl.u32 %v3008, 7
        %v3010 = vsub.s32 0, %v3009
        %v3011 = vrot.slane %v2999, %v3010
        %v3013 = vmul.f32 %v3006, %v3011
        %v3014 = vpack.c.bf16 %v3013, %v3013
        %v3015 = vld [vmem:[%s10] sm:$0xf]
        %v3016 = vld [vmem:[%s10 + $0x4] sm:$0xf]
        %v3017 = vld [vmem:[%s10 + $0x8] sm:$0xf]
        %v3018 = vld [vmem:[%s10 + $0xc] sm:$0xf]
        %v3019 = vld [vmem:[%s10 + $0x10] sm:$0xf]
        %v3020 = vld [vmem:[%s10 + $0x14] sm:$0xf]
        %v3021 = vld [vmem:[%s10 + $0x18] sm:$0xf]
        %v3022 = vld [vmem:[%s10 + $0x1c] sm:$0xf]
        %v3023 = vld [vmem:[%s10 + $0x20] sm:$0xf]
        %v3024 = vld [vmem:[%s10 + $0x24] sm:$0xf]
        %v3025 = vld [vmem:[%s10 + $0x28] sm:$0xf]
        %v3026 = vld [vmem:[%s10 + $0x2c] sm:$0xf]
        %v3027 = vld [vmem:[%s10 + $0x30] sm:$0xf]
        %v3028 = vld [vmem:[%s10 + $0x34] sm:$0xf]
        %v3029 = vld [vmem:[%s10 + $0x38] sm:$0xf]
        %v3030 = vld [vmem:[%s10 + $0x3c] sm:$0xf]
        %v3047 = vunpack.c.l.b16 %v3015
        %v3048 = vunpack.c.l.b16 %v3016
        %v3049 = vunpack.c.l.b16 %v3017
        %v3050 = vunpack.c.l.b16 %v3018
        %v3051 = vunpack.c.l.b16 %v3019
        %v3052 = vunpack.c.l.b16 %v3020
        %v3053 = vunpack.c.l.b16 %v3021
        %v3054 = vunpack.c.l.b16 %v3022
        %v3055 = vunpack.c.l.b16 %v3023
        %v3056 = vunpack.c.l.b16 %v3024
        %v3057 = vunpack.c.l.b16 %v3025
        %v3058 = vunpack.c.l.b16 %v3026
        %v3059 = vunpack.c.l.b16 %v3027
        %v3060 = vunpack.c.l.b16 %v3028
        %v3061 = vunpack.c.l.b16 %v3029
        %v3062 = vunpack.c.l.b16 %v3030
        %v3063 = vpack.c.b16 %v3048, %v3047
        %v3064 = vpack.c.b16 %v3050, %v3049
        %v3065 = vpack.c.b16 %v3052, %v3051
        %v3066 = vpack.c.b16 %v3054, %v3053
        %v3067 = vpack.c.b16 %v3056, %v3055
        %v3068 = vpack.c.b16 %v3058, %v3057
        %v3069 = vpack.c.b16 %v3060, %v3059
        %v3070 = vpack.c.b16 %v3062, %v3061
        %3079 = vmatprep.subr.bf16.mxu0 0
        %3080 = vmatpush1.bf16.msra.mxu0 %v3063
        %3081 = vmatprep.subr.bf16.mxu0 0
        %3082 = vmatpush1.bf16.msra.mxu0 %v3064
        %3083 = vmatprep.subr.bf16.mxu0 0
        %3084 = vmatpush1.bf16.msra.mxu0 %v3065
        %3085 = vmatprep.subr.bf16.mxu0 0
        %3086 = vmatpush1.bf16.msra.mxu0 %v3066
        %3087 = vmatprep.subr.bf16.mxu0 0
        %3088 = vmatpush1.bf16.msra.mxu0 %v3067
        %3089 = vmatprep.subr.bf16.mxu0 0
        %3090 = vmatpush1.bf16.msra.mxu0 %v3068
        %3091 = vmatprep.subr.bf16.mxu0 0
        %3092 = vmatpush1.bf16.msra.mxu0 %v3069
        %3093 = vmatprep.subr.bf16.mxu0 0
        %3094 = vmatpush1.bf16.msra.mxu0 %v3070
        %3095 = vmatprep.subr.bf16.mxu0 0
        %3096 = vmatpush1.bf16.msra.mxu0 0
        %3097 = vmatprep.subr.bf16.mxu0 0
        %3098 = vmatpush1.bf16.msra.mxu0 0
        %3099 = vmatprep.subr.bf16.mxu0 0
        %3100 = vmatpush1.bf16.msra.mxu0 0
        %3101 = vmatprep.subr.bf16.mxu0 0
        %3102 = vmatpush1.bf16.msra.mxu0 0
        %3103 = vmatprep.subr.bf16.mxu0 0
        %3104 = vmatpush1.bf16.msra.mxu0 0
        %3105 = vmatprep.subr.bf16.mxu0 0
        %3106 = vmatpush1.bf16.msra.mxu0 0
        %3107 = vmatprep.subr.bf16.mxu0 0
        %3108 = vmatpush1.bf16.msra.mxu0 0
        %3109 = vmatprep.subr.bf16.mxu0 0
        %3110 = vmatpush1.bf16.msra.mxu0 0
        %3111 = vmatprep.mubr.bf16.mxu0 0
        %3112 = vmatmul.mubr.bf16.gmra.mrb[0].mxu0 %v3014
        %v3113 = vpop.f32.mrb[0].mxu0
        %v3114 = vadd.f32 0.0, %v3113
        %v3115 = vpop.f32.mrb[0].mxu0
        %v3116 = vpop.f32.mrb[0].mxu0
        %v3117 = vpop.f32.mrb[0].mxu0
        %3118 = vdwg.mxu0
        %3119 = vst [vmem:[%s463] sm:$0xff] %v3114
        %s3120 = sand.u32 %s277, 1
        %s3121 = scalar_lea.sflag [#allocation4], %s3120
        %s3122 = sand.u32 %s277, 1
        %s3123 = smul.addr %s3122, 8
        %s3124 = scalar_lea.vmem [#allocation11], %s3123
        // Predicated region
        $region85: #{_starling_call.1} parent=63 // pred_check
          %p3125 = pneg %p287
        $region86: #{_starling_call.1} parent=63 // pred_check_branch
          %3127 = sbr.rel (%p3125) target = $region88
        $region87: #{_starling_call.1} parent=63 // pred_region
          %s3129 = ssub.s32 128, 128
          %3130 = vsyncadd %s3121, %s3129
          %s3131 = smul.addr %s28, 128
          %s3132 = scalar_lea.hbm %s11, %s3131
          %s3134 = sshll.u32 %s3124, 4
          %s3135 = int_to_ptr.vmem [resolvable:$true] %s3134
          %3137 = dma.vmem_to_hbm [thread:$0]  %s3135, 128, %s3132, %s3121
        $region88: #{_starling_call.1} parent=63 // pred_fallthru
          _
      $region64: #{_starling_call.1} parent=5 // pred_fallthru
        _
      %p3138 = scmp.le.s32.totalorder 2, %s23
      // Predicated region
      $region89: #{_starling_call.1} parent=5 // pred_check
        %p3139 = pneg %p3138
      $region90: #{_starling_call.1} parent=5 // pred_check_branch
        %3141 = sbr.rel (%p3139) target = $region92
      $region91: #{_starling_call.1} parent=5 // pred_region
        %s3142 = ssub.s32 %s23, 2
        // Predicated region
        $region93: #{_starling_call.1} parent=91 // pred_check
          %p3143 = pneg %p293
        $region94: #{_starling_call.1} parent=91 // pred_check_branch
          %3145 = sbr.rel (%p3143) target = $region96
        $region95: #{_starling_call.1} parent=91 // pred_region
          %s3146 = sand.u32 %s278, 1
          %s3147 = scalar_lea.sflag [#allocation4], %s3146
          %s3148 = sand.u32 %s278, 1
          %s3149 = smul.addr %s3148, 8
          %s3150 = scalar_lea.vmem [#allocation11], %s3149
          %3151 = dma.done %s3147, 128
        $region96: #{_starling_call.1} parent=91 // pred_fallthru
          _
      $region92: #{_starling_call.1} parent=5 // pred_fallthru
        _
    $region6: #{_starling_call.1} parent=1 // loop_footer
      %s27 = sadd.s32 1, %s23
    $region7: #{_starling_call.1} parent=1 // loop_footer_branch
      %22 = sbr.rel target = $region3
    $region8: #{_starling_call.1} parent=1 // loop_exit
      _
    %3152 = vsyncpa [#allocation3], 1
    %s3153 = scalar_lea.sflag [#allocation3], 1
    %3154 = vsyncpa %s3153, 1
    %3155 = vsyncpa [#allocation6], 1
    %3156 = vsyncpa [#allocation9], 1
    %3157 = vsyncpa [#allocation4], 1
    %s3158 = scalar_lea.sflag [#allocation4], 1
    %3159 = vsyncpa %s3158, 1

</llo_original>
